<compile_context>
chip_gen: v6e
topology: v6e:2x2x1
jax: 0.10.0
libtpu: 0.0.40
codegen_flags: <defaults>
</compile_context>

<pallas_src>
import math
import jax
import jax.numpy as jnp
from jax.experimental import pallas as pl
from jax.experimental.pallas import tpu as pltpu

LN_EPS = 1e-5  # nn.LayerNorm default


def _layernorm(y, gamma, beta):
    # y: (rows, D) f32; gamma/beta: (1, D) f32
    mu = jnp.mean(y, axis=-1, keepdims=True)
    var = jnp.mean((y - mu) ** 2, axis=-1, keepdims=True)
    return (y - mu) * jax.lax.rsqrt(var + LN_EPS) * gamma + beta


def make_kv_proj_kernel(num_heads, d_k):
    """K/V projection, emitted head-major: block (1, H, TS, d_k)."""

    def kernel(x_ref, wk_ref, wv_ref, k_ref, v_ref):
        ts = x_ref.shape[1]
        xc = x_ref[0].astype(wk_ref.dtype)                                  # (TS, D)
        k = jnp.dot(xc, wk_ref[...], preferred_element_type=jnp.float32)    # (TS, D) f32
        v = jnp.dot(xc, wv_ref[...], preferred_element_type=jnp.float32)
        k_ref[0] = k.reshape(ts, num_heads, d_k).transpose(1, 0, 2).astype(k_ref.dtype)
        v_ref[0] = v.reshape(ts, num_heads, d_k).transpose(1, 0, 2).astype(v_ref.dtype)

    return kernel


def make_encoder_kernel(num_heads, d_k, compute_dtype):
    def kernel(x_ref, k_ref, v_ref, wq_ref, wo_ref,
               w1_ref, b1_ref, w2_ref, b2_ref,
               g1_ref, be1_ref, g2_ref, be2_ref, o_ref):
        tq = x_ref.shape[1]
        d_model = x_ref.shape[2]

        x = x_ref[0]                                  # (TQ, D) f32, residual path
        xc = x.astype(compute_dtype)

        # ---- Multi-head self-attention (batched over heads, no slice/concat) ----
        # 1/sqrt(d_k) is already folded into Wq by the wrapper.
        q = jnp.dot(xc, wq_ref[...], preferred_element_type=jnp.float32)    # (TQ, D)
        qh = q.reshape(tq, num_heads, d_k).transpose(1, 0, 2).astype(compute_dtype)  # (H,TQ,dk)
        kh = k_ref[0]                                 # (H, S, dk), precomputed head-major
        vh = v_ref[0]

        s = jnp.einsum("hqd,hkd->hqk", qh, kh,
                       preferred_element_type=jnp.float32)                  # (H, TQ, S) f32
        s = s - jnp.max(s, axis=-1, keepdims=True)
        p = jnp.exp(s)
        p = p * pl.reciprocal(jnp.sum(p, axis=-1, keepdims=True), approx=True)
        oh = jnp.einsum("hqk,hkd->hqd", p.astype(compute_dtype), vh,
                        preferred_element_type=jnp.float32)                 # (H, TQ, dk)
        attn = oh.transpose(1, 0, 2).reshape(tq, d_model)                   # (TQ, D) f32
        attn_out = jnp.dot(attn.astype(compute_dtype), wo_ref[...],
                           preferred_element_type=jnp.float32)

        # dropout1 = identity (eval mode)
        out1 = _layernorm(x + attn_out, g1_ref[...], be1_ref[...])          # (TQ, D) f32

        # ---- Feed-forward network -------------------------------------------
        h1 = jnp.dot(out1.astype(compute_dtype), w1_ref[...],
                     preferred_element_type=jnp.float32) + b1_ref[...]
        h1 = jnp.maximum(h1, 0.0)                                           # ReLU
        ffn = jnp.dot(h1.astype(compute_dtype), w2_ref[...],
                      preferred_element_type=jnp.float32) + b2_ref[...]

        # dropout2 = identity (eval mode)
        out2 = _layernorm(out1 + ffn, g2_ref[...], be2_ref[...])
        o_ref[0] = out2.astype(o_ref.dtype)

    return kernel


def _vmem_limit(estimate_bytes):
    # Explicit scoped-VMEM budget: at least the usual 32 MiB default (v5e defaults
    # to only 16 MiB), capped at 48 MiB to leave headroom on v7x's 64 MiB VMEM.
    return int(min(max(estimate_bytes, 32 << 20), 48 << 20))


def encoder_layer_forward(x, params, num_heads, *, tq=None, compute_dtype=jnp.float32):
    """x: (B, S, D) f32.  params: dict of pre-transposed f32 weights."""
    B, S, D = x.shape
    dff = params["w1"].shape[1]
    assert D % num_heads == 0
    d_k = D // num_heads
    # Query tile (sequence tiling). D and dff should be multiples of 128 for
    # lane-dense stores / full MXU columns (test shapes below respect this).
    if tq is None:
        tq = 128 if S % 128 == 0 else S
    assert S % tq == 0, "sequence length must be divisible by the query tile"

    cdt = jnp.dtype(compute_dtype)
    csz = cdt.itemsize
    scale = 1.0 / math.sqrt(d_k)

    # Matmul operands in compute dtype (bf16 halves VMEM/DMA bytes on v6e/v7x);
    # biases and LayerNorm params stay f32 (applied to f32 accumulators).
    wq = (params["wq"] * scale).astype(cdt)      # fold 1/sqrt(d_k) into Wq
    wk = params["wk"].astype(cdt)
    wv = params["wv"].astype(cdt)
    wo = params["wo"].astype(cdt)
    w1 = params["w1"].astype(cdt)
    w2 = params["w2"].astype(cdt)

    # ---- 1) K/V projection into head-major (B, H, S, d_k) --------------------
    ts = tq
    kv_est = 2 * (ts * D * 4 + 2 * D * D * csz + 2 * ts * D * csz) + 8 * ts * D * 4
    k, v = pl.pallas_call(
        make_kv_proj_kernel(num_heads, d_k),
        out_shape=(jax.ShapeDtypeStruct((B, num_heads, S, d_k), cdt),
                   jax.ShapeDtypeStruct((B, num_heads, S, d_k), cdt)),
        grid_spec=pltpu.PrefetchScalarGridSpec(
            num_scalar_prefetch=0,
            grid=(B, S // ts),
            in_specs=[
                pl.BlockSpec((1, ts, D), lambda b, i: (b, i, 0)),
                pl.BlockSpec((D, D), lambda b, i: (0, 0)),
                pl.BlockSpec((D, D), lambda b, i: (0, 0)),
            ],
            out_specs=[
                pl.BlockSpec((1, num_heads, ts, d_k), lambda b, i: (b, 0, i, 0)),
                pl.BlockSpec((1, num_heads, ts, d_k), lambda b, i: (b, 0, i, 0)),
            ],
        ),
        compiler_params=pltpu.CompilerParams(
            dimension_semantics=("parallel", "parallel"),
            vmem_limit_bytes=_vmem_limit(kv_est)),
    )(x, wk, wv)

    # ---- 2) Attention + FFN + LayerNorms, one query tile per grid step -------
    full = lambda shape: pl.BlockSpec(shape, lambda b, i: (0,) * len(shape))
    main_est = (2 * (2 * tq * D * 4 + 2 * S * D * csz
                     + (2 * D * D + 2 * D * dff) * csz + (dff + 5 * D) * 4)
                + 4 * (num_heads * tq * S + tq * dff + 8 * tq * D))
    return pl.pallas_call(
        make_encoder_kernel(num_heads, d_k, cdt),
        out_shape=jax.ShapeDtypeStruct((B, S, D), x.dtype),
        grid_spec=pltpu.PrefetchScalarGridSpec(
            num_scalar_prefetch=0,
            grid=(B, S // tq),
            in_specs=[
                pl.BlockSpec((1, tq, D), lambda b, i: (b, i, 0)),                 # x tile
                pl.BlockSpec((1, num_heads, S, d_k), lambda b, i: (b, 0, 0, 0)),  # K (full S)
                pl.BlockSpec((1, num_heads, S, d_k), lambda b, i: (b, 0, 0, 0)),  # V (full S)
                full((D, D)),        # Wq (pre-scaled by 1/sqrt(d_k))
                full((D, D)),        # Wo
                full((D, dff)),      # W1
                full((1, dff)),      # b1
                full((dff, D)),      # W2
                full((1, D)),        # b2
                full((1, D)),        # gamma1
                full((1, D)),        # beta1
                full((1, D)),        # gamma2
                full((1, D)),        # beta2
            ],
            out_specs=pl.BlockSpec((1, tq, D), lambda b, i: (b, i, 0)),
        ),
        compiler_params=pltpu.CompilerParams(
            dimension_semantics=("parallel", "parallel"),
            vmem_limit_bytes=_vmem_limit(main_est)),
    )(x, k, v, wq, wo, w1, params["b1"], w2, params["b2"],
      params["g1"], params["be1"], params["g2"], params["be2"])


def init_params(key, d_model, dff):
    ks = jax.random.split(key, 8)
    s = 0.05
    return {
        # linear weights stored as (in, out) == PyTorch weight.T
        "wq": jax.random.normal(ks[0], (d_model, d_model), jnp.float32) * s,
        "wk": jax.random.normal(ks[1], (d_model, d_model), jnp.float32) * s,
        "wv": jax.random.normal(ks[2], (d_model, d_model), jnp.float32) * s,
        "wo": jax.random.normal(ks[3], (d_model, d_model), jnp.float32) * s,
        "w1": jax.random.normal(ks[4], (d_model, dff), jnp.float32) * s,
        "b1": jax.random.normal(ks[5], (1, dff), jnp.float32) * s,
        "w2": jax.random.normal(ks[6], (dff, d_model), jnp.float32) * s,
        "b2": jax.random.normal(ks[7], (1, d_model), jnp.float32) * s,
        # LayerNorm affine params (PyTorch init: weight=1, bias=0)
        "g1": jnp.ones((1, d_model), jnp.float32),
        "be1": jnp.zeros((1, d_model), jnp.float32),
        "g2": jnp.ones((1, d_model), jnp.float32),
        "be2": jnp.zeros((1, d_model), jnp.float32),
    }


def _reference(x, p, num_heads):
    """Pure-JAX reference of EncoderLayer.forward (eval mode, mask=None)."""
    B, S, D = x.shape
    d_k = D // num_heads

    def split_heads(t):  # (B,S,D) -> (B,H,S,dk)
        return t.reshape(B, S, num_heads, d_k).transpose(0, 2, 1, 3)

    q = split_heads(x @ p["wq"])
    k = split_heads(x @ p["wk"])
    v = split_heads(x @ p["wv"])
    scores = jnp.einsum("bhqd,bhkd->bhqk", q, k) / math.sqrt(d_k)
    attn = jax.nn.softmax(scores, axis=-1)
    out = jnp.einsum("bhqk,bhkd->bhqd", attn, v)
    out = out.transpose(0, 2, 1, 3).reshape(B, S, D) @ p["wo"]

    def ln(y, g, b):
        mu = jnp.mean(y, -1, keepdims=True)
        var = jnp.mean((y - mu) ** 2, -1, keepdims=True)
        return (y - mu) / jnp.sqrt(var + LN_EPS) * g + b

    out1 = ln(x + out, p["g1"], p["be1"])
    ffn = jnp.maximum(out1 @ p["w1"] + p["b1"], 0.0) @ p["w2"] + p["b2"]
    return ln(out1 + ffn, p["g2"], p["be2"])


if __name__ == "__main__":
    # Lane-dense shapes (D, dff multiples of 128) per the perf review; still small.
    B, S, D, H, DFF = 2, 128, 128, 4, 256
    key = jax.random.PRNGKey(0)
    kx, kp = jax.random.split(key)
    x = jax.random.normal(kx, (B, S, D), jnp.float32)
    params = init_params(kp, D, DFF)

    ref = _reference(x, params, H)

    # f32-matmul path (tight check; approx softmax reciprocal -> small slack).
    out_f32 = jax.block_until_ready(encoder_layer_forward(x, params, H))
    assert out_f32.shape == (B, S, D)
    assert jnp.allclose(out_f32, ref, atol=5e-3, rtol=5e-3), "f32 mismatch vs reference"

    # bf16-matmul path (f32 accumulation; softmax/LayerNorm stay f32).
    out_bf16 = jax.block_until_ready(
        encoder_layer_forward(x, params, H, compute_dtype=jnp.bfloat16))
    assert jnp.allclose(out_bf16, ref, atol=5e-2, rtol=5e-2), "bf16 mismatch vs reference"

    print("KERNEL_OK")
</pallas_src>

<mosaic_0001>
module attributes {stable_mosaic.version = 11 : i64} {
  func.func @kernel(%arg0: i32, %arg1: i32, %arg2: memref<1x128x128xf32, #tpu.memory_space<vmem>>, %arg3: memref<128x128xf32, #tpu.memory_space<vmem>>, %arg4: memref<128x128xf32, #tpu.memory_space<vmem>>, %arg5: memref<1x4x128x32xf32, #tpu.memory_space<vmem>>, %arg6: memref<1x4x128x32xf32, #tpu.memory_space<vmem>>) attributes {dimension_semantics = [#tpu.dimension_semantics<parallel>, #tpu.dimension_semantics<parallel>], iteration_bounds = array<i64: 2, 1>, scalar_prefetch = 0 : i64, scratch_operands = 0 : i64, tpu.core_type = #tpu.core_type<tc>, window_params = [{transform_indices = @transform_0, window_bounds = array<i64: 1, 128, 128>}, {pipeline_mode = #tpu.pipeline_mode<synchronous>, transform_indices = @transform_1, window_bounds = array<i64: 128, 128>}, {pipeline_mode = #tpu.pipeline_mode<synchronous>, transform_indices = @transform_2, window_bounds = array<i64: 128, 128>}, {transform_indices = @transform_3, window_bounds = array<i64: 1, 4, 128, 32>}, {transform_indices = @transform_4, window_bounds = array<i64: 1, 4, 128, 32>}]} {
    %c0 = arith.constant 0 : index
    %c0_0 = arith.constant 0 : index
    %c0_1 = arith.constant 0 : index
    %0 = vector.load %arg2[%c0, %c0_0, %c0_1] : memref<1x128x128xf32, #tpu.memory_space<vmem>>, vector<1x128x128xf32>
    %1 = vector.shape_cast %0 : vector<1x128x128xf32> to vector<128x128xf32>
    %c0_2 = arith.constant 0 : index
    %c0_3 = arith.constant 0 : index
    %2 = vector.load %arg3[%c0_2, %c0_3] : memref<128x128xf32, #tpu.memory_space<vmem>>, vector<128x128xf32>
    %cst = arith.constant dense<0.000000e+00> : vector<128x128xf32>
    %3 = tpu.matmul %1, %2, %cst {dimension_numbers = #tpu.dot_dimension_numbers<[1], [0], [0], [1], [0, 0, 1, 1], [], []>} : vector<128x128xf32>, vector<128x128xf32>, vector<128x128xf32> -> vector<128x128xf32>
    %c0_4 = arith.constant 0 : index
    %c0_5 = arith.constant 0 : index
    %4 = vector.load %arg4[%c0_4, %c0_5] : memref<128x128xf32, #tpu.memory_space<vmem>>, vector<128x128xf32>
    %cst_6 = arith.constant dense<0.000000e+00> : vector<128x128xf32>
    %5 = tpu.matmul %1, %4, %cst_6 {dimension_numbers = #tpu.dot_dimension_numbers<[1], [0], [0], [1], [0, 0, 1, 1], [], []>} : vector<128x128xf32>, vector<128x128xf32>, vector<128x128xf32> -> vector<128x128xf32>
    %6 = vector.shape_cast %3 : vector<128x128xf32> to vector<128x4x32xf32>
    %7 = tpu.transpose %6, [1, 0, 2] : vector<128x4x32xf32> -> vector<4x128x32xf32>
    %c0_7 = arith.constant 0 : index
    %c0_8 = arith.constant 0 : index
    %c0_9 = arith.constant 0 : index
    %c0_10 = arith.constant 0 : index
    %8 = vector.load %arg5[%c0_7, %c0_8, %c0_9, %c0_10] : memref<1x4x128x32xf32, #tpu.memory_space<vmem>>, vector<1x4x128x32xf32>
    %9 = vector.shape_cast %8 : vector<1x4x128x32xf32> to vector<4x128x32xf32>
    %10 = vector.shape_cast %7 : vector<4x128x32xf32> to vector<1x4x128x32xf32>
    tpu.vector_store %arg5[%c0_7, %c0_8, %c0_9, %c0_10], %10 {strides = array<i32>} : memref<1x4x128x32xf32, #tpu.memory_space<vmem>>, vector<1x4x128x32xf32>,
    %11 = vector.shape_cast %5 : vector<128x128xf32> to vector<128x4x32xf32>
    %12 = tpu.transpose %11, [1, 0, 2] : vector<128x4x32xf32> -> vector<4x128x32xf32>
    %c0_11 = arith.constant 0 : index
    %c0_12 = arith.constant 0 : index
    %c0_13 = arith.constant 0 : index
    %c0_14 = arith.constant 0 : index
    %13 = vector.load %arg6[%c0_11, %c0_12, %c0_13, %c0_14] : memref<1x4x128x32xf32, #tpu.memory_space<vmem>>, vector<1x4x128x32xf32>
    %14 = vector.shape_cast %13 : vector<1x4x128x32xf32> to vector<4x128x32xf32>
    %15 = vector.shape_cast %12 : vector<4x128x32xf32> to vector<1x4x128x32xf32>
    tpu.vector_store %arg6[%c0_11, %c0_12, %c0_13, %c0_14], %15 {strides = array<i32>} : memref<1x4x128x32xf32, #tpu.memory_space<vmem>>, vector<1x4x128x32xf32>,
    return
  }
  func.func @transform_0(%arg0: i32, %arg1: i32) -> (i32, i32, i32) {
    %c0_i32 = arith.constant 0 : i32
    %c0_i32_0 = arith.constant 0 : i32
    return %arg0, %arg1, %c0_i32 : i32, i32, i32
  }
  func.func @transform_1(%arg0: i32, %arg1: i32) -> (i32, i32) {
    %c0_i32 = arith.constant 0 : i32
    %c0_i32_0 = arith.constant 0 : i32
    %c0_i32_1 = arith.constant 0 : i32
    return %c0_i32, %c0_i32_0 : i32, i32
  }
  func.func @transform_2(%arg0: i32, %arg1: i32) -> (i32, i32) {
    %c0_i32 = arith.constant 0 : i32
    %c0_i32_0 = arith.constant 0 : i32
    %c0_i32_1 = arith.constant 0 : i32
    return %c0_i32, %c0_i32_0 : i32, i32
  }
  func.func @transform_3(%arg0: i32, %arg1: i32) -> (i32, i32, i32, i32) {
    %c0_i32 = arith.constant 0 : i32
    %c0_i32_0 = arith.constant 0 : i32
    %c0_i32_1 = arith.constant 0 : i32
    return %arg0, %c0_i32, %arg1, %c0_i32_0 : i32, i32, i32, i32
  }
  func.func @transform_4(%arg0: i32, %arg1: i32) -> (i32, i32, i32, i32) {
    %c0_i32 = arith.constant 0 : i32
    %c0_i32_0 = arith.constant 0 : i32
    %c0_i32_1 = arith.constant 0 : i32
    return %arg0, %c0_i32, %arg1, %c0_i32_0 : i32, i32, i32, i32
  }
}

</mosaic_0001>

<llo_original>
// kernel: tpu_custom_call.1
$region0: #{tpu_custom_call.1}
  #allocation0 [shape = 'u32[]', space=smem, size = 0x4, offset = 0x4, fixed_abs, tag = 'smem constant byte address 0x4 - core index']
  #allocation1 [shape = 'u32[144,128]{1,0:T(1,128)}', space=vmem, size = 0x12000, scoped, tag = 'internal scratch']
  %s0 = inlined_call_operand.hbm [shape: f32[2,128,128], index: 0, kind: input, shape index: {}]
  %s1 = inlined_call_operand.hbm [shape: f32[128,128], index: 1, kind: input, shape index: {}]
  %s2 = inlined_call_operand.hbm [shape: f32[128,128], index: 2, kind: input, shape index: {}]
  %s3 = inlined_call_operand.vmem [shape: f32[2,4,128,32], index: 3, kind: output, shape index: {0}]
  %s4 = inlined_call_operand.vmem [shape: f32[2,4,128,32], index: 4, kind: output, shape index: {1}]
  %5 = xla_tuple %s3, %s4
  %s6 = sld [smem:[#allocation0]]
  $region65: #{tpu_custom_call.1} parent=0
    _
  %s8 = ssub.s32 1, %s6
  %s9 = scalar_select 0, %s8, %s6
  $region1: #{tpu_custom_call.1} parent=0
    #allocation2 [shape = 'u8[131072]{0}', space=vmem, size = 0x20000, scoped, tag = 'input window, operand 0']
    #allocation3 [shape = 's32[2]{0}', space=sflag, size = 0x8, scoped, tag = 'scoped memory for tpu_custom_call.1']
    #allocation4 [shape = 'u8[65536]{0}', space=vmem, size = 0x10000, scoped, tag = 'input window, operand 1, single buffered']
    #allocation5 [shape = 's32[1]{0}', space=sflag, size = 0x4, scoped, tag = 'scoped memory for tpu_custom_call.1']
    #allocation6 [shape = 'u8[65536]{0}', space=vmem, size = 0x10000, scoped, tag = 'input window, operand 2, single buffered']
    %10 = vsyncpa [#allocation3], 0
    %s11 = scalar_lea.sflag [#allocation3], 1
    %12 = vsyncpa %s11, 0
    %13 = vsyncpa [#allocation5], 0
    loop: start=0, step=1, limit=4
    $region2: #{tpu_custom_call.1} parent=1 // loop_pre_header
      _
    $region3: #{tpu_custom_call.1} parent=1 // loop_header
      %s15 = sphi 0, %s19
      %p16 = scmp.ge.s32.totalorder %s15, 4
      %s22 = sphi 0, %s34
      %s23 = sphi 0, %s30
      %s24 = sphi 0, %s22
      %s25 = sphi 0, %s23
      %s26 = sphi 0, %s24
      %s27 = sphi 0, %s25
      %s39 = sphi 0, %s41
      %s42 = sphi 0, %s39
      %s43 = sphi 0, %s42
      %s59 = sphi 0, %s43
      %s63 = sphi 0, %s63
      %s65 = sphi 0, %s63
      %s66 = sphi 0, %s65
      %s80 = sphi 0, %s66
      %s84 = sphi 0, %s84
      %s86 = sphi 0, %s84
      %s87 = sphi 0, %s86
      %s101 = sphi 0, %s87
      %s109 = sphi 0, %s111
      %s112 = sphi 0, %s109
      %s113 = sphi 0, %s112
      %s129 = sphi 0, %s113
      %s137 = sphi 0, %s139
      %s140 = sphi 0, %s137
      %s141 = sphi 0, %s140
      %s157 = sphi 0, %s141
    $region4: #{tpu_custom_call.1} parent=1 // loop_header_branch
      %18 = sbr.rel (%p16) target = $region8
    $region5: #{tpu_custom_call.1} parent=1 // loop_body
      %s20 = ssub.s32 %s15, 1
      %s21 = ssub.s32 %s15, 2
      %s28 = sadd.s32 1, %s23
      %p29 = scmp.ge.s32.totalorder %s28, 1
      %s30 = scalar_select %p29, 0, %s28
      %s31 = sadd.s32 1, %s22
      %s32 = scalar_select %p29, %s31, %s22
      %p33 = scmp.ge.s32.totalorder %s32, 2
      %s34 = scalar_select %p33, 0, %s32
      %s35 = ssub.s32 %s22, %s34
      %s36 = ssub.s32 %s23, %s30
      %s37 = sor.u32 %s35, %s36
      %p38 = scmp.eq.s32.totalorder %s37, 0
      %s40 = sadd.s32 %s39, 1
      %s41 = scalar_select %p38, %s39, %s40
      %p44 = pneg %p38
      %p45 = scmp.eq.s32.totalorder %s15, 1
      %p46 = por %p44, %p45
      %p47 = scmp.ne.s32.totalorder %s39, %s42
      %p48 = scmp.eq.s32.totalorder %s15, 0
      %p49 = por %p47, %p48
      %p50 = scmp.ne.s32.totalorder %s39, %s42
      %p51 = scmp.eq.s32.totalorder %s20, 1
      %p52 = por %p50, %p51
      %p53 = scmp.ne.s32.totalorder %s42, %s43
      %p54 = scmp.eq.s32.totalorder %s20, 0
      %p55 = por %p53, %p54
      %p56 = scmp.ne.s32.totalorder %s42, %s43
      %p57 = scmp.eq.s32.totalorder %s21, 1
      %p58 = por %p56, %p57
      %p60 = scmp.ne.s32.totalorder %s43, %s59
      %p61 = scmp.eq.s32.totalorder %s21, 0
      %p62 = por %p60, %p61
      %s64 = sadd.s32 %s63, 1
      %p67 = scmp.eq.s32.totalorder %s15, 1
      %p68 = scmp.ne.s32.totalorder %s63, %s65
      %p69 = scmp.eq.s32.totalorder %s15, 0
      %p70 = por %p68, %p69
      %p71 = scmp.ne.s32.totalorder %s63, %s65
      %p72 = scmp.eq.s32.totalorder %s20, 1
      %p73 = por %p71, %p72
      %p74 = scmp.ne.s32.totalorder %s65, %s66
      %p75 = scmp.eq.s32.totalorder %s20, 0
      %p76 = por %p74, %p75
      %p77 = scmp.ne.s32.totalorder %s65, %s66
      %p78 = scmp.eq.s32.totalorder %s21, 1
      %p79 = por %p77, %p78
      %p81 = scmp.ne.s32.totalorder %s66, %s80
      %p82 = scmp.eq.s32.totalorder %s21, 0
      %p83 = por %p81, %p82
      %s85 = sadd.s32 %s84, 1
      %p88 = scmp.eq.s32.totalorder %s15, 1
      %p89 = scmp.ne.s32.totalorder %s84, %s86
      %p90 = scmp.eq.s32.totalorder %s15, 0
      %p91 = por %p89, %p90
      %p92 = scmp.ne.s32.totalorder %s84, %s86
      %p93 = scmp.eq.s32.totalorder %s20, 1
      %p94 = por %p92, %p93
      %p95 = scmp.ne.s32.totalorder %s86, %s87
      %p96 = scmp.eq.s32.totalorder %s20, 0
      %p97 = por %p95, %p96
      %p98 = scmp.ne.s32.totalorder %s86, %s87
      %p99 = scmp.eq.s32.totalorder %s21, 1
      %p100 = por %p98, %p99
      %p102 = scmp.ne.s32.totalorder %s87, %s101
      %p103 = scmp.eq.s32.totalorder %s21, 0
      %p104 = por %p102, %p103
      %s105 = ssub.s32 %s22, %s34
      %s106 = ssub.s32 %s23, %s30
      %s107 = sor.u32 %s105, %s106
      %p108 = scmp.eq.s32.totalorder %s107, 0
      %s110 = sadd.s32 %s109, 1
      %s111 = scalar_select %p108, %s109, %s110
      %p114 = pneg %p108
      %p115 = scmp.eq.s32.totalorder %s15, 1
      %p116 = por %p114, %p115
      %p117 = scmp.ne.s32.totalorder %s109, %s112
      %p118 = scmp.eq.s32.totalorder %s15, 0
      %p119 = por %p117, %p118
      %p120 = scmp.ne.s32.totalorder %s109, %s112
      %p121 = scmp.eq.s32.totalorder %s20, 1
      %p122 = por %p120, %p121
      %p123 = scmp.ne.s32.totalorder %s112, %s113
      %p124 = scmp.eq.s32.totalorder %s20, 0
      %p125 = por %p123, %p124
      %p126 = scmp.ne.s32.totalorder %s112, %s113
      %p127 = scmp.eq.s32.totalorder %s21, 1
      %p128 = por %p126, %p127
      %p130 = scmp.ne.s32.totalorder %s113, %s129
      %p131 = scmp.eq.s32.totalorder %s21, 0
      %p132 = por %p130, %p131
      %s133 = ssub.s32 %s22, %s34
      %s134 = ssub.s32 %s23, %s30
      %s135 = sor.u32 %s133, %s134
      %p136 = scmp.eq.s32.totalorder %s135, 0
      %s138 = sadd.s32 %s137, 1
      %s139 = scalar_select %p136, %s137, %s138
      %p142 = pneg %p136
      %p143 = scmp.eq.s32.totalorder %s15, 1
      %p144 = por %p142, %p143
      %p145 = scmp.ne.s32.totalorder %s137, %s140
      %p146 = scmp.eq.s32.totalorder %s15, 0
      %p147 = por %p145, %p146
      %p148 = scmp.ne.s32.totalorder %s137, %s140
      %p149 = scmp.eq.s32.totalorder %s20, 1
      %p150 = por %p148, %p149
      %p151 = scmp.ne.s32.totalorder %s140, %s141
      %p152 = scmp.eq.s32.totalorder %s20, 0
      %p153 = por %p151, %p152
      %p154 = scmp.ne.s32.totalorder %s140, %s141
      %p155 = scmp.eq.s32.totalorder %s21, 1
      %p156 = por %p154, %p155
      %p158 = scmp.ne.s32.totalorder %s141, %s157
      %p159 = scmp.eq.s32.totalorder %s21, 0
      %p160 = por %p158, %p159
      %p161 = scmp.le.s32.totalorder 1, %s15
      %p162 = scmp.lt.s32.totalorder %s15, 3
      %p163 = pnand %p161, %p162
      %p164 = pneg %p163
      // Predicated region
      $region9: #{tpu_custom_call.1} parent=5 // pred_check
        _
      $region10: #{tpu_custom_call.1} parent=5 // pred_check_branch
        %166 = sbr.rel (%p163) target = $region12
      $region11: #{tpu_custom_call.1} parent=5 // pred_region
        %s167 = ssub.s32 %s15, 1
        // Predicated region
        $region13: #{tpu_custom_call.1} parent=11 // pred_check
          %p168 = pneg %p76
        $region14: #{tpu_custom_call.1} parent=11 // pred_check_branch
          %170 = sbr.rel (%p168) target = $region16
        $region15: #{tpu_custom_call.1} parent=11 // pred_region
          %s172 = ssub.s32 2048, 2048
          %173 = vsyncadd [#allocation5], %s172
          %s174 = sshll.u32 [#allocation4], 4
          %s175 = int_to_ptr.vmem [resolvable:$true] %s174
          %180 = dma.hbm_to_vmem [thread:$0]  %s1, 2048, %s175, [#allocation5], 128, 128, 8
        $region16: #{tpu_custom_call.1} parent=11 // pred_fallthru
          _
        // Predicated region
        $region17: #{tpu_custom_call.1} parent=11 // pred_check
          %p181 = pneg %p97
        $region18: #{tpu_custom_call.1} parent=11 // pred_check_branch
          %183 = sbr.rel (%p181) target = $region20
        $region19: #{tpu_custom_call.1} parent=11 // pred_region
          %s185 = ssub.s32 2048, 2048
          %186 = vsyncadd [#allocation5], %s185
          %s187 = sshll.u32 [#allocation6], 4
          %s188 = int_to_ptr.vmem [resolvable:$true] %s187
          %193 = dma.hbm_to_vmem [thread:$0]  %s2, 2048, %s188, [#allocation5], 128, 128, 8
        $region20: #{tpu_custom_call.1} parent=11 // pred_fallthru
          _
      $region12: #{tpu_custom_call.1} parent=5 // pred_fallthru
        _
      %p194 = scmp.lt.s32.totalorder %s15, 2
      // Predicated region
      $region21: #{tpu_custom_call.1} parent=5 // pred_check
        %p195 = pneg %p194
      $region22: #{tpu_custom_call.1} parent=5 // pred_check_branch
        %197 = sbr.rel (%p195) target = $region24
      $region23: #{tpu_custom_call.1} parent=5 // pred_region
        // Predicated region
        $region25: #{tpu_custom_call.1} parent=23 // pred_check
          %p198 = pneg %p49
        $region26: #{tpu_custom_call.1} parent=23 // pred_check_branch
          %200 = sbr.rel (%p198) target = $region28
        $region27: #{tpu_custom_call.1} parent=23 // pred_region
          %s201 = sand.u32 %s39, 1
          %s202 = scalar_lea.sflag [#allocation3], %s201
          %s203 = sand.u32 %s39, 1
          %s204 = smul.addr %s203, 128
          %s205 = scalar_lea.vmem [#allocation2], %s204
          %s206 = smul.u32 16, %s23
          %s208 = ssub.s32 2048, 2048
          %209 = vsyncadd %s202, %s208
          %s210 = smul.addr %s22, 16
          %s211 = sadd.s32 %s206, %s210
          %s212 = smul.addr %s211, 128
          %s213 = scalar_lea.hbm %s0, %s212
          %s214 = sshll.u32 %s205, 4
          %s215 = int_to_ptr.vmem [resolvable:$true] %s214
          %220 = dma.hbm_to_vmem [thread:$0]  %s213, 2048, %s215, %s202, 128, 128, 8
        $region28: #{tpu_custom_call.1} parent=23 // pred_fallthru
          _
      $region24: #{tpu_custom_call.1} parent=5 // pred_fallthru
        _
      %p221 = scmp.le.s32.totalorder 1, %s15
      %p222 = scmp.lt.s32.totalorder %s15, 3
      %p223 = pnand %p221, %p222
      %p224 = pneg %p223
      // Predicated region
      $region29: #{tpu_custom_call.1} parent=5 // pred_check
        _
      $region30: #{tpu_custom_call.1} parent=5 // pred_check_branch
        %226 = sbr.rel (%p223) target = $region32
      $region31: #{tpu_custom_call.1} parent=5 // pred_region
        %s227 = ssub.s32 %s15, 1
        %s228 = sand.u32 %s42, 1
        %s229 = scalar_lea.sflag [#allocation3], %s228
        %s230 = sand.u32 %s42, 1
        %s231 = smul.addr %s230, 128
        %s232 = scalar_lea.vmem [#allocation2], %s231
        // Predicated region
        $region33: #{tpu_custom_call.1} parent=31 // pred_check
          %p233 = pneg %p55
        $region34: #{tpu_custom_call.1} parent=31 // pred_check_branch
          %235 = sbr.rel (%p233) target = $region36
        $region35: #{tpu_custom_call.1} parent=31 // pred_region
          %236 = dma.done %s229, 2048
        $region36: #{tpu_custom_call.1} parent=31 // pred_fallthru
          _
        // Predicated region
        $region37: #{tpu_custom_call.1} parent=31 // pred_check
          %p237 = pneg %p76
        $region38: #{tpu_custom_call.1} parent=31 // pred_check_branch
          %239 = sbr.rel (%p237) target = $region40
        $region39: #{tpu_custom_call.1} parent=31 // pred_region
          %240 = dma.done [#allocation5], 2048
        $region40: #{tpu_custom_call.1} parent=31 // pred_fallthru
          _
        // Predicated region
        $region41: #{tpu_custom_call.1} parent=31 // pred_check
          %p241 = pneg %p97
        $region42: #{tpu_custom_call.1} parent=31 // pred_check_branch
          %243 = sbr.rel (%p241) target = $region44
        $region43: #{tpu_custom_call.1} parent=31 // pred_region
          %244 = dma.done [#allocation5], 2048
        $region44: #{tpu_custom_call.1} parent=31 // pred_fallthru
          _
        %s245 = sand.u32 %s42, 1
        %s246 = scalar_lea.sflag [#allocation3], %s245
        %s247 = sand.u32 %s42, 1
        %s248 = smul.addr %s247, 128
        %s249 = scalar_lea.vmem [#allocation2], %s248
        %p250 = pneg %p55
        %p251 = pneg %p52
        %p252 = pneg %p76
        %p253 = pneg %p73
        %p254 = pneg %p97
        %p255 = pneg %p94
        %p256 = pneg %p125
        %p257 = pneg %p122
        %s258 = smul.u32 16, %s25
        %p259 = scmp.lt.s32.totalorder %s24, 1
        %s260 = scalar_select %p259, %s24, 1
        %p261 = scmp.lt.s32.totalorder %s258, 15
        %s262 = scalar_select %p261, %s258, 15
        %s263 = smul.addr %s260, 64
        %s264 = sadd.s32 %s262, %s263
        %s265 = smul.addr %s264, 8
        %s266 = scalar_lea.vmem %s3, %s265
        %p267 = pneg %p153
        %p268 = pneg %p150
        %s269 = smul.u32 16, %s25
        %p270 = scmp.lt.s32.totalorder %s24, 1
        %s271 = scalar_select %p270, %s24, 1
        %p272 = scmp.lt.s32.totalorder %s269, 15
        %s273 = scalar_select %p272, %s269, 15
        %s274 = smul.addr %s271, 64
        %s275 = sadd.s32 %s273, %s274
        %s276 = smul.addr %s275, 8
        %s277 = scalar_lea.vmem %s4, %s276
        %s278 = smul.u32 16, %s25
        %s279 = smul.u32 16, %s25
        %p280 = scmp.lt.s32.totalorder %s24, 1
        %s281 = scalar_select %p280, %s24, 1
        %p282 = scmp.lt.s32.totalorder %s279, 15
        %s283 = scalar_select %p282, %s279, 15
        %s284 = smul.addr %s281, 64
        %s285 = sadd.s32 %s283, %s284
        %s286 = smul.addr %s285, 8
        %s287 = scalar_lea.vmem %s3, %s286
        %s288 = smul.u32 16, %s25
        %s289 = smul.u32 16, %s25
        %p290 = scmp.lt.s32.totalorder %s24, 1
        %s291 = scalar_select %p290, %s24, 1
        %p292 = scmp.lt.s32.totalorder %s289, 15
        %s293 = scalar_select %p292, %s289, 15
        %s294 = smul.addr %s291, 64
        %s295 = sadd.s32 %s293, %s294
        %s296 = smul.addr %s295, 8
        %s297 = scalar_lea.vmem %s4, %s296
        %s298 = smul.u32 16, %s25
        %v299 = vld [vmem:[%s232] sm:$0xff]
        %v300 = vld [vmem:[%s232 + $0x8] sm:$0xff]
        %v301 = vld [vmem:[%s232 + $0x10] sm:$0xff]
        %v302 = vld [vmem:[%s232 + $0x18] sm:$0xff]
        %v303 = vld [vmem:[%s232 + $0x20] sm:$0xff]
        %v304 = vld [vmem:[%s232 + $0x28] sm:$0xff]
        %v305 = vld [vmem:[%s232 + $0x30] sm:$0xff]
        %v306 = vld [vmem:[%s232 + $0x38] sm:$0xff]
        %v307 = vld [vmem:[%s232 + $0x40] sm:$0xff]
        %v308 = vld [vmem:[%s232 + $0x48] sm:$0xff]
        %v309 = vld [vmem:[%s232 + $0x50] sm:$0xff]
        %v310 = vld [vmem:[%s232 + $0x58] sm:$0xff]
        %v311 = vld [vmem:[%s232 + $0x60] sm:$0xff]
        %v312 = vld [vmem:[%s232 + $0x68] sm:$0xff]
        %v313 = vld [vmem:[%s232 + $0x70] sm:$0xff]
        %v314 = vld [vmem:[%s232 + $0x78] sm:$0xff]
        %v315 = vld [vmem:[#allocation4] sm:$0xff]
        %v316 = vld [vmem:[#allocation4 + $0x8] sm:$0xff]
        %v317 = vld [vmem:[#allocation4 + $0x10] sm:$0xff]
        %v318 = vld [vmem:[#allocation4 + $0x18] sm:$0xff]
        %v319 = vld [vmem:[#allocation4 + $0x20] sm:$0xff]
        %v320 = vld [vmem:[#allocation4 + $0x28] sm:$0xff]
        %v321 = vld [vmem:[#allocation4 + $0x30] sm:$0xff]
        %v322 = vld [vmem:[#allocation4 + $0x38] sm:$0xff]
        %v323 = vld [vmem:[#allocation4 + $0x40] sm:$0xff]
        %v324 = vld [vmem:[#allocation4 + $0x48] sm:$0xff]
        %v325 = vld [vmem:[#allocation4 + $0x50] sm:$0xff]
        %v326 = vld [vmem:[#allocation4 + $0x58] sm:$0xff]
        %v327 = vld [vmem:[#allocation4 + $0x60] sm:$0xff]
        %v328 = vld [vmem:[#allocation4 + $0x68] sm:$0xff]
        %v329 = vld [vmem:[#allocation4 + $0x70] sm:$0xff]
        %v330 = vld [vmem:[#allocation4 + $0x78] sm:$0xff]
        %331 = vmatprep.subr.mxu0 0.0
        %332 = vmatpush1.msra.mxu0 %v330
        %333 = vmatprep.subr.mxu0 0.0
        %334 = vmatpush1.msra.mxu0 %v329
        %335 = vmatprep.subr.mxu0 0.0
        %336 = vmatpush1.msra.mxu0 %v328
        %337 = vmatprep.subr.mxu0 0.0
        %338 = vmatpush1.msra.mxu0 %v327
        %339 = vmatprep.subr.mxu0 0.0
        %340 = vmatpush1.msra.mxu0 %v326
        %341 = vmatprep.subr.mxu0 0.0
        %342 = vmatpush1.msra.mxu0 %v325
        %343 = vmatprep.subr.mxu0 0.0
        %344 = vmatpush1.msra.mxu0 %v324
        %345 = vmatprep.subr.mxu0 0.0
        %346 = vmatpush1.msra.mxu0 %v323
        %347 = vmatprep.subr.mxu0 0.0
        %348 = vmatpush1.msra.mxu0 %v322
        %349 = vmatprep.subr.mxu0 0.0
        %350 = vmatpush1.msra.mxu0 %v321
        %351 = vmatprep.subr.mxu0 0.0
        %352 = vmatpush1.msra.mxu0 %v320
        %353 = vmatprep.subr.mxu0 0.0
        %354 = vmatpush1.msra.mxu0 %v319
        %355 = vmatprep.subr.mxu0 0.0
        %356 = vmatpush1.msra.mxu0 %v318
        %357 = vmatprep.subr.mxu0 0.0
        %358 = vmatpush1.msra.mxu0 %v317
        %359 = vmatprep.subr.mxu0 0.0
        %360 = vmatpush1.msra.mxu0 %v316
        %361 = vmatprep.subr.mxu0 0.0
        %362 = vmatpush1.msra.mxu0 %v315
        %363 = vmatprep.subr.mxu0 0.0
        %364 = vmatpush2.msra.mxu0 0.0
        %365 = vmatprep.subr.mxu0 0.0
        %366 = vmatpush2.msra.mxu0 0.0
        %367 = vmatprep.subr.mxu0 0.0
        %368 = vmatpush2.msra.mxu0 0.0
        %369 = vmatprep.subr.mxu0 0.0
        %370 = vmatpush2.msra.mxu0 0.0
        %371 = vmatprep.subr.mxu0 0.0
        %372 = vmatpush2.msra.mxu0 0.0
        %373 = vmatprep.subr.mxu0 0.0
        %374 = vmatpush2.msra.mxu0 0.0
        %375 = vmatprep.subr.mxu0 0.0
        %376 = vmatpush2.msra.mxu0 0.0
        %377 = vmatprep.subr.mxu0 0.0
        %378 = vmatpush2.msra.mxu0 0.0
        %379 = vmatprep.subr.mxu0 0.0
        %380 = vmatpush2.msra.mxu0 0.0
        %381 = vmatprep.subr.mxu0 0.0
        %382 = vmatpush2.msra.mxu0 0.0
        %383 = vmatprep.subr.mxu0 0.0
        %384 = vmatpush2.msra.mxu0 0.0
        %385 = vmatprep.subr.mxu0 0.0
        %386 = vmatpush2.msra.mxu0 0.0
        %387 = vmatprep.subr.mxu0 0.0
        %388 = vmatpush2.msra.mxu0 0.0
        %389 = vmatprep.subr.mxu0 0.0
        %390 = vmatpush2.msra.mxu0 0.0
        %391 = vmatprep.subr.mxu0 0.0
        %392 = vmatpush2.msra.mxu0 0.0
        %393 = vmatprep.subr.mxu0 0.0
        %394 = vmatpush2.msra.mxu0 0.0
        %395 = vmatprep.mubr.f32.mxu0 0.0
        %396 = vmatmul.mubr.f32.gmra.mxu0 %v299
        %v397 = vpop.f32.mrf.mxu0
        %v398 = vadd.f32 0.0, %v397
        %v399 = vpop.f32.mrf.mxu0
        %400 = vmatprep.mubr.f32.mxu0 0.0
        %401 = vmatmul.mubr.f32.gmra.mxu0 %v300
        %v402 = vpop.f32.mrf.mxu0
        %v403 = vadd.f32 0.0, %v402
        %v404 = vpop.f32.mrf.mxu0
        %405 = vmatprep.mubr.f32.mxu0 0.0
        %406 = vmatmul.mubr.f32.gmra.mxu0 %v301
        %v407 = vpop.f32.mrf.mxu0
        %v408 = vadd.f32 0.0, %v407
        %v409 = vpop.f32.mrf.mxu0
        %410 = vmatprep.mubr.f32.mxu0 0.0
        %411 = vmatmul.mubr.f32.gmra.mxu0 %v302
        %v412 = vpop.f32.mrf.mxu0
        %v413 = vadd.f32 0.0, %v412
        %v414 = vpop.f32.mrf.mxu0
        %415 = vmatprep.mubr.f32.mxu0 0.0
        %416 = vmatmul.mubr.f32.gmra.mxu0 %v303
        %v417 = vpop.f32.mrf.mxu0
        %v418 = vadd.f32 0.0, %v417
        %v419 = vpop.f32.mrf.mxu0
        %420 = vmatprep.mubr.f32.mxu0 0.0
        %421 = vmatmul.mubr.f32.gmra.mxu0 %v304
        %v422 = vpop.f32.mrf.mxu0
        %v423 = vadd.f32 0.0, %v422
        %v424 = vpop.f32.mrf.mxu0
        %425 = vmatprep.mubr.f32.mxu0 0.0
        %426 = vmatmul.mubr.f32.gmra.mxu0 %v305
        %v427 = vpop.f32.mrf.mxu0
        %v428 = vadd.f32 0.0, %v427
        %v429 = vpop.f32.mrf.mxu0
        %430 = vmatprep.mubr.f32.mxu0 0.0
        %431 = vmatmul.mubr.f32.gmra.mxu0 %v306
        %v432 = vpop.f32.mrf.mxu0
        %v433 = vadd.f32 0.0, %v432
        %v434 = vpop.f32.mrf.mxu0
        %435 = vmatprep.mubr.f32.mxu0 0.0
        %436 = vmatmul.mubr.f32.gmra.mxu0 %v307
        %v437 = vpop.f32.mrf.mxu0
        %v438 = vadd.f32 0.0, %v437
        %v439 = vpop.f32.mrf.mxu0
        %440 = vmatprep.mubr.f32.mxu0 0.0
        %441 = vmatmul.mubr.f32.gmra.mxu0 %v308
        %v442 = vpop.f32.mrf.mxu0
        %v443 = vadd.f32 0.0, %v442
        %v444 = vpop.f32.mrf.mxu0
        %445 = vmatprep.mubr.f32.mxu0 0.0
        %446 = vmatmul.mubr.f32.gmra.mxu0 %v309
        %v447 = vpop.f32.mrf.mxu0
        %v448 = vadd.f32 0.0, %v447
        %v449 = vpop.f32.mrf.mxu0
        %450 = vmatprep.mubr.f32.mxu0 0.0
        %451 = vmatmul.mubr.f32.gmra.mxu0 %v310
        %v452 = vpop.f32.mrf.mxu0
        %v453 = vadd.f32 0.0, %v452
        %v454 = vpop.f32.mrf.mxu0
        %455 = vmatprep.mubr.f32.mxu0 0.0
        %456 = vmatmul.mubr.f32.gmra.mxu0 %v311
        %v457 = vpop.f32.mrf.mxu0
        %v458 = vadd.f32 0.0, %v457
        %v459 = vpop.f32.mrf.mxu0
        %460 = vmatprep.mubr.f32.mxu0 0.0
        %461 = vmatmul.mubr.f32.gmra.mxu0 %v312
        %v462 = vpop.f32.mrf.mxu0
        %v463 = vadd.f32 0.0, %v462
        %v464 = vpop.f32.mrf.mxu0
        %465 = vmatprep.mubr.f32.mxu0 0.0
        %466 = vmatmul.mubr.f32.gmra.mxu0 %v313
        %v467 = vpop.f32.mrf.mxu0
        %v468 = vadd.f32 0.0, %v467
        %v469 = vpop.f32.mrf.mxu0
        %470 = vmatprep.mubr.f32.mxu0 0.0
        %471 = vmatmul.mubr.f32.gmra.mxu0 %v314
        %v472 = vpop.f32.mrf.mxu0
        %v473 = vadd.f32 0.0, %v472
        %v474 = vpop.f32.mrf.mxu0
        %475 = vdwg.mxu0
        %v476 = vld [vmem:[#allocation6] sm:$0xff]
        %v477 = vld [vmem:[#allocation6 + $0x8] sm:$0xff]
        %v478 = vld [vmem:[#allocation6 + $0x10] sm:$0xff]
        %v479 = vld [vmem:[#allocation6 + $0x18] sm:$0xff]
        %v480 = vld [vmem:[#allocation6 + $0x20] sm:$0xff]
        %v481 = vld [vmem:[#allocation6 + $0x28] sm:$0xff]
        %v482 = vld [vmem:[#allocation6 + $0x30] sm:$0xff]
        %v483 = vld [vmem:[#allocation6 + $0x38] sm:$0xff]
        %v484 = vld [vmem:[#allocation6 + $0x40] sm:$0xff]
        %v485 = vld [vmem:[#allocation6 + $0x48] sm:$0xff]
        %v486 = vld [vmem:[#allocation6 + $0x50] sm:$0xff]
        %v487 = vld [vmem:[#allocation6 + $0x58] sm:$0xff]
        %v488 = vld [vmem:[#allocation6 + $0x60] sm:$0xff]
        %v489 = vld [vmem:[#allocation6 + $0x68] sm:$0xff]
        %v490 = vld [vmem:[#allocation6 + $0x70] sm:$0xff]
        %v491 = vld [vmem:[#allocation6 + $0x78] sm:$0xff]
        %492 = vmatprep.subr.mxu0 0.0
        %493 = vmatpush1.msra.mxu0 %v491
        %494 = vmatprep.subr.mxu0 0.0
        %495 = vmatpush1.msra.mxu0 %v490
        %496 = vmatprep.subr.mxu0 0.0
        %497 = vmatpush1.msra.mxu0 %v489
        %498 = vmatprep.subr.mxu0 0.0
        %499 = vmatpush1.msra.mxu0 %v488
        %500 = vmatprep.subr.mxu0 0.0
        %501 = vmatpush1.msra.mxu0 %v487
        %502 = vmatprep.subr.mxu0 0.0
        %503 = vmatpush1.msra.mxu0 %v486
        %504 = vmatprep.subr.mxu0 0.0
        %505 = vmatpush1.msra.mxu0 %v485
        %506 = vmatprep.subr.mxu0 0.0
        %507 = vmatpush1.msra.mxu0 %v484
        %508 = vmatprep.subr.mxu0 0.0
        %509 = vmatpush1.msra.mxu0 %v483
        %510 = vmatprep.subr.mxu0 0.0
        %511 = vmatpush1.msra.mxu0 %v482
        %512 = vmatprep.subr.mxu0 0.0
        %513 = vmatpush1.msra.mxu0 %v481
        %514 = vmatprep.subr.mxu0 0.0
        %515 = vmatpush1.msra.mxu0 %v480
        %516 = vmatprep.subr.mxu0 0.0
        %517 = vmatpush1.msra.mxu0 %v479
        %518 = vmatprep.subr.mxu0 0.0
        %519 = vmatpush1.msra.mxu0 %v478
        %520 = vmatprep.subr.mxu0 0.0
        %521 = vmatpush1.msra.mxu0 %v477
        %522 = vmatprep.subr.mxu0 0.0
        %523 = vmatpush1.msra.mxu0 %v476
        %524 = vmatprep.subr.mxu0 0.0
        %525 = vmatpush2.msra.mxu0 0.0
        %526 = vmatprep.subr.mxu0 0.0
        %527 = vmatpush2.msra.mxu0 0.0
        %528 = vmatprep.subr.mxu0 0.0
        %529 = vmatpush2.msra.mxu0 0.0
        %530 = vmatprep.subr.mxu0 0.0
        %531 = vmatpush2.msra.mxu0 0.0
        %532 = vmatprep.subr.mxu0 0.0
        %533 = vmatpush2.msra.mxu0 0.0
        %534 = vmatprep.subr.mxu0 0.0
        %535 = vmatpush2.msra.mxu0 0.0
        %536 = vmatprep.subr.mxu0 0.0
        %537 = vmatpush2.msra.mxu0 0.0
        %538 = vmatprep.subr.mxu0 0.0
        %539 = vmatpush2.msra.mxu0 0.0
        %540 = vmatprep.subr.mxu0 0.0
        %541 = vmatpush2.msra.mxu0 0.0
        %542 = vmatprep.subr.mxu0 0.0
        %543 = vmatpush2.msra.mxu0 0.0
        %544 = vmatprep.subr.mxu0 0.0
        %545 = vmatpush2.msra.mxu0 0.0
        %546 = vmatprep.subr.mxu0 0.0
        %547 = vmatpush2.msra.mxu0 0.0
        %548 = vmatprep.subr.mxu0 0.0
        %549 = vmatpush2.msra.mxu0 0.0
        %550 = vmatprep.subr.mxu0 0.0
        %551 = vmatpush2.msra.mxu0 0.0
        %552 = vmatprep.subr.mxu0 0.0
        %553 = vmatpush2.msra.mxu0 0.0
        %554 = vmatprep.subr.mxu0 0.0
        %555 = vmatpush2.msra.mxu0 0.0
        %556 = vmatprep.mubr.f32.mxu0 0.0
        %557 = vmatmul.mubr.f32.gmra.mxu0 %v299
        %v558 = vpop.f32.mrf.mxu0
        %v559 = vadd.f32 0.0, %v558
        %v560 = vpop.f32.mrf.mxu0
        %561 = vmatprep.mubr.f32.mxu0 0.0
        %562 = vmatmul.mubr.f32.gmra.mxu0 %v300
        %v563 = vpop.f32.mrf.mxu0
        %v564 = vadd.f32 0.0, %v563
        %v565 = vpop.f32.mrf.mxu0
        %566 = vmatprep.mubr.f32.mxu0 0.0
        %567 = vmatmul.mubr.f32.gmra.mxu0 %v301
        %v568 = vpop.f32.mrf.mxu0
        %v569 = vadd.f32 0.0, %v568
        %v570 = vpop.f32.mrf.mxu0
        %571 = vmatprep.mubr.f32.mxu0 0.0
        %572 = vmatmul.mubr.f32.gmra.mxu0 %v302
        %v573 = vpop.f32.mrf.mxu0
        %v574 = vadd.f32 0.0, %v573
        %v575 = vpop.f32.mrf.mxu0
        %576 = vmatprep.mubr.f32.mxu0 0.0
        %577 = vmatmul.mubr.f32.gmra.mxu0 %v303
        %v578 = vpop.f32.mrf.mxu0
        %v579 = vadd.f32 0.0, %v578
        %v580 = vpop.f32.mrf.mxu0
        %581 = vmatprep.mubr.f32.mxu0 0.0
        %582 = vmatmul.mubr.f32.gmra.mxu0 %v304
        %v583 = vpop.f32.mrf.mxu0
        %v584 = vadd.f32 0.0, %v583
        %v585 = vpop.f32.mrf.mxu0
        %586 = vmatprep.mubr.f32.mxu0 0.0
        %587 = vmatmul.mubr.f32.gmra.mxu0 %v305
        %v588 = vpop.f32.mrf.mxu0
        %v589 = vadd.f32 0.0, %v588
        %v590 = vpop.f32.mrf.mxu0
        %591 = vmatprep.mubr.f32.mxu0 0.0
        %592 = vmatmul.mubr.f32.gmra.mxu0 %v306
        %v593 = vpop.f32.mrf.mxu0
        %v594 = vadd.f32 0.0, %v593
        %v595 = vpop.f32.mrf.mxu0
        %596 = vmatprep.mubr.f32.mxu0 0.0
        %597 = vmatmul.mubr.f32.gmra.mxu0 %v307
        %v598 = vpop.f32.mrf.mxu0
        %v599 = vadd.f32 0.0, %v598
        %v600 = vpop.f32.mrf.mxu0
        %601 = vmatprep.mubr.f32.mxu0 0.0
        %602 = vmatmul.mubr.f32.gmra.mxu0 %v308
        %v603 = vpop.f32.mrf.mxu0
        %v604 = vadd.f32 0.0, %v603
        %v605 = vpop.f32.mrf.mxu0
        %606 = vmatprep.mubr.f32.mxu0 0.0
        %607 = vmatmul.mubr.f32.gmra.mxu0 %v309
        %v608 = vpop.f32.mrf.mxu0
        %v609 = vadd.f32 0.0, %v608
        %v610 = vpop.f32.mrf.mxu0
        %611 = vmatprep.mubr.f32.mxu0 0.0
        %612 = vmatmul.mubr.f32.gmra.mxu0 %v310
        %v613 = vpop.f32.mrf.mxu0
        %v614 = vadd.f32 0.0, %v613
        %v615 = vpop.f32.mrf.mxu0
        %616 = vmatprep.mubr.f32.mxu0 0.0
        %617 = vmatmul.mubr.f32.gmra.mxu0 %v311
        %v618 = vpop.f32.mrf.mxu0
        %v619 = vadd.f32 0.0, %v618
        %v620 = vpop.f32.mrf.mxu0
        %621 = vmatprep.mubr.f32.mxu0 0.0
        %622 = vmatmul.mubr.f32.gmra.mxu0 %v312
        %v623 = vpop.f32.mrf.mxu0
        %v624 = vadd.f32 0.0, %v623
        %v625 = vpop.f32.mrf.mxu0
        %626 = vmatprep.mubr.f32.mxu0 0.0
        %627 = vmatmul.mubr.f32.gmra.mxu0 %v313
        %v628 = vpop.f32.mrf.mxu0
        %v629 = vadd.f32 0.0, %v628
        %v630 = vpop.f32.mrf.mxu0
        %631 = vmatprep.mubr.f32.mxu0 0.0
        %632 = vmatmul.mubr.f32.gmra.mxu0 %v314
        %v633 = vpop.f32.mrf.mxu0
        %v634 = vadd.f32 0.0, %v633
        %v635 = vpop.f32.mrf.mxu0
        %636 = vdwg.mxu0
        %653 = vrot.lane.b32.xlu0 %v398, 96
        %v654 = vpop.permute.xlu0 %653
        %655 = vrot.lane.b32.xlu0 %v403, 96
        %v656 = vpop.permute.xlu0 %655
        %657 = vrot.lane.b32.xlu0 %v408, 96
        %v658 = vpop.permute.xlu0 %657
        %659 = vrot.lane.b32.xlu0 %v413, 96
        %v660 = vpop.permute.xlu0 %659
        %661 = vrot.lane.b32.xlu0 %v418, 96
        %v662 = vpop.permute.xlu0 %661
        %663 = vrot.lane.b32.xlu0 %v423, 96
        %v664 = vpop.permute.xlu0 %663
        %665 = vrot.lane.b32.xlu0 %v428, 96
        %v666 = vpop.permute.xlu0 %665
        %667 = vrot.lane.b32.xlu0 %v433, 96
        %v668 = vpop.permute.xlu0 %667
        %669 = vrot.lane.b32.xlu0 %v438, 96
        %v670 = vpop.permute.xlu0 %669
        %671 = vrot.lane.b32.xlu0 %v443, 96
        %v672 = vpop.permute.xlu0 %671
        %673 = vrot.lane.b32.xlu0 %v448, 96
        %v674 = vpop.permute.xlu0 %673
        %675 = vrot.lane.b32.xlu0 %v453, 96
        %v676 = vpop.permute.xlu0 %675
        %677 = vrot.lane.b32.xlu0 %v458, 96
        %v678 = vpop.permute.xlu0 %677
        %679 = vrot.lane.b32.xlu0 %v463, 96
        %v680 = vpop.permute.xlu0 %679
        %681 = vrot.lane.b32.xlu0 %v468, 96
        %v682 = vpop.permute.xlu0 %681
        %683 = vrot.lane.b32.xlu0 %v473, 96
        %v684 = vpop.permute.xlu0 %683
        %701 = vrot.lane.b32.xlu0 %v398, 64
        %v702 = vpop.permute.xlu0 %701
        %703 = vrot.lane.b32.xlu0 %v403, 64
        %v704 = vpop.permute.xlu0 %703
        %705 = vrot.lane.b32.xlu0 %v408, 64
        %v706 = vpop.permute.xlu0 %705
        %707 = vrot.lane.b32.xlu0 %v413, 64
        %v708 = vpop.permute.xlu0 %707
        %709 = vrot.lane.b32.xlu0 %v418, 64
        %v710 = vpop.permute.xlu0 %709
        %711 = vrot.lane.b32.xlu0 %v423, 64
        %v712 = vpop.permute.xlu0 %711
        %713 = vrot.lane.b32.xlu0 %v428, 64
        %v714 = vpop.permute.xlu0 %713
        %715 = vrot.lane.b32.xlu0 %v433, 64
        %v716 = vpop.permute.xlu0 %715
        %717 = vrot.lane.b32.xlu0 %v438, 64
        %v718 = vpop.permute.xlu0 %717
        %719 = vrot.lane.b32.xlu0 %v443, 64
        %v720 = vpop.permute.xlu0 %719
        %721 = vrot.lane.b32.xlu0 %v448, 64
        %v722 = vpop.permute.xlu0 %721
        %723 = vrot.lane.b32.xlu0 %v453, 64
        %v724 = vpop.permute.xlu0 %723
        %725 = vrot.lane.b32.xlu0 %v458, 64
        %v726 = vpop.permute.xlu0 %725
        %727 = vrot.lane.b32.xlu0 %v463, 64
        %v728 = vpop.permute.xlu0 %727
        %729 = vrot.lane.b32.xlu0 %v468, 64
        %v730 = vpop.permute.xlu0 %729
        %731 = vrot.lane.b32.xlu0 %v473, 64
        %v732 = vpop.permute.xlu0 %731
        %749 = vrot.lane.b32.xlu0 %v398, 32
        %v750 = vpop.permute.xlu0 %749
        %751 = vrot.lane.b32.xlu0 %v403, 32
        %v752 = vpop.permute.xlu0 %751
        %753 = vrot.lane.b32.xlu0 %v408, 32
        %v754 = vpop.permute.xlu0 %753
        %755 = vrot.lane.b32.xlu0 %v413, 32
        %v756 = vpop.permute.xlu0 %755
        %757 = vrot.lane.b32.xlu0 %v418, 32
        %v758 = vpop.permute.xlu0 %757
        %759 = vrot.lane.b32.xlu0 %v423, 32
        %v760 = vpop.permute.xlu0 %759
        %761 = vrot.lane.b32.xlu0 %v428, 32
        %v762 = vpop.permute.xlu0 %761
        %763 = vrot.lane.b32.xlu0 %v433, 32
        %v764 = vpop.permute.xlu0 %763
        %765 = vrot.lane.b32.xlu0 %v438, 32
        %v766 = vpop.permute.xlu0 %765
        %767 = vrot.lane.b32.xlu0 %v443, 32
        %v768 = vpop.permute.xlu0 %767
        %769 = vrot.lane.b32.xlu0 %v448, 32
        %v770 = vpop.permute.xlu0 %769
        %771 = vrot.lane.b32.xlu0 %v453, 32
        %v772 = vpop.permute.xlu0 %771
        %773 = vrot.lane.b32.xlu0 %v458, 32
        %v774 = vpop.permute.xlu0 %773
        %775 = vrot.lane.b32.xlu0 %v463, 32
        %v776 = vpop.permute.xlu0 %775
        %777 = vrot.lane.b32.xlu0 %v468, 32
        %v778 = vpop.permute.xlu0 %777
        %779 = vrot.lane.b32.xlu0 %v473, 32
        %v780 = vpop.permute.xlu0 %779
        %v797 = vcombine.low %v398, %v702
        %v798 = vcombine.high %v398, %v702
        %v800 = vunpack.c.l.s4 1983009808
        %v801 = vunpack.c.0.s8 %v800
        %v802 = vlaneseq
        %v803 = vshrl.u32 %v802, 7
        %v804 = vsub.s32 %v801, %v803
        %v805 = vrot.slane %v797, %v804
        %v807 = vunpack.c.l.s4 1983009808
        %v808 = vunpack.c.0.s8 %v807
        %v809 = vlaneseq
        %v810 = vshrl.u32 %v809, 7
        %v811 = vsub.s32 %v808, %v810
        %v812 = vrot.slane %v798, %v811
        %v813 = vcombine.low %v654, %v750
        %v814 = vcombine.high %v654, %v750
        %v816 = vunpack.c.l.s4 1983009808
        %v817 = vunpack.c.0.s8 %v816
        %v818 = vlaneseq
        %v819 = vshrl.u32 %v818, 7
        %v820 = vsub.s32 %v817, %v819
        %v821 = vrot.slane %v813, %v820
        %v823 = vunpack.c.l.s4 1983009808
        %v824 = vunpack.c.0.s8 %v823
        %v825 = vlaneseq
        %v826 = vshrl.u32 %v825, 7
        %v827 = vsub.s32 %v824, %v826
        %v828 = vrot.slane %v814, %v827
        %v829 = vcombine.low %v805, %v821
        %v830 = vcombine.high %v805, %v821
        %v832 = vunpack.c.l.s4 1934713408
        %v833 = vunpack.c.0.s8 %v832
        %v834 = vlaneseq
        %v835 = vshrl.u32 %v834, 7
        %v836 = vsub.s32 %v833, %v835
        %v837 = vrot.slane %v829, %v836
        %v839 = vunpack.c.l.s4 1934713408
        %v840 = vunpack.c.0.s8 %v839
        %v841 = vlaneseq
        %v842 = vshrl.u32 %v841, 7
        %v843 = vsub.s32 %v840, %v842
        %v844 = vrot.slane %v830, %v843
        %v845 = vcombine.low %v812, %v828
        %v846 = vcombine.high %v812, %v828
        %v848 = vunpack.c.l.s4 1934713408
        %v849 = vunpack.c.0.s8 %v848
        %v850 = vlaneseq
        %v851 = vshrl.u32 %v850, 7
        %v852 = vsub.s32 %v849, %v851
        %v853 = vrot.slane %v845, %v852
        %v855 = vunpack.c.l.s4 1934713408
        %v856 = vunpack.c.0.s8 %v855
        %v857 = vlaneseq
        %v858 = vshrl.u32 %v857, 7
        %v859 = vsub.s32 %v856, %v858
        %v860 = vrot.slane %v846, %v859
        %v861 = vcombine.high %v837, 0.0
        %v862 = vcombine.high %v844, 0.0
        %v863 = vcombine.high %v853, 0.0
        %v864 = vcombine.high %v860, 0.0
        %v865 = vcombine.low %v403, %v704
        %v866 = vcombine.high %v403, %v704
        %v868 = vunpack.c.l.s4 1983009808
        %v869 = vunpack.c.0.s8 %v868
        %v870 = vlaneseq
        %v871 = vshrl.u32 %v870, 7
        %v872 = vsub.s32 %v869, %v871
        %v873 = vrot.slane %v865, %v872
        %v875 = vunpack.c.l.s4 1983009808
        %v876 = vunpack.c.0.s8 %v875
        %v877 = vlaneseq
        %v878 = vshrl.u32 %v877, 7
        %v879 = vsub.s32 %v876, %v878
        %v880 = vrot.slane %v866, %v879
        %v881 = vcombine.low %v656, %v752
        %v882 = vcombine.high %v656, %v752
        %v884 = vunpack.c.l.s4 1983009808
        %v885 = vunpack.c.0.s8 %v884
        %v886 = vlaneseq
        %v887 = vshrl.u32 %v886, 7
        %v888 = vsub.s32 %v885, %v887
        %v889 = vrot.slane %v881, %v888
        %v891 = vunpack.c.l.s4 1983009808
        %v892 = vunpack.c.0.s8 %v891
        %v893 = vlaneseq
        %v894 = vshrl.u32 %v893, 7
        %v895 = vsub.s32 %v892, %v894
        %v896 = vrot.slane %v882, %v895
        %v897 = vcombine.low %v873, %v889
        %v898 = vcombine.high %v873, %v889
        %v900 = vunpack.c.l.s4 1934713408
        %v901 = vunpack.c.0.s8 %v900
        %v902 = vlaneseq
        %v903 = vshrl.u32 %v902, 7
        %v904 = vsub.s32 %v901, %v903
        %v905 = vrot.slane %v897, %v904
        %v907 = vunpack.c.l.s4 1934713408
        %v908 = vunpack.c.0.s8 %v907
        %v909 = vlaneseq
        %v910 = vshrl.u32 %v909, 7
        %v911 = vsub.s32 %v908, %v910
        %v912 = vrot.slane %v898, %v911
        %v913 = vcombine.low %v880, %v896
        %v914 = vcombine.high %v880, %v896
        %v916 = vunpack.c.l.s4 1934713408
        %v917 = vunpack.c.0.s8 %v916
        %v918 = vlaneseq
        %v919 = vshrl.u32 %v918, 7
        %v920 = vsub.s32 %v917, %v919
        %v921 = vrot.slane %v913, %v920
        %v923 = vunpack.c.l.s4 1934713408
        %v924 = vunpack.c.0.s8 %v923
        %v925 = vlaneseq
        %v926 = vshrl.u32 %v925, 7
        %v927 = vsub.s32 %v924, %v926
        %v928 = vrot.slane %v914, %v927
        %v929 = vcombine.high %v905, 0.0
        %v930 = vcombine.high %v912, 0.0
        %v931 = vcombine.high %v921, 0.0
        %v932 = vcombine.high %v928, 0.0
        %v933 = vcombine.low %v408, %v706
        %v934 = vcombine.high %v408, %v706
        %v936 = vunpack.c.l.s4 1983009808
        %v937 = vunpack.c.0.s8 %v936
        %v938 = vlaneseq
        %v939 = vshrl.u32 %v938, 7
        %v940 = vsub.s32 %v937, %v939
        %v941 = vrot.slane %v933, %v940
        %v943 = vunpack.c.l.s4 1983009808
        %v944 = vunpack.c.0.s8 %v943
        %v945 = vlaneseq
        %v946 = vshrl.u32 %v945, 7
        %v947 = vsub.s32 %v944, %v946
        %v948 = vrot.slane %v934, %v947
        %v949 = vcombine.low %v658, %v754
        %v950 = vcombine.high %v658, %v754
        %v952 = vunpack.c.l.s4 1983009808
        %v953 = vunpack.c.0.s8 %v952
        %v954 = vlaneseq
        %v955 = vshrl.u32 %v954, 7
        %v956 = vsub.s32 %v953, %v955
        %v957 = vrot.slane %v949, %v956
        %v959 = vunpack.c.l.s4 1983009808
        %v960 = vunpack.c.0.s8 %v959
        %v961 = vlaneseq
        %v962 = vshrl.u32 %v961, 7
        %v963 = vsub.s32 %v960, %v962
        %v964 = vrot.slane %v950, %v963
        %v965 = vcombine.low %v941, %v957
        %v966 = vcombine.high %v941, %v957
        %v968 = vunpack.c.l.s4 1934713408
        %v969 = vunpack.c.0.s8 %v968
        %v970 = vlaneseq
        %v971 = vshrl.u32 %v970, 7
        %v972 = vsub.s32 %v969, %v971
        %v973 = vrot.slane %v965, %v972
        %v975 = vunpack.c.l.s4 1934713408
        %v976 = vunpack.c.0.s8 %v975
        %v977 = vlaneseq
        %v978 = vshrl.u32 %v977, 7
        %v979 = vsub.s32 %v976, %v978
        %v980 = vrot.slane %v966, %v979
        %v981 = vcombine.low %v948, %v964
        %v982 = vcombine.high %v948, %v964
        %v984 = vunpack.c.l.s4 1934713408
        %v985 = vunpack.c.0.s8 %v984
        %v986 = vlaneseq
        %v987 = vshrl.u32 %v986, 7
        %v988 = vsub.s32 %v985, %v987
        %v989 = vrot.slane %v981, %v988
        %v991 = vunpack.c.l.s4 1934713408
        %v992 = vunpack.c.0.s8 %v991
        %v993 = vlaneseq
        %v994 = vshrl.u32 %v993, 7
        %v995 = vsub.s32 %v992, %v994
        %v996 = vrot.slane %v982, %v995
        %v997 = vcombine.high %v973, 0.0
        %v998 = vcombine.high %v980, 0.0
        %v999 = vcombine.high %v989, 0.0
        %v1000 = vcombine.high %v996, 0.0
        %v1001 = vcombine.low %v413, %v708
        %v1002 = vcombine.high %v413, %v708
        %v1004 = vunpack.c.l.s4 1983009808
        %v1005 = vunpack.c.0.s8 %v1004
        %v1006 = vlaneseq
        %v1007 = vshrl.u32 %v1006, 7
        %v1008 = vsub.s32 %v1005, %v1007
        %v1009 = vrot.slane %v1001, %v1008
        %v1011 = vunpack.c.l.s4 1983009808
        %v1012 = vunpack.c.0.s8 %v1011
        %v1013 = vlaneseq
        %v1014 = vshrl.u32 %v1013, 7
        %v1015 = vsub.s32 %v1012, %v1014
        %v1016 = vrot.slane %v1002, %v1015
        %v1017 = vcombine.low %v660, %v756
        %v1018 = vcombine.high %v660, %v756
        %v1020 = vunpack.c.l.s4 1983009808
        %v1021 = vunpack.c.0.s8 %v1020
        %v1022 = vlaneseq
        %v1023 = vshrl.u32 %v1022, 7
        %v1024 = vsub.s32 %v1021, %v1023
        %v1025 = vrot.slane %v1017, %v1024
        %v1027 = vunpack.c.l.s4 1983009808
        %v1028 = vunpack.c.0.s8 %v1027
        %v1029 = vlaneseq
        %v1030 = vshrl.u32 %v1029, 7
        %v1031 = vsub.s32 %v1028, %v1030
        %v1032 = vrot.slane %v1018, %v1031
        %v1033 = vcombine.low %v1009, %v1025
        %v1034 = vcombine.high %v1009, %v1025
        %v1036 = vunpack.c.l.s4 1934713408
        %v1037 = vunpack.c.0.s8 %v1036
        %v1038 = vlaneseq
        %v1039 = vshrl.u32 %v1038, 7
        %v1040 = vsub.s32 %v1037, %v1039
        %v1041 = vrot.slane %v1033, %v1040
        %v1043 = vunpack.c.l.s4 1934713408
        %v1044 = vunpack.c.0.s8 %v1043
        %v1045 = vlaneseq
        %v1046 = vshrl.u32 %v1045, 7
        %v1047 = vsub.s32 %v1044, %v1046
        %v1048 = vrot.slane %v1034, %v1047
        %v1049 = vcombine.low %v1016, %v1032
        %v1050 = vcombine.high %v1016, %v1032
        %v1052 = vunpack.c.l.s4 1934713408
        %v1053 = vunpack.c.0.s8 %v1052
        %v1054 = vlaneseq
        %v1055 = vshrl.u32 %v1054, 7
        %v1056 = vsub.s32 %v1053, %v1055
        %v1057 = vrot.slane %v1049, %v1056
        %v1059 = vunpack.c.l.s4 1934713408
        %v1060 = vunpack.c.0.s8 %v1059
        %v1061 = vlaneseq
        %v1062 = vshrl.u32 %v1061, 7
        %v1063 = vsub.s32 %v1060, %v1062
        %v1064 = vrot.slane %v1050, %v1063
        %v1065 = vcombine.high %v1041, 0.0
        %v1066 = vcombine.high %v1048, 0.0
        %v1067 = vcombine.high %v1057, 0.0
        %v1068 = vcombine.high %v1064, 0.0
        %v1069 = vcombine.low %v418, %v710
        %v1070 = vcombine.high %v418, %v710
        %v1072 = vunpack.c.l.s4 1983009808
        %v1073 = vunpack.c.0.s8 %v1072
        %v1074 = vlaneseq
        %v1075 = vshrl.u32 %v1074, 7
        %v1076 = vsub.s32 %v1073, %v1075
        %v1077 = vrot.slane %v1069, %v1076
        %v1079 = vunpack.c.l.s4 1983009808
        %v1080 = vunpack.c.0.s8 %v1079
        %v1081 = vlaneseq
        %v1082 = vshrl.u32 %v1081, 7
        %v1083 = vsub.s32 %v1080, %v1082
        %v1084 = vrot.slane %v1070, %v1083
        %v1085 = vcombine.low %v662, %v758
        %v1086 = vcombine.high %v662, %v758
        %v1088 = vunpack.c.l.s4 1983009808
        %v1089 = vunpack.c.0.s8 %v1088
        %v1090 = vlaneseq
        %v1091 = vshrl.u32 %v1090, 7
        %v1092 = vsub.s32 %v1089, %v1091
        %v1093 = vrot.slane %v1085, %v1092
        %v1095 = vunpack.c.l.s4 1983009808
        %v1096 = vunpack.c.0.s8 %v1095
        %v1097 = vlaneseq
        %v1098 = vshrl.u32 %v1097, 7
        %v1099 = vsub.s32 %v1096, %v1098
        %v1100 = vrot.slane %v1086, %v1099
        %v1101 = vcombine.low %v1077, %v1093
        %v1102 = vcombine.high %v1077, %v1093
        %v1104 = vunpack.c.l.s4 1934713408
        %v1105 = vunpack.c.0.s8 %v1104
        %v1106 = vlaneseq
        %v1107 = vshrl.u32 %v1106, 7
        %v1108 = vsub.s32 %v1105, %v1107
        %v1109 = vrot.slane %v1101, %v1108
        %v1111 = vunpack.c.l.s4 1934713408
        %v1112 = vunpack.c.0.s8 %v1111
        %v1113 = vlaneseq
        %v1114 = vshrl.u32 %v1113, 7
        %v1115 = vsub.s32 %v1112, %v1114
        %v1116 = vrot.slane %v1102, %v1115
        %v1117 = vcombine.low %v1084, %v1100
        %v1118 = vcombine.high %v1084, %v1100
        %v1120 = vunpack.c.l.s4 1934713408
        %v1121 = vunpack.c.0.s8 %v1120
        %v1122 = vlaneseq
        %v1123 = vshrl.u32 %v1122, 7
        %v1124 = vsub.s32 %v1121, %v1123
        %v1125 = vrot.slane %v1117, %v1124
        %v1127 = vunpack.c.l.s4 1934713408
        %v1128 = vunpack.c.0.s8 %v1127
        %v1129 = vlaneseq
        %v1130 = vshrl.u32 %v1129, 7
        %v1131 = vsub.s32 %v1128, %v1130
        %v1132 = vrot.slane %v1118, %v1131
        %v1133 = vcombine.high %v1109, 0.0
        %v1134 = vcombine.high %v1116, 0.0
        %v1135 = vcombine.high %v1125, 0.0
        %v1136 = vcombine.high %v1132, 0.0
        %v1137 = vcombine.low %v423, %v712
        %v1138 = vcombine.high %v423, %v712
        %v1140 = vunpack.c.l.s4 1983009808
        %v1141 = vunpack.c.0.s8 %v1140
        %v1142 = vlaneseq
        %v1143 = vshrl.u32 %v1142, 7
        %v1144 = vsub.s32 %v1141, %v1143
        %v1145 = vrot.slane %v1137, %v1144
        %v1147 = vunpack.c.l.s4 1983009808
        %v1148 = vunpack.c.0.s8 %v1147
        %v1149 = vlaneseq
        %v1150 = vshrl.u32 %v1149, 7
        %v1151 = vsub.s32 %v1148, %v1150
        %v1152 = vrot.slane %v1138, %v1151
        %v1153 = vcombine.low %v664, %v760
        %v1154 = vcombine.high %v664, %v760
        %v1156 = vunpack.c.l.s4 1983009808
        %v1157 = vunpack.c.0.s8 %v1156
        %v1158 = vlaneseq
        %v1159 = vshrl.u32 %v1158, 7
        %v1160 = vsub.s32 %v1157, %v1159
        %v1161 = vrot.slane %v1153, %v1160
        %v1163 = vunpack.c.l.s4 1983009808
        %v1164 = vunpack.c.0.s8 %v1163
        %v1165 = vlaneseq
        %v1166 = vshrl.u32 %v1165, 7
        %v1167 = vsub.s32 %v1164, %v1166
        %v1168 = vrot.slane %v1154, %v1167
        %v1169 = vcombine.low %v1145, %v1161
        %v1170 = vcombine.high %v1145, %v1161
        %v1172 = vunpack.c.l.s4 1934713408
        %v1173 = vunpack.c.0.s8 %v1172
        %v1174 = vlaneseq
        %v1175 = vshrl.u32 %v1174, 7
        %v1176 = vsub.s32 %v1173, %v1175
        %v1177 = vrot.slane %v1169, %v1176
        %v1179 = vunpack.c.l.s4 1934713408
        %v1180 = vunpack.c.0.s8 %v1179
        %v1181 = vlaneseq
        %v1182 = vshrl.u32 %v1181, 7
        %v1183 = vsub.s32 %v1180, %v1182
        %v1184 = vrot.slane %v1170, %v1183
        %v1185 = vcombine.low %v1152, %v1168
        %v1186 = vcombine.high %v1152, %v1168
        %v1188 = vunpack.c.l.s4 1934713408
        %v1189 = vunpack.c.0.s8 %v1188
        %v1190 = vlaneseq
        %v1191 = vshrl.u32 %v1190, 7
        %v1192 = vsub.s32 %v1189, %v1191
        %v1193 = vrot.slane %v1185, %v1192
        %v1195 = vunpack.c.l.s4 1934713408
        %v1196 = vunpack.c.0.s8 %v1195
        %v1197 = vlaneseq
        %v1198 = vshrl.u32 %v1197, 7
        %v1199 = vsub.s32 %v1196, %v1198
        %v1200 = vrot.slane %v1186, %v1199
        %v1201 = vcombine.high %v1177, 0.0
        %v1202 = vcombine.high %v1184, 0.0
        %v1203 = vcombine.high %v1193, 0.0
        %v1204 = vcombine.high %v1200, 0.0
        %v1205 = vcombine.low %v428, %v714
        %v1206 = vcombine.high %v428, %v714
        %v1208 = vunpack.c.l.s4 1983009808
        %v1209 = vunpack.c.0.s8 %v1208
        %v1210 = vlaneseq
        %v1211 = vshrl.u32 %v1210, 7
        %v1212 = vsub.s32 %v1209, %v1211
        %v1213 = vrot.slane %v1205, %v1212
        %v1215 = vunpack.c.l.s4 1983009808
        %v1216 = vunpack.c.0.s8 %v1215
        %v1217 = vlaneseq
        %v1218 = vshrl.u32 %v1217, 7
        %v1219 = vsub.s32 %v1216, %v1218
        %v1220 = vrot.slane %v1206, %v1219
        %v1221 = vcombine.low %v666, %v762
        %v1222 = vcombine.high %v666, %v762
        %v1224 = vunpack.c.l.s4 1983009808
        %v1225 = vunpack.c.0.s8 %v1224
        %v1226 = vlaneseq
        %v1227 = vshrl.u32 %v1226, 7
        %v1228 = vsub.s32 %v1225, %v1227
        %v1229 = vrot.slane %v1221, %v1228
        %v1231 = vunpack.c.l.s4 1983009808
        %v1232 = vunpack.c.0.s8 %v1231
        %v1233 = vlaneseq
        %v1234 = vshrl.u32 %v1233, 7
        %v1235 = vsub.s32 %v1232, %v1234
        %v1236 = vrot.slane %v1222, %v1235
        %v1237 = vcombine.low %v1213, %v1229
        %v1238 = vcombine.high %v1213, %v1229
        %v1240 = vunpack.c.l.s4 1934713408
        %v1241 = vunpack.c.0.s8 %v1240
        %v1242 = vlaneseq
        %v1243 = vshrl.u32 %v1242, 7
        %v1244 = vsub.s32 %v1241, %v1243
        %v1245 = vrot.slane %v1237, %v1244
        %v1247 = vunpack.c.l.s4 1934713408
        %v1248 = vunpack.c.0.s8 %v1247
        %v1249 = vlaneseq
        %v1250 = vshrl.u32 %v1249, 7
        %v1251 = vsub.s32 %v1248, %v1250
        %v1252 = vrot.slane %v1238, %v1251
        %v1253 = vcombine.low %v1220, %v1236
        %v1254 = vcombine.high %v1220, %v1236
        %v1256 = vunpack.c.l.s4 1934713408
        %v1257 = vunpack.c.0.s8 %v1256
        %v1258 = vlaneseq
        %v1259 = vshrl.u32 %v1258, 7
        %v1260 = vsub.s32 %v1257, %v1259
        %v1261 = vrot.slane %v1253, %v1260
        %v1263 = vunpack.c.l.s4 1934713408
        %v1264 = vunpack.c.0.s8 %v1263
        %v1265 = vlaneseq
        %v1266 = vshrl.u32 %v1265, 7
        %v1267 = vsub.s32 %v1264, %v1266
        %v1268 = vrot.slane %v1254, %v1267
        %v1269 = vcombine.high %v1245, 0.0
        %v1270 = vcombine.high %v1252, 0.0
        %v1271 = vcombine.high %v1261, 0.0
        %v1272 = vcombine.high %v1268, 0.0
        %v1273 = vcombine.low %v433, %v716
        %v1274 = vcombine.high %v433, %v716
        %v1276 = vunpack.c.l.s4 1983009808
        %v1277 = vunpack.c.0.s8 %v1276
        %v1278 = vlaneseq
        %v1279 = vshrl.u32 %v1278, 7
        %v1280 = vsub.s32 %v1277, %v1279
        %v1281 = vrot.slane %v1273, %v1280
        %v1283 = vunpack.c.l.s4 1983009808
        %v1284 = vunpack.c.0.s8 %v1283
        %v1285 = vlaneseq
        %v1286 = vshrl.u32 %v1285, 7
        %v1287 = vsub.s32 %v1284, %v1286
        %v1288 = vrot.slane %v1274, %v1287
        %v1289 = vcombine.low %v668, %v764
        %v1290 = vcombine.high %v668, %v764
        %v1292 = vunpack.c.l.s4 1983009808
        %v1293 = vunpack.c.0.s8 %v1292
        %v1294 = vlaneseq
        %v1295 = vshrl.u32 %v1294, 7
        %v1296 = vsub.s32 %v1293, %v1295
        %v1297 = vrot.slane %v1289, %v1296
        %v1299 = vunpack.c.l.s4 1983009808
        %v1300 = vunpack.c.0.s8 %v1299
        %v1301 = vlaneseq
        %v1302 = vshrl.u32 %v1301, 7
        %v1303 = vsub.s32 %v1300, %v1302
        %v1304 = vrot.slane %v1290, %v1303
        %v1305 = vcombine.low %v1281, %v1297
        %v1306 = vcombine.high %v1281, %v1297
        %v1308 = vunpack.c.l.s4 1934713408
        %v1309 = vunpack.c.0.s8 %v1308
        %v1310 = vlaneseq
        %v1311 = vshrl.u32 %v1310, 7
        %v1312 = vsub.s32 %v1309, %v1311
        %v1313 = vrot.slane %v1305, %v1312
        %v1315 = vunpack.c.l.s4 1934713408
        %v1316 = vunpack.c.0.s8 %v1315
        %v1317 = vlaneseq
        %v1318 = vshrl.u32 %v1317, 7
        %v1319 = vsub.s32 %v1316, %v1318
        %v1320 = vrot.slane %v1306, %v1319
        %v1321 = vcombine.low %v1288, %v1304
        %v1322 = vcombine.high %v1288, %v1304
        %v1324 = vunpack.c.l.s4 1934713408
        %v1325 = vunpack.c.0.s8 %v1324
        %v1326 = vlaneseq
        %v1327 = vshrl.u32 %v1326, 7
        %v1328 = vsub.s32 %v1325, %v1327
        %v1329 = vrot.slane %v1321, %v1328
        %v1331 = vunpack.c.l.s4 1934713408
        %v1332 = vunpack.c.0.s8 %v1331
        %v1333 = vlaneseq
        %v1334 = vshrl.u32 %v1333, 7
        %v1335 = vsub.s32 %v1332, %v1334
        %v1336 = vrot.slane %v1322, %v1335
        %v1337 = vcombine.high %v1313, 0.0
        %v1338 = vcombine.high %v1320, 0.0
        %v1339 = vcombine.high %v1329, 0.0
        %v1340 = vcombine.high %v1336, 0.0
        %v1341 = vcombine.low %v438, %v718
        %v1342 = vcombine.high %v438, %v718
        %v1344 = vunpack.c.l.s4 1983009808
        %v1345 = vunpack.c.0.s8 %v1344
        %v1346 = vlaneseq
        %v1347 = vshrl.u32 %v1346, 7
        %v1348 = vsub.s32 %v1345, %v1347
        %v1349 = vrot.slane %v1341, %v1348
        %v1351 = vunpack.c.l.s4 1983009808
        %v1352 = vunpack.c.0.s8 %v1351
        %v1353 = vlaneseq
        %v1354 = vshrl.u32 %v1353, 7
        %v1355 = vsub.s32 %v1352, %v1354
        %v1356 = vrot.slane %v1342, %v1355
        %v1357 = vcombine.low %v670, %v766
        %v1358 = vcombine.high %v670, %v766
        %v1360 = vunpack.c.l.s4 1983009808
        %v1361 = vunpack.c.0.s8 %v1360
        %v1362 = vlaneseq
        %v1363 = vshrl.u32 %v1362, 7
        %v1364 = vsub.s32 %v1361, %v1363
        %v1365 = vrot.slane %v1357, %v1364
        %v1367 = vunpack.c.l.s4 1983009808
        %v1368 = vunpack.c.0.s8 %v1367
        %v1369 = vlaneseq
        %v1370 = vshrl.u32 %v1369, 7
        %v1371 = vsub.s32 %v1368, %v1370
        %v1372 = vrot.slane %v1358, %v1371
        %v1373 = vcombine.low %v1349, %v1365
        %v1374 = vcombine.high %v1349, %v1365
        %v1376 = vunpack.c.l.s4 1934713408
        %v1377 = vunpack.c.0.s8 %v1376
        %v1378 = vlaneseq
        %v1379 = vshrl.u32 %v1378, 7
        %v1380 = vsub.s32 %v1377, %v1379
        %v1381 = vrot.slane %v1373, %v1380
        %v1383 = vunpack.c.l.s4 1934713408
        %v1384 = vunpack.c.0.s8 %v1383
        %v1385 = vlaneseq
        %v1386 = vshrl.u32 %v1385, 7
        %v1387 = vsub.s32 %v1384, %v1386
        %v1388 = vrot.slane %v1374, %v1387
        %v1389 = vcombine.low %v1356, %v1372
        %v1390 = vcombine.high %v1356, %v1372
        %v1392 = vunpack.c.l.s4 1934713408
        %v1393 = vunpack.c.0.s8 %v1392
        %v1394 = vlaneseq
        %v1395 = vshrl.u32 %v1394, 7
        %v1396 = vsub.s32 %v1393, %v1395
        %v1397 = vrot.slane %v1389, %v1396
        %v1399 = vunpack.c.l.s4 1934713408
        %v1400 = vunpack.c.0.s8 %v1399
        %v1401 = vlaneseq
        %v1402 = vshrl.u32 %v1401, 7
        %v1403 = vsub.s32 %v1400, %v1402
        %v1404 = vrot.slane %v1390, %v1403
        %v1405 = vcombine.high %v1381, 0.0
        %v1406 = vcombine.high %v1388, 0.0
        %v1407 = vcombine.high %v1397, 0.0
        %v1408 = vcombine.high %v1404, 0.0
        %v1409 = vcombine.low %v443, %v720
        %v1410 = vcombine.high %v443, %v720
        %v1412 = vunpack.c.l.s4 1983009808
        %v1413 = vunpack.c.0.s8 %v1412
        %v1414 = vlaneseq
        %v1415 = vshrl.u32 %v1414, 7
        %v1416 = vsub.s32 %v1413, %v1415
        %v1417 = vrot.slane %v1409, %v1416
        %v1419 = vunpack.c.l.s4 1983009808
        %v1420 = vunpack.c.0.s8 %v1419
        %v1421 = vlaneseq
        %v1422 = vshrl.u32 %v1421, 7
        %v1423 = vsub.s32 %v1420, %v1422
        %v1424 = vrot.slane %v1410, %v1423
        %v1425 = vcombine.low %v672, %v768
        %v1426 = vcombine.high %v672, %v768
        %v1428 = vunpack.c.l.s4 1983009808
        %v1429 = vunpack.c.0.s8 %v1428
        %v1430 = vlaneseq
        %v1431 = vshrl.u32 %v1430, 7
        %v1432 = vsub.s32 %v1429, %v1431
        %v1433 = vrot.slane %v1425, %v1432
        %v1435 = vunpack.c.l.s4 1983009808
        %v1436 = vunpack.c.0.s8 %v1435
        %v1437 = vlaneseq
        %v1438 = vshrl.u32 %v1437, 7
        %v1439 = vsub.s32 %v1436, %v1438
        %v1440 = vrot.slane %v1426, %v1439
        %v1441 = vcombine.low %v1417, %v1433
        %v1442 = vcombine.high %v1417, %v1433
        %v1444 = vunpack.c.l.s4 1934713408
        %v1445 = vunpack.c.0.s8 %v1444
        %v1446 = vlaneseq
        %v1447 = vshrl.u32 %v1446, 7
        %v1448 = vsub.s32 %v1445, %v1447
        %v1449 = vrot.slane %v1441, %v1448
        %v1451 = vunpack.c.l.s4 1934713408
        %v1452 = vunpack.c.0.s8 %v1451
        %v1453 = vlaneseq
        %v1454 = vshrl.u32 %v1453, 7
        %v1455 = vsub.s32 %v1452, %v1454
        %v1456 = vrot.slane %v1442, %v1455
        %v1457 = vcombine.low %v1424, %v1440
        %v1458 = vcombine.high %v1424, %v1440
        %v1460 = vunpack.c.l.s4 1934713408
        %v1461 = vunpack.c.0.s8 %v1460
        %v1462 = vlaneseq
        %v1463 = vshrl.u32 %v1462, 7
        %v1464 = vsub.s32 %v1461, %v1463
        %v1465 = vrot.slane %v1457, %v1464
        %v1467 = vunpack.c.l.s4 1934713408
        %v1468 = vunpack.c.0.s8 %v1467
        %v1469 = vlaneseq
        %v1470 = vshrl.u32 %v1469, 7
        %v1471 = vsub.s32 %v1468, %v1470
        %v1472 = vrot.slane %v1458, %v1471
        %v1473 = vcombine.high %v1449, 0.0
        %v1474 = vcombine.high %v1456, 0.0
        %v1475 = vcombine.high %v1465, 0.0
        %v1476 = vcombine.high %v1472, 0.0
        %v1477 = vcombine.low %v448, %v722
        %v1478 = vcombine.high %v448, %v722
        %v1480 = vunpack.c.l.s4 1983009808
        %v1481 = vunpack.c.0.s8 %v1480
        %v1482 = vlaneseq
        %v1483 = vshrl.u32 %v1482, 7
        %v1484 = vsub.s32 %v1481, %v1483
        %v1485 = vrot.slane %v1477, %v1484
        %v1487 = vunpack.c.l.s4 1983009808
        %v1488 = vunpack.c.0.s8 %v1487
        %v1489 = vlaneseq
        %v1490 = vshrl.u32 %v1489, 7
        %v1491 = vsub.s32 %v1488, %v1490
        %v1492 = vrot.slane %v1478, %v1491
        %v1493 = vcombine.low %v674, %v770
        %v1494 = vcombine.high %v674, %v770
        %v1496 = vunpack.c.l.s4 1983009808
        %v1497 = vunpack.c.0.s8 %v1496
        %v1498 = vlaneseq
        %v1499 = vshrl.u32 %v1498, 7
        %v1500 = vsub.s32 %v1497, %v1499
        %v1501 = vrot.slane %v1493, %v1500
        %v1503 = vunpack.c.l.s4 1983009808
        %v1504 = vunpack.c.0.s8 %v1503
        %v1505 = vlaneseq
        %v1506 = vshrl.u32 %v1505, 7
        %v1507 = vsub.s32 %v1504, %v1506
        %v1508 = vrot.slane %v1494, %v1507
        %v1509 = vcombine.low %v1485, %v1501
        %v1510 = vcombine.high %v1485, %v1501
        %v1512 = vunpack.c.l.s4 1934713408
        %v1513 = vunpack.c.0.s8 %v1512
        %v1514 = vlaneseq
        %v1515 = vshrl.u32 %v1514, 7
        %v1516 = vsub.s32 %v1513, %v1515
        %v1517 = vrot.slane %v1509, %v1516
        %v1519 = vunpack.c.l.s4 1934713408
        %v1520 = vunpack.c.0.s8 %v1519
        %v1521 = vlaneseq
        %v1522 = vshrl.u32 %v1521, 7
        %v1523 = vsub.s32 %v1520, %v1522
        %v1524 = vrot.slane %v1510, %v1523
        %v1525 = vcombine.low %v1492, %v1508
        %v1526 = vcombine.high %v1492, %v1508
        %v1528 = vunpack.c.l.s4 1934713408
        %v1529 = vunpack.c.0.s8 %v1528
        %v1530 = vlaneseq
        %v1531 = vshrl.u32 %v1530, 7
        %v1532 = vsub.s32 %v1529, %v1531
        %v1533 = vrot.slane %v1525, %v1532
        %v1535 = vunpack.c.l.s4 1934713408
        %v1536 = vunpack.c.0.s8 %v1535
        %v1537 = vlaneseq
        %v1538 = vshrl.u32 %v1537, 7
        %v1539 = vsub.s32 %v1536, %v1538
        %v1540 = vrot.slane %v1526, %v1539
        %v1541 = vcombine.high %v1517, 0.0
        %v1542 = vcombine.high %v1524, 0.0
        %v1543 = vcombine.high %v1533, 0.0
        %v1544 = vcombine.high %v1540, 0.0
        %v1545 = vcombine.low %v453, %v724
        %v1546 = vcombine.high %v453, %v724
        %v1548 = vunpack.c.l.s4 1983009808
        %v1549 = vunpack.c.0.s8 %v1548
        %v1550 = vlaneseq
        %v1551 = vshrl.u32 %v1550, 7
        %v1552 = vsub.s32 %v1549, %v1551
        %v1553 = vrot.slane %v1545, %v1552
        %v1555 = vunpack.c.l.s4 1983009808
        %v1556 = vunpack.c.0.s8 %v1555
        %v1557 = vlaneseq
        %v1558 = vshrl.u32 %v1557, 7
        %v1559 = vsub.s32 %v1556, %v1558
        %v1560 = vrot.slane %v1546, %v1559
        %v1561 = vcombine.low %v676, %v772
        %v1562 = vcombine.high %v676, %v772
        %v1564 = vunpack.c.l.s4 1983009808
        %v1565 = vunpack.c.0.s8 %v1564
        %v1566 = vlaneseq
        %v1567 = vshrl.u32 %v1566, 7
        %v1568 = vsub.s32 %v1565, %v1567
        %v1569 = vrot.slane %v1561, %v1568
        %v1571 = vunpack.c.l.s4 1983009808
        %v1572 = vunpack.c.0.s8 %v1571
        %v1573 = vlaneseq
        %v1574 = vshrl.u32 %v1573, 7
        %v1575 = vsub.s32 %v1572, %v1574
        %v1576 = vrot.slane %v1562, %v1575
        %v1577 = vcombine.low %v1553, %v1569
        %v1578 = vcombine.high %v1553, %v1569
        %v1580 = vunpack.c.l.s4 1934713408
        %v1581 = vunpack.c.0.s8 %v1580
        %v1582 = vlaneseq
        %v1583 = vshrl.u32 %v1582, 7
        %v1584 = vsub.s32 %v1581, %v1583
        %v1585 = vrot.slane %v1577, %v1584
        %v1587 = vunpack.c.l.s4 1934713408
        %v1588 = vunpack.c.0.s8 %v1587
        %v1589 = vlaneseq
        %v1590 = vshrl.u32 %v1589, 7
        %v1591 = vsub.s32 %v1588, %v1590
        %v1592 = vrot.slane %v1578, %v1591
        %v1593 = vcombine.low %v1560, %v1576
        %v1594 = vcombine.high %v1560, %v1576
        %v1596 = vunpack.c.l.s4 1934713408
        %v1597 = vunpack.c.0.s8 %v1596
        %v1598 = vlaneseq
        %v1599 = vshrl.u32 %v1598, 7
        %v1600 = vsub.s32 %v1597, %v1599
        %v1601 = vrot.slane %v1593, %v1600
        %v1603 = vunpack.c.l.s4 1934713408
        %v1604 = vunpack.c.0.s8 %v1603
        %v1605 = vlaneseq
        %v1606 = vshrl.u32 %v1605, 7
        %v1607 = vsub.s32 %v1604, %v1606
        %v1608 = vrot.slane %v1594, %v1607
        %v1609 = vcombine.high %v1585, 0.0
        %v1610 = vcombine.high %v1592, 0.0
        %v1611 = vcombine.high %v1601, 0.0
        %v1612 = vcombine.high %v1608, 0.0
        %v1613 = vcombine.low %v458, %v726
        %v1614 = vcombine.high %v458, %v726
        %v1616 = vunpack.c.l.s4 1983009808
        %v1617 = vunpack.c.0.s8 %v1616
        %v1618 = vlaneseq
        %v1619 = vshrl.u32 %v1618, 7
        %v1620 = vsub.s32 %v1617, %v1619
        %v1621 = vrot.slane %v1613, %v1620
        %v1623 = vunpack.c.l.s4 1983009808
        %v1624 = vunpack.c.0.s8 %v1623
        %v1625 = vlaneseq
        %v1626 = vshrl.u32 %v1625, 7
        %v1627 = vsub.s32 %v1624, %v1626
        %v1628 = vrot.slane %v1614, %v1627
        %v1629 = vcombine.low %v678, %v774
        %v1630 = vcombine.high %v678, %v774
        %v1632 = vunpack.c.l.s4 1983009808
        %v1633 = vunpack.c.0.s8 %v1632
        %v1634 = vlaneseq
        %v1635 = vshrl.u32 %v1634, 7
        %v1636 = vsub.s32 %v1633, %v1635
        %v1637 = vrot.slane %v1629, %v1636
        %v1639 = vunpack.c.l.s4 1983009808
        %v1640 = vunpack.c.0.s8 %v1639
        %v1641 = vlaneseq
        %v1642 = vshrl.u32 %v1641, 7
        %v1643 = vsub.s32 %v1640, %v1642
        %v1644 = vrot.slane %v1630, %v1643
        %v1645 = vcombine.low %v1621, %v1637
        %v1646 = vcombine.high %v1621, %v1637
        %v1648 = vunpack.c.l.s4 1934713408
        %v1649 = vunpack.c.0.s8 %v1648
        %v1650 = vlaneseq
        %v1651 = vshrl.u32 %v1650, 7
        %v1652 = vsub.s32 %v1649, %v1651
        %v1653 = vrot.slane %v1645, %v1652
        %v1655 = vunpack.c.l.s4 1934713408
        %v1656 = vunpack.c.0.s8 %v1655
        %v1657 = vlaneseq
        %v1658 = vshrl.u32 %v1657, 7
        %v1659 = vsub.s32 %v1656, %v1658
        %v1660 = vrot.slane %v1646, %v1659
        %v1661 = vcombine.low %v1628, %v1644
        %v1662 = vcombine.high %v1628, %v1644
        %v1664 = vunpack.c.l.s4 1934713408
        %v1665 = vunpack.c.0.s8 %v1664
        %v1666 = vlaneseq
        %v1667 = vshrl.u32 %v1666, 7
        %v1668 = vsub.s32 %v1665, %v1667
        %v1669 = vrot.slane %v1661, %v1668
        %v1671 = vunpack.c.l.s4 1934713408
        %v1672 = vunpack.c.0.s8 %v1671
        %v1673 = vlaneseq
        %v1674 = vshrl.u32 %v1673, 7
        %v1675 = vsub.s32 %v1672, %v1674
        %v1676 = vrot.slane %v1662, %v1675
        %v1677 = vcombine.high %v1653, 0.0
        %v1678 = vcombine.high %v1660, 0.0
        %v1679 = vcombine.high %v1669, 0.0
        %v1680 = vcombine.high %v1676, 0.0
        %v1681 = vcombine.low %v463, %v728
        %v1682 = vcombine.high %v463, %v728
        %v1684 = vunpack.c.l.s4 1983009808
        %v1685 = vunpack.c.0.s8 %v1684
        %v1686 = vlaneseq
        %v1687 = vshrl.u32 %v1686, 7
        %v1688 = vsub.s32 %v1685, %v1687
        %v1689 = vrot.slane %v1681, %v1688
        %v1691 = vunpack.c.l.s4 1983009808
        %v1692 = vunpack.c.0.s8 %v1691
        %v1693 = vlaneseq
        %v1694 = vshrl.u32 %v1693, 7
        %v1695 = vsub.s32 %v1692, %v1694
        %v1696 = vrot.slane %v1682, %v1695
        %v1697 = vcombine.low %v680, %v776
        %v1698 = vcombine.high %v680, %v776
        %v1700 = vunpack.c.l.s4 1983009808
        %v1701 = vunpack.c.0.s8 %v1700
        %v1702 = vlaneseq
        %v1703 = vshrl.u32 %v1702, 7
        %v1704 = vsub.s32 %v1701, %v1703
        %v1705 = vrot.slane %v1697, %v1704
        %v1707 = vunpack.c.l.s4 1983009808
        %v1708 = vunpack.c.0.s8 %v1707
        %v1709 = vlaneseq
        %v1710 = vshrl.u32 %v1709, 7
        %v1711 = vsub.s32 %v1708, %v1710
        %v1712 = vrot.slane %v1698, %v1711
        %v1713 = vcombine.low %v1689, %v1705
        %v1714 = vcombine.high %v1689, %v1705
        %v1716 = vunpack.c.l.s4 1934713408
        %v1717 = vunpack.c.0.s8 %v1716
        %v1718 = vlaneseq
        %v1719 = vshrl.u32 %v1718, 7
        %v1720 = vsub.s32 %v1717, %v1719
        %v1721 = vrot.slane %v1713, %v1720
        %v1723 = vunpack.c.l.s4 1934713408
        %v1724 = vunpack.c.0.s8 %v1723
        %v1725 = vlaneseq
        %v1726 = vshrl.u32 %v1725, 7
        %v1727 = vsub.s32 %v1724, %v1726
        %v1728 = vrot.slane %v1714, %v1727
        %v1729 = vcombine.low %v1696, %v1712
        %v1730 = vcombine.high %v1696, %v1712
        %v1732 = vunpack.c.l.s4 1934713408
        %v1733 = vunpack.c.0.s8 %v1732
        %v1734 = vlaneseq
        %v1735 = vshrl.u32 %v1734, 7
        %v1736 = vsub.s32 %v1733, %v1735
        %v1737 = vrot.slane %v1729, %v1736
        %v1739 = vunpack.c.l.s4 1934713408
        %v1740 = vunpack.c.0.s8 %v1739
        %v1741 = vlaneseq
        %v1742 = vshrl.u32 %v1741, 7
        %v1743 = vsub.s32 %v1740, %v1742
        %v1744 = vrot.slane %v1730, %v1743
        %v1745 = vcombine.high %v1721, 0.0
        %v1746 = vcombine.high %v1728, 0.0
        %v1747 = vcombine.high %v1737, 0.0
        %v1748 = vcombine.high %v1744, 0.0
        %v1749 = vcombine.low %v468, %v730
        %v1750 = vcombine.high %v468, %v730
        %v1752 = vunpack.c.l.s4 1983009808
        %v1753 = vunpack.c.0.s8 %v1752
        %v1754 = vlaneseq
        %v1755 = vshrl.u32 %v1754, 7
        %v1756 = vsub.s32 %v1753, %v1755
        %v1757 = vrot.slane %v1749, %v1756
        %v1759 = vunpack.c.l.s4 1983009808
        %v1760 = vunpack.c.0.s8 %v1759
        %v1761 = vlaneseq
        %v1762 = vshrl.u32 %v1761, 7
        %v1763 = vsub.s32 %v1760, %v1762
        %v1764 = vrot.slane %v1750, %v1763
        %v1765 = vcombine.low %v682, %v778
        %v1766 = vcombine.high %v682, %v778
        %v1768 = vunpack.c.l.s4 1983009808
        %v1769 = vunpack.c.0.s8 %v1768
        %v1770 = vlaneseq
        %v1771 = vshrl.u32 %v1770, 7
        %v1772 = vsub.s32 %v1769, %v1771
        %v1773 = vrot.slane %v1765, %v1772
        %v1775 = vunpack.c.l.s4 1983009808
        %v1776 = vunpack.c.0.s8 %v1775
        %v1777 = vlaneseq
        %v1778 = vshrl.u32 %v1777, 7
        %v1779 = vsub.s32 %v1776, %v1778
        %v1780 = vrot.slane %v1766, %v1779
        %v1781 = vcombine.low %v1757, %v1773
        %v1782 = vcombine.high %v1757, %v1773
        %v1784 = vunpack.c.l.s4 1934713408
        %v1785 = vunpack.c.0.s8 %v1784
        %v1786 = vlaneseq
        %v1787 = vshrl.u32 %v1786, 7
        %v1788 = vsub.s32 %v1785, %v1787
        %v1789 = vrot.slane %v1781, %v1788
        %v1791 = vunpack.c.l.s4 1934713408
        %v1792 = vunpack.c.0.s8 %v1791
        %v1793 = vlaneseq
        %v1794 = vshrl.u32 %v1793, 7
        %v1795 = vsub.s32 %v1792, %v1794
        %v1796 = vrot.slane %v1782, %v1795
        %v1797 = vcombine.low %v1764, %v1780
        %v1798 = vcombine.high %v1764, %v1780
        %v1800 = vunpack.c.l.s4 1934713408
        %v1801 = vunpack.c.0.s8 %v1800
        %v1802 = vlaneseq
        %v1803 = vshrl.u32 %v1802, 7
        %v1804 = vsub.s32 %v1801, %v1803
        %v1805 = vrot.slane %v1797, %v1804
        %v1807 = vunpack.c.l.s4 1934713408
        %v1808 = vunpack.c.0.s8 %v1807
        %v1809 = vlaneseq
        %v1810 = vshrl.u32 %v1809, 7
        %v1811 = vsub.s32 %v1808, %v1810
        %v1812 = vrot.slane %v1798, %v1811
        %v1813 = vcombine.high %v1789, 0.0
        %v1814 = vcombine.high %v1796, 0.0
        %v1815 = vcombine.high %v1805, 0.0
        %v1816 = vcombine.high %v1812, 0.0
        %v1817 = vcombine.low %v473, %v732
        %v1818 = vcombine.high %v473, %v732
        %v1820 = vunpack.c.l.s4 1983009808
        %v1821 = vunpack.c.0.s8 %v1820
        %v1822 = vlaneseq
        %v1823 = vshrl.u32 %v1822, 7
        %v1824 = vsub.s32 %v1821, %v1823
        %v1825 = vrot.slane %v1817, %v1824
        %v1827 = vunpack.c.l.s4 1983009808
        %v1828 = vunpack.c.0.s8 %v1827
        %v1829 = vlaneseq
        %v1830 = vshrl.u32 %v1829, 7
        %v1831 = vsub.s32 %v1828, %v1830
        %v1832 = vrot.slane %v1818, %v1831
        %v1833 = vcombine.low %v684, %v780
        %v1834 = vcombine.high %v684, %v780
        %v1836 = vunpack.c.l.s4 1983009808
        %v1837 = vunpack.c.0.s8 %v1836
        %v1838 = vlaneseq
        %v1839 = vshrl.u32 %v1838, 7
        %v1840 = vsub.s32 %v1837, %v1839
        %v1841 = vrot.slane %v1833, %v1840
        %v1843 = vunpack.c.l.s4 1983009808
        %v1844 = vunpack.c.0.s8 %v1843
        %v1845 = vlaneseq
        %v1846 = vshrl.u32 %v1845, 7
        %v1847 = vsub.s32 %v1844, %v1846
        %v1848 = vrot.slane %v1834, %v1847
        %v1849 = vcombine.low %v1825, %v1841
        %v1850 = vcombine.high %v1825, %v1841
        %v1852 = vunpack.c.l.s4 1934713408
        %v1853 = vunpack.c.0.s8 %v1852
        %v1854 = vlaneseq
        %v1855 = vshrl.u32 %v1854, 7
        %v1856 = vsub.s32 %v1853, %v1855
        %v1857 = vrot.slane %v1849, %v1856
        %v1859 = vunpack.c.l.s4 1934713408
        %v1860 = vunpack.c.0.s8 %v1859
        %v1861 = vlaneseq
        %v1862 = vshrl.u32 %v1861, 7
        %v1863 = vsub.s32 %v1860, %v1862
        %v1864 = vrot.slane %v1850, %v1863
        %v1865 = vcombine.low %v1832, %v1848
        %v1866 = vcombine.high %v1832, %v1848
        %v1868 = vunpack.c.l.s4 1934713408
        %v1869 = vunpack.c.0.s8 %v1868
        %v1870 = vlaneseq
        %v1871 = vshrl.u32 %v1870, 7
        %v1872 = vsub.s32 %v1869, %v1871
        %v1873 = vrot.slane %v1865, %v1872
        %v1875 = vunpack.c.l.s4 1934713408
        %v1876 = vunpack.c.0.s8 %v1875
        %v1877 = vlaneseq
        %v1878 = vshrl.u32 %v1877, 7
        %v1879 = vsub.s32 %v1876, %v1878
        %v1880 = vrot.slane %v1866, %v1879
        %v1881 = vcombine.high %v1857, 0.0
        %v1882 = vcombine.high %v1864, 0.0
        %v1883 = vcombine.high %v1873, 0.0
        %v1884 = vcombine.high %v1880, 0.0
        %v1885 = vcombine.low %v837, %v844
        %v1887 = vunpack.c.l.s4 1983009808
        %v1888 = vunpack.c.0.s8 %v1887
        %v1889 = vlaneseq
        %v1890 = vshrl.u32 %v1889, 7
        %v1891 = vsub.s32 %v1888, %v1890
        %v1892 = vrot.slane %v1885, %v1891
        %v1893 = vcombine.low %v861, %v862
        %v1895 = vunpack.c.l.s4 1983009808
        %v1896 = vunpack.c.0.s8 %v1895
        %v1897 = vlaneseq
        %v1898 = vshrl.u32 %v1897, 7
        %v1899 = vsub.s32 %v1896, %v1898
        %v1900 = vrot.slane %v1893, %v1899
        %v1901 = vcombine.low %v853, %v860
        %v1903 = vunpack.c.l.s4 1983009808
        %v1904 = vunpack.c.0.s8 %v1903
        %v1905 = vlaneseq
        %v1906 = vshrl.u32 %v1905, 7
        %v1907 = vsub.s32 %v1904, %v1906
        %v1908 = vrot.slane %v1901, %v1907
        %v1909 = vcombine.low %v863, %v864
        %v1911 = vunpack.c.l.s4 1983009808
        %v1912 = vunpack.c.0.s8 %v1911
        %v1913 = vlaneseq
        %v1914 = vshrl.u32 %v1913, 7
        %v1915 = vsub.s32 %v1912, %v1914
        %v1916 = vrot.slane %v1909, %v1915
        %v1917 = vcombine.low %v1892, %v1900
        %v1918 = vcombine.high %v1892, %v1900
        %v1920 = vunpack.c.l.s4 1934713408
        %v1921 = vunpack.c.0.s8 %v1920
        %v1922 = vlaneseq
        %v1923 = vshrl.u32 %v1922, 7
        %v1924 = vsub.s32 %v1921, %v1923
        %v1925 = vrot.slane %v1917, %v1924
        %v1927 = vunpack.c.l.s4 1934713408
        %v1928 = vunpack.c.0.s8 %v1927
        %v1929 = vlaneseq
        %v1930 = vshrl.u32 %v1929, 7
        %v1931 = vsub.s32 %v1928, %v1930
        %v1932 = vrot.slane %v1918, %v1931
        %v1933 = vcombine.low %v1908, %v1916
        %v1934 = vcombine.high %v1908, %v1916
        %v1936 = vunpack.c.l.s4 1934713408
        %v1937 = vunpack.c.0.s8 %v1936
        %v1938 = vlaneseq
        %v1939 = vshrl.u32 %v1938, 7
        %v1940 = vsub.s32 %v1937, %v1939
        %v1941 = vrot.slane %v1933, %v1940
        %v1943 = vunpack.c.l.s4 1934713408
        %v1944 = vunpack.c.0.s8 %v1943
        %v1945 = vlaneseq
        %v1946 = vshrl.u32 %v1945, 7
        %v1947 = vsub.s32 %v1944, %v1946
        %v1948 = vrot.slane %v1934, %v1947
        %v1949 = vcombine.low %v1925, %v1941
        %v1950 = vcombine.high %v1925, %v1941
        %v1951 = vcombine.low %v1932, %v1948
        %v1952 = vcombine.high %v1932, %v1948
        %v1953 = vcombine.low %v905, %v912
        %v1955 = vunpack.c.l.s4 1983009808
        %v1956 = vunpack.c.0.s8 %v1955
        %v1957 = vlaneseq
        %v1958 = vshrl.u32 %v1957, 7
        %v1959 = vsub.s32 %v1956, %v1958
        %v1960 = vrot.slane %v1953, %v1959
        %v1961 = vcombine.low %v929, %v930
        %v1963 = vunpack.c.l.s4 1983009808
        %v1964 = vunpack.c.0.s8 %v1963
        %v1965 = vlaneseq
        %v1966 = vshrl.u32 %v1965, 7
        %v1967 = vsub.s32 %v1964, %v1966
        %v1968 = vrot.slane %v1961, %v1967
        %v1969 = vcombine.low %v921, %v928
        %v1971 = vunpack.c.l.s4 1983009808
        %v1972 = vunpack.c.0.s8 %v1971
        %v1973 = vlaneseq
        %v1974 = vshrl.u32 %v1973, 7
        %v1975 = vsub.s32 %v1972, %v1974
        %v1976 = vrot.slane %v1969, %v1975
        %v1977 = vcombine.low %v931, %v932
        %v1979 = vunpack.c.l.s4 1983009808
        %v1980 = vunpack.c.0.s8 %v1979
        %v1981 = vlaneseq
        %v1982 = vshrl.u32 %v1981, 7
        %v1983 = vsub.s32 %v1980, %v1982
        %v1984 = vrot.slane %v1977, %v1983
        %v1985 = vcombine.low %v1960, %v1968
        %v1986 = vcombine.high %v1960, %v1968
        %v1988 = vunpack.c.l.s4 1934713408
        %v1989 = vunpack.c.0.s8 %v1988
        %v1990 = vlaneseq
        %v1991 = vshrl.u32 %v1990, 7
        %v1992 = vsub.s32 %v1989, %v1991
        %v1993 = vrot.slane %v1985, %v1992
        %v1995 = vunpack.c.l.s4 1934713408
        %v1996 = vunpack.c.0.s8 %v1995
        %v1997 = vlaneseq
        %v1998 = vshrl.u32 %v1997, 7
        %v1999 = vsub.s32 %v1996, %v1998
        %v2000 = vrot.slane %v1986, %v1999
        %v2001 = vcombine.low %v1976, %v1984
        %v2002 = vcombine.high %v1976, %v1984
        %v2004 = vunpack.c.l.s4 1934713408
        %v2005 = vunpack.c.0.s8 %v2004
        %v2006 = vlaneseq
        %v2007 = vshrl.u32 %v2006, 7
        %v2008 = vsub.s32 %v2005, %v2007
        %v2009 = vrot.slane %v2001, %v2008
        %v2011 = vunpack.c.l.s4 1934713408
        %v2012 = vunpack.c.0.s8 %v2011
        %v2013 = vlaneseq
        %v2014 = vshrl.u32 %v2013, 7
        %v2015 = vsub.s32 %v2012, %v2014
        %v2016 = vrot.slane %v2002, %v2015
        %v2017 = vcombine.low %v1993, %v2009
        %v2018 = vcombine.high %v1993, %v2009
        %v2019 = vcombine.low %v2000, %v2016
        %v2020 = vcombine.high %v2000, %v2016
        %v2021 = vcombine.low %v973, %v980
        %v2023 = vunpack.c.l.s4 1983009808
        %v2024 = vunpack.c.0.s8 %v2023
        %v2025 = vlaneseq
        %v2026 = vshrl.u32 %v2025, 7
        %v2027 = vsub.s32 %v2024, %v2026
        %v2028 = vrot.slane %v2021, %v2027
        %v2029 = vcombine.low %v997, %v998
        %v2031 = vunpack.c.l.s4 1983009808
        %v2032 = vunpack.c.0.s8 %v2031
        %v2033 = vlaneseq
        %v2034 = vshrl.u32 %v2033, 7
        %v2035 = vsub.s32 %v2032, %v2034
        %v2036 = vrot.slane %v2029, %v2035
        %v2037 = vcombine.low %v989, %v996
        %v2039 = vunpack.c.l.s4 1983009808
        %v2040 = vunpack.c.0.s8 %v2039
        %v2041 = vlaneseq
        %v2042 = vshrl.u32 %v2041, 7
        %v2043 = vsub.s32 %v2040, %v2042
        %v2044 = vrot.slane %v2037, %v2043
        %v2045 = vcombine.low %v999, %v1000
        %v2047 = vunpack.c.l.s4 1983009808
        %v2048 = vunpack.c.0.s8 %v2047
        %v2049 = vlaneseq
        %v2050 = vshrl.u32 %v2049, 7
        %v2051 = vsub.s32 %v2048, %v2050
        %v2052 = vrot.slane %v2045, %v2051
        %v2053 = vcombine.low %v2028, %v2036
        %v2054 = vcombine.high %v2028, %v2036
        %v2056 = vunpack.c.l.s4 1934713408
        %v2057 = vunpack.c.0.s8 %v2056
        %v2058 = vlaneseq
        %v2059 = vshrl.u32 %v2058, 7
        %v2060 = vsub.s32 %v2057, %v2059
        %v2061 = vrot.slane %v2053, %v2060
        %v2063 = vunpack.c.l.s4 1934713408
        %v2064 = vunpack.c.0.s8 %v2063
        %v2065 = vlaneseq
        %v2066 = vshrl.u32 %v2065, 7
        %v2067 = vsub.s32 %v2064, %v2066
        %v2068 = vrot.slane %v2054, %v2067
        %v2069 = vcombine.low %v2044, %v2052
        %v2070 = vcombine.high %v2044, %v2052
        %v2072 = vunpack.c.l.s4 1934713408
        %v2073 = vunpack.c.0.s8 %v2072
        %v2074 = vlaneseq
        %v2075 = vshrl.u32 %v2074, 7
        %v2076 = vsub.s32 %v2073, %v2075
        %v2077 = vrot.slane %v2069, %v2076
        %v2079 = vunpack.c.l.s4 1934713408
        %v2080 = vunpack.c.0.s8 %v2079
        %v2081 = vlaneseq
        %v2082 = vshrl.u32 %v2081, 7
        %v2083 = vsub.s32 %v2080, %v2082
        %v2084 = vrot.slane %v2070, %v2083
        %v2085 = vcombine.low %v2061, %v2077
        %v2086 = vcombine.high %v2061, %v2077
        %v2087 = vcombine.low %v2068, %v2084
        %v2088 = vcombine.high %v2068, %v2084
        %v2089 = vcombine.low %v1041, %v1048
        %v2091 = vunpack.c.l.s4 1983009808
        %v2092 = vunpack.c.0.s8 %v2091
        %v2093 = vlaneseq
        %v2094 = vshrl.u32 %v2093, 7
        %v2095 = vsub.s32 %v2092, %v2094
        %v2096 = vrot.slane %v2089, %v2095
        %v2097 = vcombine.low %v1065, %v1066
        %v2099 = vunpack.c.l.s4 1983009808
        %v2100 = vunpack.c.0.s8 %v2099
        %v2101 = vlaneseq
        %v2102 = vshrl.u32 %v2101, 7
        %v2103 = vsub.s32 %v2100, %v2102
        %v2104 = vrot.slane %v2097, %v2103
        %v2105 = vcombine.low %v1057, %v1064
        %v2107 = vunpack.c.l.s4 1983009808
        %v2108 = vunpack.c.0.s8 %v2107
        %v2109 = vlaneseq
        %v2110 = vshrl.u32 %v2109, 7
        %v2111 = vsub.s32 %v2108, %v2110
        %v2112 = vrot.slane %v2105, %v2111
        %v2113 = vcombine.low %v1067, %v1068
        %v2115 = vunpack.c.l.s4 1983009808
        %v2116 = vunpack.c.0.s8 %v2115
        %v2117 = vlaneseq
        %v2118 = vshrl.u32 %v2117, 7
        %v2119 = vsub.s32 %v2116, %v2118
        %v2120 = vrot.slane %v2113, %v2119
        %v2121 = vcombine.low %v2096, %v2104
        %v2122 = vcombine.high %v2096, %v2104
        %v2124 = vunpack.c.l.s4 1934713408
        %v2125 = vunpack.c.0.s8 %v2124
        %v2126 = vlaneseq
        %v2127 = vshrl.u32 %v2126, 7
        %v2128 = vsub.s32 %v2125, %v2127
        %v2129 = vrot.slane %v2121, %v2128
        %v2131 = vunpack.c.l.s4 1934713408
        %v2132 = vunpack.c.0.s8 %v2131
        %v2133 = vlaneseq
        %v2134 = vshrl.u32 %v2133, 7
        %v2135 = vsub.s32 %v2132, %v2134
        %v2136 = vrot.slane %v2122, %v2135
        %v2137 = vcombine.low %v2112, %v2120
        %v2138 = vcombine.high %v2112, %v2120
        %v2140 = vunpack.c.l.s4 1934713408
        %v2141 = vunpack.c.0.s8 %v2140
        %v2142 = vlaneseq
        %v2143 = vshrl.u32 %v2142, 7
        %v2144 = vsub.s32 %v2141, %v2143
        %v2145 = vrot.slane %v2137, %v2144
        %v2147 = vunpack.c.l.s4 1934713408
        %v2148 = vunpack.c.0.s8 %v2147
        %v2149 = vlaneseq
        %v2150 = vshrl.u32 %v2149, 7
        %v2151 = vsub.s32 %v2148, %v2150
        %v2152 = vrot.slane %v2138, %v2151
        %v2153 = vcombine.low %v2129, %v2145
        %v2154 = vcombine.high %v2129, %v2145
        %v2155 = vcombine.low %v2136, %v2152
        %v2156 = vcombine.high %v2136, %v2152
        %v2157 = vcombine.low %v1109, %v1116
        %v2159 = vunpack.c.l.s4 1983009808
        %v2160 = vunpack.c.0.s8 %v2159
        %v2161 = vlaneseq
        %v2162 = vshrl.u32 %v2161, 7
        %v2163 = vsub.s32 %v2160, %v2162
        %v2164 = vrot.slane %v2157, %v2163
        %v2165 = vcombine.low %v1133, %v1134
        %v2167 = vunpack.c.l.s4 1983009808
        %v2168 = vunpack.c.0.s8 %v2167
        %v2169 = vlaneseq
        %v2170 = vshrl.u32 %v2169, 7
        %v2171 = vsub.s32 %v2168, %v2170
        %v2172 = vrot.slane %v2165, %v2171
        %v2173 = vcombine.low %v1125, %v1132
        %v2175 = vunpack.c.l.s4 1983009808
        %v2176 = vunpack.c.0.s8 %v2175
        %v2177 = vlaneseq
        %v2178 = vshrl.u32 %v2177, 7
        %v2179 = vsub.s32 %v2176, %v2178
        %v2180 = vrot.slane %v2173, %v2179
        %v2181 = vcombine.low %v1135, %v1136
        %v2183 = vunpack.c.l.s4 1983009808
        %v2184 = vunpack.c.0.s8 %v2183
        %v2185 = vlaneseq
        %v2186 = vshrl.u32 %v2185, 7
        %v2187 = vsub.s32 %v2184, %v2186
        %v2188 = vrot.slane %v2181, %v2187
        %v2189 = vcombine.low %v2164, %v2172
        %v2190 = vcombine.high %v2164, %v2172
        %v2192 = vunpack.c.l.s4 1934713408
        %v2193 = vunpack.c.0.s8 %v2192
        %v2194 = vlaneseq
        %v2195 = vshrl.u32 %v2194, 7
        %v2196 = vsub.s32 %v2193, %v2195
        %v2197 = vrot.slane %v2189, %v2196
        %v2199 = vunpack.c.l.s4 1934713408
        %v2200 = vunpack.c.0.s8 %v2199
        %v2201 = vlaneseq
        %v2202 = vshrl.u32 %v2201, 7
        %v2203 = vsub.s32 %v2200, %v2202
        %v2204 = vrot.slane %v2190, %v2203
        %v2205 = vcombine.low %v2180, %v2188
        %v2206 = vcombine.high %v2180, %v2188
        %v2208 = vunpack.c.l.s4 1934713408
        %v2209 = vunpack.c.0.s8 %v2208
        %v2210 = vlaneseq
        %v2211 = vshrl.u32 %v2210, 7
        %v2212 = vsub.s32 %v2209, %v2211
        %v2213 = vrot.slane %v2205, %v2212
        %v2215 = vunpack.c.l.s4 1934713408
        %v2216 = vunpack.c.0.s8 %v2215
        %v2217 = vlaneseq
        %v2218 = vshrl.u32 %v2217, 7
        %v2219 = vsub.s32 %v2216, %v2218
        %v2220 = vrot.slane %v2206, %v2219
        %v2221 = vcombine.low %v2197, %v2213
        %v2222 = vcombine.high %v2197, %v2213
        %v2223 = vcombine.low %v2204, %v2220
        %v2224 = vcombine.high %v2204, %v2220
        %v2225 = vcombine.low %v1177, %v1184
        %v2227 = vunpack.c.l.s4 1983009808
        %v2228 = vunpack.c.0.s8 %v2227
        %v2229 = vlaneseq
        %v2230 = vshrl.u32 %v2229, 7
        %v2231 = vsub.s32 %v2228, %v2230
        %v2232 = vrot.slane %v2225, %v2231
        %v2233 = vcombine.low %v1201, %v1202
        %v2235 = vunpack.c.l.s4 1983009808
        %v2236 = vunpack.c.0.s8 %v2235
        %v2237 = vlaneseq
        %v2238 = vshrl.u32 %v2237, 7
        %v2239 = vsub.s32 %v2236, %v2238
        %v2240 = vrot.slane %v2233, %v2239
        %v2241 = vcombine.low %v1193, %v1200
        %v2243 = vunpack.c.l.s4 1983009808
        %v2244 = vunpack.c.0.s8 %v2243
        %v2245 = vlaneseq
        %v2246 = vshrl.u32 %v2245, 7
        %v2247 = vsub.s32 %v2244, %v2246
        %v2248 = vrot.slane %v2241, %v2247
        %v2249 = vcombine.low %v1203, %v1204
        %v2251 = vunpack.c.l.s4 1983009808
        %v2252 = vunpack.c.0.s8 %v2251
        %v2253 = vlaneseq
        %v2254 = vshrl.u32 %v2253, 7
        %v2255 = vsub.s32 %v2252, %v2254
        %v2256 = vrot.slane %v2249, %v2255
        %v2257 = vcombine.low %v2232, %v2240
        %v2258 = vcombine.high %v2232, %v2240
        %v2260 = vunpack.c.l.s4 1934713408
        %v2261 = vunpack.c.0.s8 %v2260
        %v2262 = vlaneseq
        %v2263 = vshrl.u32 %v2262, 7
        %v2264 = vsub.s32 %v2261, %v2263
        %v2265 = vrot.slane %v2257, %v2264
        %v2267 = vunpack.c.l.s4 1934713408
        %v2268 = vunpack.c.0.s8 %v2267
        %v2269 = vlaneseq
        %v2270 = vshrl.u32 %v2269, 7
        %v2271 = vsub.s32 %v2268, %v2270
        %v2272 = vrot.slane %v2258, %v2271
        %v2273 = vcombine.low %v2248, %v2256
        %v2274 = vcombine.high %v2248, %v2256
        %v2276 = vunpack.c.l.s4 1934713408
        %v2277 = vunpack.c.0.s8 %v2276
        %v2278 = vlaneseq
        %v2279 = vshrl.u32 %v2278, 7
        %v2280 = vsub.s32 %v2277, %v2279
        %v2281 = vrot.slane %v2273, %v2280
        %v2283 = vunpack.c.l.s4 1934713408
        %v2284 = vunpack.c.0.s8 %v2283
        %v2285 = vlaneseq
        %v2286 = vshrl.u32 %v2285, 7
        %v2287 = vsub.s32 %v2284, %v2286
        %v2288 = vrot.slane %v2274, %v2287
        %v2289 = vcombine.low %v2265, %v2281
        %v2290 = vcombine.high %v2265, %v2281
        %v2291 = vcombine.low %v2272, %v2288
        %v2292 = vcombine.high %v2272, %v2288
        %v2293 = vcombine.low %v1245, %v1252
        %v2295 = vunpack.c.l.s4 1983009808
        %v2296 = vunpack.c.0.s8 %v2295
        %v2297 = vlaneseq
        %v2298 = vshrl.u32 %v2297, 7
        %v2299 = vsub.s32 %v2296, %v2298
        %v2300 = vrot.slane %v2293, %v2299
        %v2301 = vcombine.low %v1269, %v1270
        %v2303 = vunpack.c.l.s4 1983009808
        %v2304 = vunpack.c.0.s8 %v2303
        %v2305 = vlaneseq
        %v2306 = vshrl.u32 %v2305, 7
        %v2307 = vsub.s32 %v2304, %v2306
        %v2308 = vrot.slane %v2301, %v2307
        %v2309 = vcombine.low %v1261, %v1268
        %v2311 = vunpack.c.l.s4 1983009808
        %v2312 = vunpack.c.0.s8 %v2311
        %v2313 = vlaneseq
        %v2314 = vshrl.u32 %v2313, 7
        %v2315 = vsub.s32 %v2312, %v2314
        %v2316 = vrot.slane %v2309, %v2315
        %v2317 = vcombine.low %v1271, %v1272
        %v2319 = vunpack.c.l.s4 1983009808
        %v2320 = vunpack.c.0.s8 %v2319
        %v2321 = vlaneseq
        %v2322 = vshrl.u32 %v2321, 7
        %v2323 = vsub.s32 %v2320, %v2322
        %v2324 = vrot.slane %v2317, %v2323
        %v2325 = vcombine.low %v2300, %v2308
        %v2326 = vcombine.high %v2300, %v2308
        %v2328 = vunpack.c.l.s4 1934713408
        %v2329 = vunpack.c.0.s8 %v2328
        %v2330 = vlaneseq
        %v2331 = vshrl.u32 %v2330, 7
        %v2332 = vsub.s32 %v2329, %v2331
        %v2333 = vrot.slane %v2325, %v2332
        %v2335 = vunpack.c.l.s4 1934713408
        %v2336 = vunpack.c.0.s8 %v2335
        %v2337 = vlaneseq
        %v2338 = vshrl.u32 %v2337, 7
        %v2339 = vsub.s32 %v2336, %v2338
        %v2340 = vrot.slane %v2326, %v2339
        %v2341 = vcombine.low %v2316, %v2324
        %v2342 = vcombine.high %v2316, %v2324
        %v2344 = vunpack.c.l.s4 1934713408
        %v2345 = vunpack.c.0.s8 %v2344
        %v2346 = vlaneseq
        %v2347 = vshrl.u32 %v2346, 7
        %v2348 = vsub.s32 %v2345, %v2347
        %v2349 = vrot.slane %v2341, %v2348
        %v2351 = vunpack.c.l.s4 1934713408
        %v2352 = vunpack.c.0.s8 %v2351
        %v2353 = vlaneseq
        %v2354 = vshrl.u32 %v2353, 7
        %v2355 = vsub.s32 %v2352, %v2354
        %v2356 = vrot.slane %v2342, %v2355
        %v2357 = vcombine.low %v2333, %v2349
        %v2358 = vcombine.high %v2333, %v2349
        %v2359 = vcombine.low %v2340, %v2356
        %v2360 = vcombine.high %v2340, %v2356
        %v2361 = vcombine.low %v1313, %v1320
        %v2363 = vunpack.c.l.s4 1983009808
        %v2364 = vunpack.c.0.s8 %v2363
        %v2365 = vlaneseq
        %v2366 = vshrl.u32 %v2365, 7
        %v2367 = vsub.s32 %v2364, %v2366
        %v2368 = vrot.slane %v2361, %v2367
        %v2369 = vcombine.low %v1337, %v1338
        %v2371 = vunpack.c.l.s4 1983009808
        %v2372 = vunpack.c.0.s8 %v2371
        %v2373 = vlaneseq
        %v2374 = vshrl.u32 %v2373, 7
        %v2375 = vsub.s32 %v2372, %v2374
        %v2376 = vrot.slane %v2369, %v2375
        %v2377 = vcombine.low %v1329, %v1336
        %v2379 = vunpack.c.l.s4 1983009808
        %v2380 = vunpack.c.0.s8 %v2379
        %v2381 = vlaneseq
        %v2382 = vshrl.u32 %v2381, 7
        %v2383 = vsub.s32 %v2380, %v2382
        %v2384 = vrot.slane %v2377, %v2383
        %v2385 = vcombine.low %v1339, %v1340
        %v2387 = vunpack.c.l.s4 1983009808
        %v2388 = vunpack.c.0.s8 %v2387
        %v2389 = vlaneseq
        %v2390 = vshrl.u32 %v2389, 7
        %v2391 = vsub.s32 %v2388, %v2390
        %v2392 = vrot.slane %v2385, %v2391
        %v2393 = vcombine.low %v2368, %v2376
        %v2394 = vcombine.high %v2368, %v2376
        %v2396 = vunpack.c.l.s4 1934713408
        %v2397 = vunpack.c.0.s8 %v2396
        %v2398 = vlaneseq
        %v2399 = vshrl.u32 %v2398, 7
        %v2400 = vsub.s32 %v2397, %v2399
        %v2401 = vrot.slane %v2393, %v2400
        %v2403 = vunpack.c.l.s4 1934713408
        %v2404 = vunpack.c.0.s8 %v2403
        %v2405 = vlaneseq
        %v2406 = vshrl.u32 %v2405, 7
        %v2407 = vsub.s32 %v2404, %v2406
        %v2408 = vrot.slane %v2394, %v2407
        %v2409 = vcombine.low %v2384, %v2392
        %v2410 = vcombine.high %v2384, %v2392
        %v2412 = vunpack.c.l.s4 1934713408
        %v2413 = vunpack.c.0.s8 %v2412
        %v2414 = vlaneseq
        %v2415 = vshrl.u32 %v2414, 7
        %v2416 = vsub.s32 %v2413, %v2415
        %v2417 = vrot.slane %v2409, %v2416
        %v2419 = vunpack.c.l.s4 1934713408
        %v2420 = vunpack.c.0.s8 %v2419
        %v2421 = vlaneseq
        %v2422 = vshrl.u32 %v2421, 7
        %v2423 = vsub.s32 %v2420, %v2422
        %v2424 = vrot.slane %v2410, %v2423
        %v2425 = vcombine.low %v2401, %v2417
        %v2426 = vcombine.high %v2401, %v2417
        %v2427 = vcombine.low %v2408, %v2424
        %v2428 = vcombine.high %v2408, %v2424
        %v2429 = vcombine.low %v1381, %v1388
        %v2431 = vunpack.c.l.s4 1983009808
        %v2432 = vunpack.c.0.s8 %v2431
        %v2433 = vlaneseq
        %v2434 = vshrl.u32 %v2433, 7
        %v2435 = vsub.s32 %v2432, %v2434
        %v2436 = vrot.slane %v2429, %v2435
        %v2437 = vcombine.low %v1405, %v1406
        %v2439 = vunpack.c.l.s4 1983009808
        %v2440 = vunpack.c.0.s8 %v2439
        %v2441 = vlaneseq
        %v2442 = vshrl.u32 %v2441, 7
        %v2443 = vsub.s32 %v2440, %v2442
        %v2444 = vrot.slane %v2437, %v2443
        %v2445 = vcombine.low %v1397, %v1404
        %v2447 = vunpack.c.l.s4 1983009808
        %v2448 = vunpack.c.0.s8 %v2447
        %v2449 = vlaneseq
        %v2450 = vshrl.u32 %v2449, 7
        %v2451 = vsub.s32 %v2448, %v2450
        %v2452 = vrot.slane %v2445, %v2451
        %v2453 = vcombine.low %v1407, %v1408
        %v2455 = vunpack.c.l.s4 1983009808
        %v2456 = vunpack.c.0.s8 %v2455
        %v2457 = vlaneseq
        %v2458 = vshrl.u32 %v2457, 7
        %v2459 = vsub.s32 %v2456, %v2458
        %v2460 = vrot.slane %v2453, %v2459
        %v2461 = vcombine.low %v2436, %v2444
        %v2462 = vcombine.high %v2436, %v2444
        %v2464 = vunpack.c.l.s4 1934713408
        %v2465 = vunpack.c.0.s8 %v2464
        %v2466 = vlaneseq
        %v2467 = vshrl.u32 %v2466, 7
        %v2468 = vsub.s32 %v2465, %v2467
        %v2469 = vrot.slane %v2461, %v2468
        %v2471 = vunpack.c.l.s4 1934713408
        %v2472 = vunpack.c.0.s8 %v2471
        %v2473 = vlaneseq
        %v2474 = vshrl.u32 %v2473, 7
        %v2475 = vsub.s32 %v2472, %v2474
        %v2476 = vrot.slane %v2462, %v2475
        %v2477 = vcombine.low %v2452, %v2460
        %v2478 = vcombine.high %v2452, %v2460
        %v2480 = vunpack.c.l.s4 1934713408
        %v2481 = vunpack.c.0.s8 %v2480
        %v2482 = vlaneseq
        %v2483 = vshrl.u32 %v2482, 7
        %v2484 = vsub.s32 %v2481, %v2483
        %v2485 = vrot.slane %v2477, %v2484
        %v2487 = vunpack.c.l.s4 1934713408
        %v2488 = vunpack.c.0.s8 %v2487
        %v2489 = vlaneseq
        %v2490 = vshrl.u32 %v2489, 7
        %v2491 = vsub.s32 %v2488, %v2490
        %v2492 = vrot.slane %v2478, %v2491
        %v2493 = vcombine.low %v2469, %v2485
        %v2494 = vcombine.high %v2469, %v2485
        %v2495 = vcombine.low %v2476, %v2492
        %v2496 = vcombine.high %v2476, %v2492
        %v2497 = vcombine.low %v1449, %v1456
        %v2499 = vunpack.c.l.s4 1983009808
        %v2500 = vunpack.c.0.s8 %v2499
        %v2501 = vlaneseq
        %v2502 = vshrl.u32 %v2501, 7
        %v2503 = vsub.s32 %v2500, %v2502
        %v2504 = vrot.slane %v2497, %v2503
        %v2505 = vcombine.low %v1473, %v1474
        %v2507 = vunpack.c.l.s4 1983009808
        %v2508 = vunpack.c.0.s8 %v2507
        %v2509 = vlaneseq
        %v2510 = vshrl.u32 %v2509, 7
        %v2511 = vsub.s32 %v2508, %v2510
        %v2512 = vrot.slane %v2505, %v2511
        %v2513 = vcombine.low %v1465, %v1472
        %v2515 = vunpack.c.l.s4 1983009808
        %v2516 = vunpack.c.0.s8 %v2515
        %v2517 = vlaneseq
        %v2518 = vshrl.u32 %v2517, 7
        %v2519 = vsub.s32 %v2516, %v2518
        %v2520 = vrot.slane %v2513, %v2519
        %v2521 = vcombine.low %v1475, %v1476
        %v2523 = vunpack.c.l.s4 1983009808
        %v2524 = vunpack.c.0.s8 %v2523
        %v2525 = vlaneseq
        %v2526 = vshrl.u32 %v2525, 7
        %v2527 = vsub.s32 %v2524, %v2526
        %v2528 = vrot.slane %v2521, %v2527
        %v2529 = vcombine.low %v2504, %v2512
        %v2530 = vcombine.high %v2504, %v2512
        %v2532 = vunpack.c.l.s4 1934713408
        %v2533 = vunpack.c.0.s8 %v2532
        %v2534 = vlaneseq
        %v2535 = vshrl.u32 %v2534, 7
        %v2536 = vsub.s32 %v2533, %v2535
        %v2537 = vrot.slane %v2529, %v2536
        %v2539 = vunpack.c.l.s4 1934713408
        %v2540 = vunpack.c.0.s8 %v2539
        %v2541 = vlaneseq
        %v2542 = vshrl.u32 %v2541, 7
        %v2543 = vsub.s32 %v2540, %v2542
        %v2544 = vrot.slane %v2530, %v2543
        %v2545 = vcombine.low %v2520, %v2528
        %v2546 = vcombine.high %v2520, %v2528
        %v2548 = vunpack.c.l.s4 1934713408
        %v2549 = vunpack.c.0.s8 %v2548
        %v2550 = vlaneseq
        %v2551 = vshrl.u32 %v2550, 7
        %v2552 = vsub.s32 %v2549, %v2551
        %v2553 = vrot.slane %v2545, %v2552
        %v2555 = vunpack.c.l.s4 1934713408
        %v2556 = vunpack.c.0.s8 %v2555
        %v2557 = vlaneseq
        %v2558 = vshrl.u32 %v2557, 7
        %v2559 = vsub.s32 %v2556, %v2558
        %v2560 = vrot.slane %v2546, %v2559
        %v2561 = vcombine.low %v2537, %v2553
        %v2562 = vcombine.high %v2537, %v2553
        %v2563 = vcombine.low %v2544, %v2560
        %v2564 = vcombine.high %v2544, %v2560
        %v2565 = vcombine.low %v1517, %v1524
        %v2567 = vunpack.c.l.s4 1983009808
        %v2568 = vunpack.c.0.s8 %v2567
        %v2569 = vlaneseq
        %v2570 = vshrl.u32 %v2569, 7
        %v2571 = vsub.s32 %v2568, %v2570
        %v2572 = vrot.slane %v2565, %v2571
        %v2573 = vcombine.low %v1541, %v1542
        %v2575 = vunpack.c.l.s4 1983009808
        %v2576 = vunpack.c.0.s8 %v2575
        %v2577 = vlaneseq
        %v2578 = vshrl.u32 %v2577, 7
        %v2579 = vsub.s32 %v2576, %v2578
        %v2580 = vrot.slane %v2573, %v2579
        %v2581 = vcombine.low %v1533, %v1540
        %v2583 = vunpack.c.l.s4 1983009808
        %v2584 = vunpack.c.0.s8 %v2583
        %v2585 = vlaneseq
        %v2586 = vshrl.u32 %v2585, 7
        %v2587 = vsub.s32 %v2584, %v2586
        %v2588 = vrot.slane %v2581, %v2587
        %v2589 = vcombine.low %v1543, %v1544
        %v2591 = vunpack.c.l.s4 1983009808
        %v2592 = vunpack.c.0.s8 %v2591
        %v2593 = vlaneseq
        %v2594 = vshrl.u32 %v2593, 7
        %v2595 = vsub.s32 %v2592, %v2594
        %v2596 = vrot.slane %v2589, %v2595
        %v2597 = vcombine.low %v2572, %v2580
        %v2598 = vcombine.high %v2572, %v2580
        %v2600 = vunpack.c.l.s4 1934713408
        %v2601 = vunpack.c.0.s8 %v2600
        %v2602 = vlaneseq
        %v2603 = vshrl.u32 %v2602, 7
        %v2604 = vsub.s32 %v2601, %v2603
        %v2605 = vrot.slane %v2597, %v2604
        %v2607 = vunpack.c.l.s4 1934713408
        %v2608 = vunpack.c.0.s8 %v2607
        %v2609 = vlaneseq
        %v2610 = vshrl.u32 %v2609, 7
        %v2611 = vsub.s32 %v2608, %v2610
        %v2612 = vrot.slane %v2598, %v2611
        %v2613 = vcombine.low %v2588, %v2596
        %v2614 = vcombine.high %v2588, %v2596
        %v2616 = vunpack.c.l.s4 1934713408
        %v2617 = vunpack.c.0.s8 %v2616
        %v2618 = vlaneseq
        %v2619 = vshrl.u32 %v2618, 7
        %v2620 = vsub.s32 %v2617, %v2619
        %v2621 = vrot.slane %v2613, %v2620
        %v2623 = vunpack.c.l.s4 1934713408
        %v2624 = vunpack.c.0.s8 %v2623
        %v2625 = vlaneseq
        %v2626 = vshrl.u32 %v2625, 7
        %v2627 = vsub.s32 %v2624, %v2626
        %v2628 = vrot.slane %v2614, %v2627
        %v2629 = vcombine.low %v2605, %v2621
        %v2630 = vcombine.high %v2605, %v2621
        %v2631 = vcombine.low %v2612, %v2628
        %v2632 = vcombine.high %v2612, %v2628
        %v2633 = vcombine.low %v1585, %v1592
        %v2635 = vunpack.c.l.s4 1983009808
        %v2636 = vunpack.c.0.s8 %v2635
        %v2637 = vlaneseq
        %v2638 = vshrl.u32 %v2637, 7
        %v2639 = vsub.s32 %v2636, %v2638
        %v2640 = vrot.slane %v2633, %v2639
        %v2641 = vcombine.low %v1609, %v1610
        %v2643 = vunpack.c.l.s4 1983009808
        %v2644 = vunpack.c.0.s8 %v2643
        %v2645 = vlaneseq
        %v2646 = vshrl.u32 %v2645, 7
        %v2647 = vsub.s32 %v2644, %v2646
        %v2648 = vrot.slane %v2641, %v2647
        %v2649 = vcombine.low %v1601, %v1608
        %v2651 = vunpack.c.l.s4 1983009808
        %v2652 = vunpack.c.0.s8 %v2651
        %v2653 = vlaneseq
        %v2654 = vshrl.u32 %v2653, 7
        %v2655 = vsub.s32 %v2652, %v2654
        %v2656 = vrot.slane %v2649, %v2655
        %v2657 = vcombine.low %v1611, %v1612
        %v2659 = vunpack.c.l.s4 1983009808
        %v2660 = vunpack.c.0.s8 %v2659
        %v2661 = vlaneseq
        %v2662 = vshrl.u32 %v2661, 7
        %v2663 = vsub.s32 %v2660, %v2662
        %v2664 = vrot.slane %v2657, %v2663
        %v2665 = vcombine.low %v2640, %v2648
        %v2666 = vcombine.high %v2640, %v2648
        %v2668 = vunpack.c.l.s4 1934713408
        %v2669 = vunpack.c.0.s8 %v2668
        %v2670 = vlaneseq
        %v2671 = vshrl.u32 %v2670, 7
        %v2672 = vsub.s32 %v2669, %v2671
        %v2673 = vrot.slane %v2665, %v2672
        %v2675 = vunpack.c.l.s4 1934713408
        %v2676 = vunpack.c.0.s8 %v2675
        %v2677 = vlaneseq
        %v2678 = vshrl.u32 %v2677, 7
        %v2679 = vsub.s32 %v2676, %v2678
        %v2680 = vrot.slane %v2666, %v2679
        %v2681 = vcombine.low %v2656, %v2664
        %v2682 = vcombine.high %v2656, %v2664
        %v2684 = vunpack.c.l.s4 1934713408
        %v2685 = vunpack.c.0.s8 %v2684
        %v2686 = vlaneseq
        %v2687 = vshrl.u32 %v2686, 7
        %v2688 = vsub.s32 %v2685, %v2687
        %v2689 = vrot.slane %v2681, %v2688
        %v2691 = vunpack.c.l.s4 1934713408
        %v2692 = vunpack.c.0.s8 %v2691
        %v2693 = vlaneseq
        %v2694 = vshrl.u32 %v2693, 7
        %v2695 = vsub.s32 %v2692, %v2694
        %v2696 = vrot.slane %v2682, %v2695
        %v2697 = vcombine.low %v2673, %v2689
        %v2698 = vcombine.high %v2673, %v2689
        %v2699 = vcombine.low %v2680, %v2696
        %v2700 = vcombine.high %v2680, %v2696
        %v2701 = vcombine.low %v1653, %v1660
        %v2703 = vunpack.c.l.s4 1983009808
        %v2704 = vunpack.c.0.s8 %v2703
        %v2705 = vlaneseq
        %v2706 = vshrl.u32 %v2705, 7
        %v2707 = vsub.s32 %v2704, %v2706
        %v2708 = vrot.slane %v2701, %v2707
        %v2709 = vcombine.low %v1677, %v1678
        %v2711 = vunpack.c.l.s4 1983009808
        %v2712 = vunpack.c.0.s8 %v2711
        %v2713 = vlaneseq
        %v2714 = vshrl.u32 %v2713, 7
        %v2715 = vsub.s32 %v2712, %v2714
        %v2716 = vrot.slane %v2709, %v2715
        %v2717 = vcombine.low %v1669, %v1676
        %v2719 = vunpack.c.l.s4 1983009808
        %v2720 = vunpack.c.0.s8 %v2719
        %v2721 = vlaneseq
        %v2722 = vshrl.u32 %v2721, 7
        %v2723 = vsub.s32 %v2720, %v2722
        %v2724 = vrot.slane %v2717, %v2723
        %v2725 = vcombine.low %v1679, %v1680
        %v2727 = vunpack.c.l.s4 1983009808
        %v2728 = vunpack.c.0.s8 %v2727
        %v2729 = vlaneseq
        %v2730 = vshrl.u32 %v2729, 7
        %v2731 = vsub.s32 %v2728, %v2730
        %v2732 = vrot.slane %v2725, %v2731
        %v2733 = vcombine.low %v2708, %v2716
        %v2734 = vcombine.high %v2708, %v2716
        %v2736 = vunpack.c.l.s4 1934713408
        %v2737 = vunpack.c.0.s8 %v2736
        %v2738 = vlaneseq
        %v2739 = vshrl.u32 %v2738, 7
        %v2740 = vsub.s32 %v2737, %v2739
        %v2741 = vrot.slane %v2733, %v2740
        %v2743 = vunpack.c.l.s4 1934713408
        %v2744 = vunpack.c.0.s8 %v2743
        %v2745 = vlaneseq
        %v2746 = vshrl.u32 %v2745, 7
        %v2747 = vsub.s32 %v2744, %v2746
        %v2748 = vrot.slane %v2734, %v2747
        %v2749 = vcombine.low %v2724, %v2732
        %v2750 = vcombine.high %v2724, %v2732
        %v2752 = vunpack.c.l.s4 1934713408
        %v2753 = vunpack.c.0.s8 %v2752
        %v2754 = vlaneseq
        %v2755 = vshrl.u32 %v2754, 7
        %v2756 = vsub.s32 %v2753, %v2755
        %v2757 = vrot.slane %v2749, %v2756
        %v2759 = vunpack.c.l.s4 1934713408
        %v2760 = vunpack.c.0.s8 %v2759
        %v2761 = vlaneseq
        %v2762 = vshrl.u32 %v2761, 7
        %v2763 = vsub.s32 %v2760, %v2762
        %v2764 = vrot.slane %v2750, %v2763
        %v2765 = vcombine.low %v2741, %v2757
        %v2766 = vcombine.high %v2741, %v2757
        %v2767 = vcombine.low %v2748, %v2764
        %v2768 = vcombine.high %v2748, %v2764
        %v2769 = vcombine.low %v1721, %v1728
        %v2771 = vunpack.c.l.s4 1983009808
        %v2772 = vunpack.c.0.s8 %v2771
        %v2773 = vlaneseq
        %v2774 = vshrl.u32 %v2773, 7
        %v2775 = vsub.s32 %v2772, %v2774
        %v2776 = vrot.slane %v2769, %v2775
        %v2777 = vcombine.low %v1745, %v1746
        %v2779 = vunpack.c.l.s4 1983009808
        %v2780 = vunpack.c.0.s8 %v2779
        %v2781 = vlaneseq
        %v2782 = vshrl.u32 %v2781, 7
        %v2783 = vsub.s32 %v2780, %v2782
        %v2784 = vrot.slane %v2777, %v2783
        %v2785 = vcombine.low %v1737, %v1744
        %v2787 = vunpack.c.l.s4 1983009808
        %v2788 = vunpack.c.0.s8 %v2787
        %v2789 = vlaneseq
        %v2790 = vshrl.u32 %v2789, 7
        %v2791 = vsub.s32 %v2788, %v2790
        %v2792 = vrot.slane %v2785, %v2791
        %v2793 = vcombine.low %v1747, %v1748
        %v2795 = vunpack.c.l.s4 1983009808
        %v2796 = vunpack.c.0.s8 %v2795
        %v2797 = vlaneseq
        %v2798 = vshrl.u32 %v2797, 7
        %v2799 = vsub.s32 %v2796, %v2798
        %v2800 = vrot.slane %v2793, %v2799
        %v2801 = vcombine.low %v2776, %v2784
        %v2802 = vcombine.high %v2776, %v2784
        %v2804 = vunpack.c.l.s4 1934713408
        %v2805 = vunpack.c.0.s8 %v2804
        %v2806 = vlaneseq
        %v2807 = vshrl.u32 %v2806, 7
        %v2808 = vsub.s32 %v2805, %v2807
        %v2809 = vrot.slane %v2801, %v2808
        %v2811 = vunpack.c.l.s4 1934713408
        %v2812 = vunpack.c.0.s8 %v2811
        %v2813 = vlaneseq
        %v2814 = vshrl.u32 %v2813, 7
        %v2815 = vsub.s32 %v2812, %v2814
        %v2816 = vrot.slane %v2802, %v2815
        %v2817 = vcombine.low %v2792, %v2800
        %v2818 = vcombine.high %v2792, %v2800
        %v2820 = vunpack.c.l.s4 1934713408
        %v2821 = vunpack.c.0.s8 %v2820
        %v2822 = vlaneseq
        %v2823 = vshrl.u32 %v2822, 7
        %v2824 = vsub.s32 %v2821, %v2823
        %v2825 = vrot.slane %v2817, %v2824
        %v2827 = vunpack.c.l.s4 1934713408
        %v2828 = vunpack.c.0.s8 %v2827
        %v2829 = vlaneseq
        %v2830 = vshrl.u32 %v2829, 7
        %v2831 = vsub.s32 %v2828, %v2830
        %v2832 = vrot.slane %v2818, %v2831
        %v2833 = vcombine.low %v2809, %v2825
        %v2834 = vcombine.high %v2809, %v2825
        %v2835 = vcombine.low %v2816, %v2832
        %v2836 = vcombine.high %v2816, %v2832
        %v2837 = vcombine.low %v1789, %v1796
        %v2839 = vunpack.c.l.s4 1983009808
        %v2840 = vunpack.c.0.s8 %v2839
        %v2841 = vlaneseq
        %v2842 = vshrl.u32 %v2841, 7
        %v2843 = vsub.s32 %v2840, %v2842
        %v2844 = vrot.slane %v2837, %v2843
        %v2845 = vcombine.low %v1813, %v1814
        %v2847 = vunpack.c.l.s4 1983009808
        %v2848 = vunpack.c.0.s8 %v2847
        %v2849 = vlaneseq
        %v2850 = vshrl.u32 %v2849, 7
        %v2851 = vsub.s32 %v2848, %v2850
        %v2852 = vrot.slane %v2845, %v2851
        %v2853 = vcombine.low %v1805, %v1812
        %v2855 = vunpack.c.l.s4 1983009808
        %v2856 = vunpack.c.0.s8 %v2855
        %v2857 = vlaneseq
        %v2858 = vshrl.u32 %v2857, 7
        %v2859 = vsub.s32 %v2856, %v2858
        %v2860 = vrot.slane %v2853, %v2859
        %v2861 = vcombine.low %v1815, %v1816
        %v2863 = vunpack.c.l.s4 1983009808
        %v2864 = vunpack.c.0.s8 %v2863
        %v2865 = vlaneseq
        %v2866 = vshrl.u32 %v2865, 7
        %v2867 = vsub.s32 %v2864, %v2866
        %v2868 = vrot.slane %v2861, %v2867
        %v2869 = vcombine.low %v2844, %v2852
        %v2870 = vcombine.high %v2844, %v2852
        %v2872 = vunpack.c.l.s4 1934713408
        %v2873 = vunpack.c.0.s8 %v2872
        %v2874 = vlaneseq
        %v2875 = vshrl.u32 %v2874, 7
        %v2876 = vsub.s32 %v2873, %v2875
        %v2877 = vrot.slane %v2869, %v2876
        %v2879 = vunpack.c.l.s4 1934713408
        %v2880 = vunpack.c.0.s8 %v2879
        %v2881 = vlaneseq
        %v2882 = vshrl.u32 %v2881, 7
        %v2883 = vsub.s32 %v2880, %v2882
        %v2884 = vrot.slane %v2870, %v2883
        %v2885 = vcombine.low %v2860, %v2868
        %v2886 = vcombine.high %v2860, %v2868
        %v2888 = vunpack.c.l.s4 1934713408
        %v2889 = vunpack.c.0.s8 %v2888
        %v2890 = vlaneseq
        %v2891 = vshrl.u32 %v2890, 7
        %v2892 = vsub.s32 %v2889, %v2891
        %v2893 = vrot.slane %v2885, %v2892
        %v2895 = vunpack.c.l.s4 1934713408
        %v2896 = vunpack.c.0.s8 %v2895
        %v2897 = vlaneseq
        %v2898 = vshrl.u32 %v2897, 7
        %v2899 = vsub.s32 %v2896, %v2898
        %v2900 = vrot.slane %v2886, %v2899
        %v2901 = vcombine.low %v2877, %v2893
        %v2902 = vcombine.high %v2877, %v2893
        %v2903 = vcombine.low %v2884, %v2900
        %v2904 = vcombine.high %v2884, %v2900
        %v2905 = vcombine.low %v1857, %v1864
        %v2907 = vunpack.c.l.s4 1983009808
        %v2908 = vunpack.c.0.s8 %v2907
        %v2909 = vlaneseq
        %v2910 = vshrl.u32 %v2909, 7
        %v2911 = vsub.s32 %v2908, %v2910
        %v2912 = vrot.slane %v2905, %v2911
        %v2913 = vcombine.low %v1881, %v1882
        %v2915 = vunpack.c.l.s4 1983009808
        %v2916 = vunpack.c.0.s8 %v2915
        %v2917 = vlaneseq
        %v2918 = vshrl.u32 %v2917, 7
        %v2919 = vsub.s32 %v2916, %v2918
        %v2920 = vrot.slane %v2913, %v2919
        %v2921 = vcombine.low %v1873, %v1880
        %v2923 = vunpack.c.l.s4 1983009808
        %v2924 = vunpack.c.0.s8 %v2923
        %v2925 = vlaneseq
        %v2926 = vshrl.u32 %v2925, 7
        %v2927 = vsub.s32 %v2924, %v2926
        %v2928 = vrot.slane %v2921, %v2927
        %v2929 = vcombine.low %v1883, %v1884
        %v2931 = vunpack.c.l.s4 1983009808
        %v2932 = vunpack.c.0.s8 %v2931
        %v2933 = vlaneseq
        %v2934 = vshrl.u32 %v2933, 7
        %v2935 = vsub.s32 %v2932, %v2934
        %v2936 = vrot.slane %v2929, %v2935
        %v2937 = vcombine.low %v2912, %v2920
        %v2938 = vcombine.high %v2912, %v2920
        %v2940 = vunpack.c.l.s4 1934713408
        %v2941 = vunpack.c.0.s8 %v2940
        %v2942 = vlaneseq
        %v2943 = vshrl.u32 %v2942, 7
        %v2944 = vsub.s32 %v2941, %v2943
        %v2945 = vrot.slane %v2937, %v2944
        %v2947 = vunpack.c.l.s4 1934713408
        %v2948 = vunpack.c.0.s8 %v2947
        %v2949 = vlaneseq
        %v2950 = vshrl.u32 %v2949, 7
        %v2951 = vsub.s32 %v2948, %v2950
        %v2952 = vrot.slane %v2938, %v2951
        %v2953 = vcombine.low %v2928, %v2936
        %v2954 = vcombine.high %v2928, %v2936
        %v2956 = vunpack.c.l.s4 1934713408
        %v2957 = vunpack.c.0.s8 %v2956
        %v2958 = vlaneseq
        %v2959 = vshrl.u32 %v2958, 7
        %v2960 = vsub.s32 %v2957, %v2959
        %v2961 = vrot.slane %v2953, %v2960
        %v2963 = vunpack.c.l.s4 1934713408
        %v2964 = vunpack.c.0.s8 %v2963
        %v2965 = vlaneseq
        %v2966 = vshrl.u32 %v2965, 7
        %v2967 = vsub.s32 %v2964, %v2966
        %v2968 = vrot.slane %v2954, %v2967
        %v2969 = vcombine.low %v2945, %v2961
        %v2970 = vcombine.high %v2945, %v2961
        %v2971 = vcombine.low %v2952, %v2968
        %v2972 = vcombine.high %v2952, %v2968
        %vm2973 = vcmask 261120
        %2974 = vst.msk [vmem:[%s287] sm:$0xff] %vm2973, %v1949
        %2975 = vst.msk [vmem:[%s287 + $0x8] sm:$0xff] %vm2973, %v2017
        %2976 = vst.msk [vmem:[%s287 + $0x10] sm:$0xff] %vm2973, %v2085
        %2977 = vst.msk [vmem:[%s287 + $0x18] sm:$0xff] %vm2973, %v2153
        %2978 = vst.msk [vmem:[%s287 + $0x20] sm:$0xff] %vm2973, %v2221
        %2979 = vst.msk [vmem:[%s287 + $0x28] sm:$0xff] %vm2973, %v2289
        %2980 = vst.msk [vmem:[%s287 + $0x30] sm:$0xff] %vm2973, %v2357
        %2981 = vst.msk [vmem:[%s287 + $0x38] sm:$0xff] %vm2973, %v2425
        %2982 = vst.msk [vmem:[%s287 + $0x40] sm:$0xff] %vm2973, %v2493
        %2983 = vst.msk [vmem:[%s287 + $0x48] sm:$0xff] %vm2973, %v2561
        %2984 = vst.msk [vmem:[%s287 + $0x50] sm:$0xff] %vm2973, %v2629
        %2985 = vst.msk [vmem:[%s287 + $0x58] sm:$0xff] %vm2973, %v2697
        %2986 = vst.msk [vmem:[%s287 + $0x60] sm:$0xff] %vm2973, %v2765
        %2987 = vst.msk [vmem:[%s287 + $0x68] sm:$0xff] %vm2973, %v2833
        %2988 = vst.msk [vmem:[%s287 + $0x70] sm:$0xff] %vm2973, %v2901
        %2989 = vst.msk [vmem:[%s287 + $0x78] sm:$0xff] %vm2973, %v2969
        %2990 = vst.msk [vmem:[%s287 + $0x80] sm:$0xff] %vm2973, %v1950
        %2991 = vst.msk [vmem:[%s287 + $0x88] sm:$0xff] %vm2973, %v2018
        %2992 = vst.msk [vmem:[%s287 + $0x90] sm:$0xff] %vm2973, %v2086
        %2993 = vst.msk [vmem:[%s287 + $0x98] sm:$0xff] %vm2973, %v2154
        %2994 = vst.msk [vmem:[%s287 + $0xa0] sm:$0xff] %vm2973, %v2222
        %2995 = vst.msk [vmem:[%s287 + $0xa8] sm:$0xff] %vm2973, %v2290
        %2996 = vst.msk [vmem:[%s287 + $0xb0] sm:$0xff] %vm2973, %v2358
        %2997 = vst.msk [vmem:[%s287 + $0xb8] sm:$0xff] %vm2973, %v2426
        %2998 = vst.msk [vmem:[%s287 + $0xc0] sm:$0xff] %vm2973, %v2494
        %2999 = vst.msk [vmem:[%s287 + $0xc8] sm:$0xff] %vm2973, %v2562
        %3000 = vst.msk [vmem:[%s287 + $0xd0] sm:$0xff] %vm2973, %v2630
        %3001 = vst.msk [vmem:[%s287 + $0xd8] sm:$0xff] %vm2973, %v2698
        %3002 = vst.msk [vmem:[%s287 + $0xe0] sm:$0xff] %vm2973, %v2766
        %3003 = vst.msk [vmem:[%s287 + $0xe8] sm:$0xff] %vm2973, %v2834
        %3004 = vst.msk [vmem:[%s287 + $0xf0] sm:$0xff] %vm2973, %v2902
        %3005 = vst.msk [vmem:[%s287 + $0xf8] sm:$0xff] %vm2973, %v2970
        %3006 = vst.msk [vmem:[%s287 + $0x100] sm:$0xff] %vm2973, %v1951
        %3007 = vst.msk [vmem:[%s287 + $0x108] sm:$0xff] %vm2973, %v2019
        %3008 = vst.msk [vmem:[%s287 + $0x110] sm:$0xff] %vm2973, %v2087
        %3009 = vst.msk [vmem:[%s287 + $0x118] sm:$0xff] %vm2973, %v2155
        %3010 = vst.msk [vmem:[%s287 + $0x120] sm:$0xff] %vm2973, %v2223
        %3011 = vst.msk [vmem:[%s287 + $0x128] sm:$0xff] %vm2973, %v2291
        %3012 = vst.msk [vmem:[%s287 + $0x130] sm:$0xff] %vm2973, %v2359
        %3013 = vst.msk [vmem:[%s287 + $0x138] sm:$0xff] %vm2973, %v2427
        %3014 = vst.msk [vmem:[%s287 + $0x140] sm:$0xff] %vm2973, %v2495
        %3015 = vst.msk [vmem:[%s287 + $0x148] sm:$0xff] %vm2973, %v2563
        %3016 = vst.msk [vmem:[%s287 + $0x150] sm:$0xff] %vm2973, %v2631
        %3017 = vst.msk [vmem:[%s287 + $0x158] sm:$0xff] %vm2973, %v2699
        %3018 = vst.msk [vmem:[%s287 + $0x160] sm:$0xff] %vm2973, %v2767
        %3019 = vst.msk [vmem:[%s287 + $0x168] sm:$0xff] %vm2973, %v2835
        %3020 = vst.msk [vmem:[%s287 + $0x170] sm:$0xff] %vm2973, %v2903
        %3021 = vst.msk [vmem:[%s287 + $0x178] sm:$0xff] %vm2973, %v2971
        %3022 = vst.msk [vmem:[%s287 + $0x180] sm:$0xff] %vm2973, %v1952
        %3023 = vst.msk [vmem:[%s287 + $0x188] sm:$0xff] %vm2973, %v2020
        %3024 = vst.msk [vmem:[%s287 + $0x190] sm:$0xff] %vm2973, %v2088
        %3025 = vst.msk [vmem:[%s287 + $0x198] sm:$0xff] %vm2973, %v2156
        %3026 = vst.msk [vmem:[%s287 + $0x1a0] sm:$0xff] %vm2973, %v2224
        %3027 = vst.msk [vmem:[%s287 + $0x1a8] sm:$0xff] %vm2973, %v2292
        %3028 = vst.msk [vmem:[%s287 + $0x1b0] sm:$0xff] %vm2973, %v2360
        %3029 = vst.msk [vmem:[%s287 + $0x1b8] sm:$0xff] %vm2973, %v2428
        %3030 = vst.msk [vmem:[%s287 + $0x1c0] sm:$0xff] %vm2973, %v2496
        %3031 = vst.msk [vmem:[%s287 + $0x1c8] sm:$0xff] %vm2973, %v2564
        %3032 = vst.msk [vmem:[%s287 + $0x1d0] sm:$0xff] %vm2973, %v2632
        %3033 = vst.msk [vmem:[%s287 + $0x1d8] sm:$0xff] %vm2973, %v2700
        %3034 = vst.msk [vmem:[%s287 + $0x1e0] sm:$0xff] %vm2973, %v2768
        %3035 = vst.msk [vmem:[%s287 + $0x1e8] sm:$0xff] %vm2973, %v2836
        %3036 = vst.msk [vmem:[%s287 + $0x1f0] sm:$0xff] %vm2973, %v2904
        %3037 = vst.msk [vmem:[%s287 + $0x1f8] sm:$0xff] %vm2973, %v2972
        %3054 = vrot.lane.b32.xlu0 %v559, 96
        %v3055 = vpop.permute.xlu0 %3054
        %3056 = vrot.lane.b32.xlu0 %v564, 96
        %v3057 = vpop.permute.xlu0 %3056
        %3058 = vrot.lane.b32.xlu0 %v569, 96
        %v3059 = vpop.permute.xlu0 %3058
        %3060 = vrot.lane.b32.xlu0 %v574, 96
        %v3061 = vpop.permute.xlu0 %3060
        %3062 = vrot.lane.b32.xlu0 %v579, 96
        %v3063 = vpop.permute.xlu0 %3062
        %3064 = vrot.lane.b32.xlu0 %v584, 96
        %v3065 = vpop.permute.xlu0 %3064
        %3066 = vrot.lane.b32.xlu0 %v589, 96
        %v3067 = vpop.permute.xlu0 %3066
        %3068 = vrot.lane.b32.xlu0 %v594, 96
        %v3069 = vpop.permute.xlu0 %3068
        %3070 = vrot.lane.b32.xlu0 %v599, 96
        %v3071 = vpop.permute.xlu0 %3070
        %3072 = vrot.lane.b32.xlu0 %v604, 96
        %v3073 = vpop.permute.xlu0 %3072
        %3074 = vrot.lane.b32.xlu0 %v609, 96
        %v3075 = vpop.permute.xlu0 %3074
        %3076 = vrot.lane.b32.xlu0 %v614, 96
        %v3077 = vpop.permute.xlu0 %3076
        %3078 = vrot.lane.b32.xlu0 %v619, 96
        %v3079 = vpop.permute.xlu0 %3078
        %3080 = vrot.lane.b32.xlu0 %v624, 96
        %v3081 = vpop.permute.xlu0 %3080
        %3082 = vrot.lane.b32.xlu0 %v629, 96
        %v3083 = vpop.permute.xlu0 %3082
        %3084 = vrot.lane.b32.xlu0 %v634, 96
        %v3085 = vpop.permute.xlu0 %3084
        %3102 = vrot.lane.b32.xlu0 %v559, 64
        %v3103 = vpop.permute.xlu0 %3102
        %3104 = vrot.lane.b32.xlu0 %v564, 64
        %v3105 = vpop.permute.xlu0 %3104
        %3106 = vrot.lane.b32.xlu0 %v569, 64
        %v3107 = vpop.permute.xlu0 %3106
        %3108 = vrot.lane.b32.xlu0 %v574, 64
        %v3109 = vpop.permute.xlu0 %3108
        %3110 = vrot.lane.b32.xlu0 %v579, 64
        %v3111 = vpop.permute.xlu0 %3110
        %3112 = vrot.lane.b32.xlu0 %v584, 64
        %v3113 = vpop.permute.xlu0 %3112
        %3114 = vrot.lane.b32.xlu0 %v589, 64
        %v3115 = vpop.permute.xlu0 %3114
        %3116 = vrot.lane.b32.xlu0 %v594, 64
        %v3117 = vpop.permute.xlu0 %3116
        %3118 = vrot.lane.b32.xlu0 %v599, 64
        %v3119 = vpop.permute.xlu0 %3118
        %3120 = vrot.lane.b32.xlu0 %v604, 64
        %v3121 = vpop.permute.xlu0 %3120
        %3122 = vrot.lane.b32.xlu0 %v609, 64
        %v3123 = vpop.permute.xlu0 %3122
        %3124 = vrot.lane.b32.xlu0 %v614, 64
        %v3125 = vpop.permute.xlu0 %3124
        %3126 = vrot.lane.b32.xlu0 %v619, 64
        %v3127 = vpop.permute.xlu0 %3126
        %3128 = vrot.lane.b32.xlu0 %v624, 64
        %v3129 = vpop.permute.xlu0 %3128
        %3130 = vrot.lane.b32.xlu0 %v629, 64
        %v3131 = vpop.permute.xlu0 %3130
        %3132 = vrot.lane.b32.xlu0 %v634, 64
        %v3133 = vpop.permute.xlu0 %3132
        %3150 = vrot.lane.b32.xlu0 %v559, 32
        %v3151 = vpop.permute.xlu0 %3150
        %3152 = vrot.lane.b32.xlu0 %v564, 32
        %v3153 = vpop.permute.xlu0 %3152
        %3154 = vrot.lane.b32.xlu0 %v569, 32
        %v3155 = vpop.permute.xlu0 %3154
        %3156 = vrot.lane.b32.xlu0 %v574, 32
        %v3157 = vpop.permute.xlu0 %3156
        %3158 = vrot.lane.b32.xlu0 %v579, 32
        %v3159 = vpop.permute.xlu0 %3158
        %3160 = vrot.lane.b32.xlu0 %v584, 32
        %v3161 = vpop.permute.xlu0 %3160
        %3162 = vrot.lane.b32.xlu0 %v589, 32
        %v3163 = vpop.permute.xlu0 %3162
        %3164 = vrot.lane.b32.xlu0 %v594, 32
        %v3165 = vpop.permute.xlu0 %3164
        %3166 = vrot.lane.b32.xlu0 %v599, 32
        %v3167 = vpop.permute.xlu0 %3166
        %3168 = vrot.lane.b32.xlu0 %v604, 32
        %v3169 = vpop.permute.xlu0 %3168
        %3170 = vrot.lane.b32.xlu0 %v609, 32
        %v3171 = vpop.permute.xlu0 %3170
        %3172 = vrot.lane.b32.xlu0 %v614, 32
        %v3173 = vpop.permute.xlu0 %3172
        %3174 = vrot.lane.b32.xlu0 %v619, 32
        %v3175 = vpop.permute.xlu0 %3174
        %3176 = vrot.lane.b32.xlu0 %v624, 32
        %v3177 = vpop.permute.xlu0 %3176
        %3178 = vrot.lane.b32.xlu0 %v629, 32
        %v3179 = vpop.permute.xlu0 %3178
        %3180 = vrot.lane.b32.xlu0 %v634, 32
        %v3181 = vpop.permute.xlu0 %3180
        %v3198 = vcombine.low %v559, %v3103
        %v3199 = vcombine.high %v559, %v3103
        %v3201 = vunpack.c.l.s4 1983009808
        %v3202 = vunpack.c.0.s8 %v3201
        %v3203 = vlaneseq
        %v3204 = vshrl.u32 %v3203, 7
        %v3205 = vsub.s32 %v3202, %v3204
        %v3206 = vrot.slane %v3198, %v3205
        %v3208 = vunpack.c.l.s4 1983009808
        %v3209 = vunpack.c.0.s8 %v3208
        %v3210 = vlaneseq
        %v3211 = vshrl.u32 %v3210, 7
        %v3212 = vsub.s32 %v3209, %v3211
        %v3213 = vrot.slane %v3199, %v3212
        %v3214 = vcombine.low %v3055, %v3151
        %v3215 = vcombine.high %v3055, %v3151
        %v3217 = vunpack.c.l.s4 1983009808
        %v3218 = vunpack.c.0.s8 %v3217
        %v3219 = vlaneseq
        %v3220 = vshrl.u32 %v3219, 7
        %v3221 = vsub.s32 %v3218, %v3220
        %v3222 = vrot.slane %v3214, %v3221
        %v3224 = vunpack.c.l.s4 1983009808
        %v3225 = vunpack.c.0.s8 %v3224
        %v3226 = vlaneseq
        %v3227 = vshrl.u32 %v3226, 7
        %v3228 = vsub.s32 %v3225, %v3227
        %v3229 = vrot.slane %v3215, %v3228
        %v3230 = vcombine.low %v3206, %v3222
        %v3231 = vcombine.high %v3206, %v3222
        %v3233 = vunpack.c.l.s4 1934713408
        %v3234 = vunpack.c.0.s8 %v3233
        %v3235 = vlaneseq
        %v3236 = vshrl.u32 %v3235, 7
        %v3237 = vsub.s32 %v3234, %v3236
        %v3238 = vrot.slane %v3230, %v3237
        %v3240 = vunpack.c.l.s4 1934713408
        %v3241 = vunpack.c.0.s8 %v3240
        %v3242 = vlaneseq
        %v3243 = vshrl.u32 %v3242, 7
        %v3244 = vsub.s32 %v3241, %v3243
        %v3245 = vrot.slane %v3231, %v3244
        %v3246 = vcombine.low %v3213, %v3229
        %v3247 = vcombine.high %v3213, %v3229
        %v3249 = vunpack.c.l.s4 1934713408
        %v3250 = vunpack.c.0.s8 %v3249
        %v3251 = vlaneseq
        %v3252 = vshrl.u32 %v3251, 7
        %v3253 = vsub.s32 %v3250, %v3252
        %v3254 = vrot.slane %v3246, %v3253
        %v3256 = vunpack.c.l.s4 1934713408
        %v3257 = vunpack.c.0.s8 %v3256
        %v3258 = vlaneseq
        %v3259 = vshrl.u32 %v3258, 7
        %v3260 = vsub.s32 %v3257, %v3259
        %v3261 = vrot.slane %v3247, %v3260
        %v3262 = vcombine.high %v3238, 0.0
        %v3263 = vcombine.high %v3245, 0.0
        %v3264 = vcombine.high %v3254, 0.0
        %v3265 = vcombine.high %v3261, 0.0
        %v3266 = vcombine.low %v564, %v3105
        %v3267 = vcombine.high %v564, %v3105
        %v3269 = vunpack.c.l.s4 1983009808
        %v3270 = vunpack.c.0.s8 %v3269
        %v3271 = vlaneseq
        %v3272 = vshrl.u32 %v3271, 7
        %v3273 = vsub.s32 %v3270, %v3272
        %v3274 = vrot.slane %v3266, %v3273
        %v3276 = vunpack.c.l.s4 1983009808
        %v3277 = vunpack.c.0.s8 %v3276
        %v3278 = vlaneseq
        %v3279 = vshrl.u32 %v3278, 7
        %v3280 = vsub.s32 %v3277, %v3279
        %v3281 = vrot.slane %v3267, %v3280
        %v3282 = vcombine.low %v3057, %v3153
        %v3283 = vcombine.high %v3057, %v3153
        %v3285 = vunpack.c.l.s4 1983009808
        %v3286 = vunpack.c.0.s8 %v3285
        %v3287 = vlaneseq
        %v3288 = vshrl.u32 %v3287, 7
        %v3289 = vsub.s32 %v3286, %v3288
        %v3290 = vrot.slane %v3282, %v3289
        %v3292 = vunpack.c.l.s4 1983009808
        %v3293 = vunpack.c.0.s8 %v3292
        %v3294 = vlaneseq
        %v3295 = vshrl.u32 %v3294, 7
        %v3296 = vsub.s32 %v3293, %v3295
        %v3297 = vrot.slane %v3283, %v3296
        %v3298 = vcombine.low %v3274, %v3290
        %v3299 = vcombine.high %v3274, %v3290
        %v3301 = vunpack.c.l.s4 1934713408
        %v3302 = vunpack.c.0.s8 %v3301
        %v3303 = vlaneseq
        %v3304 = vshrl.u32 %v3303, 7
        %v3305 = vsub.s32 %v3302, %v3304
        %v3306 = vrot.slane %v3298, %v3305
        %v3308 = vunpack.c.l.s4 1934713408
        %v3309 = vunpack.c.0.s8 %v3308
        %v3310 = vlaneseq
        %v3311 = vshrl.u32 %v3310, 7
        %v3312 = vsub.s32 %v3309, %v3311
        %v3313 = vrot.slane %v3299, %v3312
        %v3314 = vcombine.low %v3281, %v3297
        %v3315 = vcombine.high %v3281, %v3297
        %v3317 = vunpack.c.l.s4 1934713408
        %v3318 = vunpack.c.0.s8 %v3317
        %v3319 = vlaneseq
        %v3320 = vshrl.u32 %v3319, 7
        %v3321 = vsub.s32 %v3318, %v3320
        %v3322 = vrot.slane %v3314, %v3321
        %v3324 = vunpack.c.l.s4 1934713408
        %v3325 = vunpack.c.0.s8 %v3324
        %v3326 = vlaneseq
        %v3327 = vshrl.u32 %v3326, 7
        %v3328 = vsub.s32 %v3325, %v3327
        %v3329 = vrot.slane %v3315, %v3328
        %v3330 = vcombine.high %v3306, 0.0
        %v3331 = vcombine.high %v3313, 0.0
        %v3332 = vcombine.high %v3322, 0.0
        %v3333 = vcombine.high %v3329, 0.0
        %v3334 = vcombine.low %v569, %v3107
        %v3335 = vcombine.high %v569, %v3107
        %v3337 = vunpack.c.l.s4 1983009808
        %v3338 = vunpack.c.0.s8 %v3337
        %v3339 = vlaneseq
        %v3340 = vshrl.u32 %v3339, 7
        %v3341 = vsub.s32 %v3338, %v3340
        %v3342 = vrot.slane %v3334, %v3341
        %v3344 = vunpack.c.l.s4 1983009808
        %v3345 = vunpack.c.0.s8 %v3344
        %v3346 = vlaneseq
        %v3347 = vshrl.u32 %v3346, 7
        %v3348 = vsub.s32 %v3345, %v3347
        %v3349 = vrot.slane %v3335, %v3348
        %v3350 = vcombine.low %v3059, %v3155
        %v3351 = vcombine.high %v3059, %v3155
        %v3353 = vunpack.c.l.s4 1983009808
        %v3354 = vunpack.c.0.s8 %v3353
        %v3355 = vlaneseq
        %v3356 = vshrl.u32 %v3355, 7
        %v3357 = vsub.s32 %v3354, %v3356
        %v3358 = vrot.slane %v3350, %v3357
        %v3360 = vunpack.c.l.s4 1983009808
        %v3361 = vunpack.c.0.s8 %v3360
        %v3362 = vlaneseq
        %v3363 = vshrl.u32 %v3362, 7
        %v3364 = vsub.s32 %v3361, %v3363
        %v3365 = vrot.slane %v3351, %v3364
        %v3366 = vcombine.low %v3342, %v3358
        %v3367 = vcombine.high %v3342, %v3358
        %v3369 = vunpack.c.l.s4 1934713408
        %v3370 = vunpack.c.0.s8 %v3369
        %v3371 = vlaneseq
        %v3372 = vshrl.u32 %v3371, 7
        %v3373 = vsub.s32 %v3370, %v3372
        %v3374 = vrot.slane %v3366, %v3373
        %v3376 = vunpack.c.l.s4 1934713408
        %v3377 = vunpack.c.0.s8 %v3376
        %v3378 = vlaneseq
        %v3379 = vshrl.u32 %v3378, 7
        %v3380 = vsub.s32 %v3377, %v3379
        %v3381 = vrot.slane %v3367, %v3380
        %v3382 = vcombine.low %v3349, %v3365
        %v3383 = vcombine.high %v3349, %v3365
        %v3385 = vunpack.c.l.s4 1934713408
        %v3386 = vunpack.c.0.s8 %v3385
        %v3387 = vlaneseq
        %v3388 = vshrl.u32 %v3387, 7
        %v3389 = vsub.s32 %v3386, %v3388
        %v3390 = vrot.slane %v3382, %v3389
        %v3392 = vunpack.c.l.s4 1934713408
        %v3393 = vunpack.c.0.s8 %v3392
        %v3394 = vlaneseq
        %v3395 = vshrl.u32 %v3394, 7
        %v3396 = vsub.s32 %v3393, %v3395
        %v3397 = vrot.slane %v3383, %v3396
        %v3398 = vcombine.high %v3374, 0.0
        %v3399 = vcombine.high %v3381, 0.0
        %v3400 = vcombine.high %v3390, 0.0
        %v3401 = vcombine.high %v3397, 0.0
        %v3402 = vcombine.low %v574, %v3109
        %v3403 = vcombine.high %v574, %v3109
        %v3405 = vunpack.c.l.s4 1983009808
        %v3406 = vunpack.c.0.s8 %v3405
        %v3407 = vlaneseq
        %v3408 = vshrl.u32 %v3407, 7
        %v3409 = vsub.s32 %v3406, %v3408
        %v3410 = vrot.slane %v3402, %v3409
        %v3412 = vunpack.c.l.s4 1983009808
        %v3413 = vunpack.c.0.s8 %v3412
        %v3414 = vlaneseq
        %v3415 = vshrl.u32 %v3414, 7
        %v3416 = vsub.s32 %v3413, %v3415
        %v3417 = vrot.slane %v3403, %v3416
        %v3418 = vcombine.low %v3061, %v3157
        %v3419 = vcombine.high %v3061, %v3157
        %v3421 = vunpack.c.l.s4 1983009808
        %v3422 = vunpack.c.0.s8 %v3421
        %v3423 = vlaneseq
        %v3424 = vshrl.u32 %v3423, 7
        %v3425 = vsub.s32 %v3422, %v3424
        %v3426 = vrot.slane %v3418, %v3425
        %v3428 = vunpack.c.l.s4 1983009808
        %v3429 = vunpack.c.0.s8 %v3428
        %v3430 = vlaneseq
        %v3431 = vshrl.u32 %v3430, 7
        %v3432 = vsub.s32 %v3429, %v3431
        %v3433 = vrot.slane %v3419, %v3432
        %v3434 = vcombine.low %v3410, %v3426
        %v3435 = vcombine.high %v3410, %v3426
        %v3437 = vunpack.c.l.s4 1934713408
        %v3438 = vunpack.c.0.s8 %v3437
        %v3439 = vlaneseq
        %v3440 = vshrl.u32 %v3439, 7
        %v3441 = vsub.s32 %v3438, %v3440
        %v3442 = vrot.slane %v3434, %v3441
        %v3444 = vunpack.c.l.s4 1934713408
        %v3445 = vunpack.c.0.s8 %v3444
        %v3446 = vlaneseq
        %v3447 = vshrl.u32 %v3446, 7
        %v3448 = vsub.s32 %v3445, %v3447
        %v3449 = vrot.slane %v3435, %v3448
        %v3450 = vcombine.low %v3417, %v3433
        %v3451 = vcombine.high %v3417, %v3433
        %v3453 = vunpack.c.l.s4 1934713408
        %v3454 = vunpack.c.0.s8 %v3453
        %v3455 = vlaneseq
        %v3456 = vshrl.u32 %v3455, 7
        %v3457 = vsub.s32 %v3454, %v3456
        %v3458 = vrot.slane %v3450, %v3457
        %v3460 = vunpack.c.l.s4 1934713408
        %v3461 = vunpack.c.0.s8 %v3460
        %v3462 = vlaneseq
        %v3463 = vshrl.u32 %v3462, 7
        %v3464 = vsub.s32 %v3461, %v3463
        %v3465 = vrot.slane %v3451, %v3464
        %v3466 = vcombine.high %v3442, 0.0
        %v3467 = vcombine.high %v3449, 0.0
        %v3468 = vcombine.high %v3458, 0.0
        %v3469 = vcombine.high %v3465, 0.0
        %v3470 = vcombine.low %v579, %v3111
        %v3471 = vcombine.high %v579, %v3111
        %v3473 = vunpack.c.l.s4 1983009808
        %v3474 = vunpack.c.0.s8 %v3473
        %v3475 = vlaneseq
        %v3476 = vshrl.u32 %v3475, 7
        %v3477 = vsub.s32 %v3474, %v3476
        %v3478 = vrot.slane %v3470, %v3477
        %v3480 = vunpack.c.l.s4 1983009808
        %v3481 = vunpack.c.0.s8 %v3480
        %v3482 = vlaneseq
        %v3483 = vshrl.u32 %v3482, 7
        %v3484 = vsub.s32 %v3481, %v3483
        %v3485 = vrot.slane %v3471, %v3484
        %v3486 = vcombine.low %v3063, %v3159
        %v3487 = vcombine.high %v3063, %v3159
        %v3489 = vunpack.c.l.s4 1983009808
        %v3490 = vunpack.c.0.s8 %v3489
        %v3491 = vlaneseq
        %v3492 = vshrl.u32 %v3491, 7
        %v3493 = vsub.s32 %v3490, %v3492
        %v3494 = vrot.slane %v3486, %v3493
        %v3496 = vunpack.c.l.s4 1983009808
        %v3497 = vunpack.c.0.s8 %v3496
        %v3498 = vlaneseq
        %v3499 = vshrl.u32 %v3498, 7
        %v3500 = vsub.s32 %v3497, %v3499
        %v3501 = vrot.slane %v3487, %v3500
        %v3502 = vcombine.low %v3478, %v3494
        %v3503 = vcombine.high %v3478, %v3494
        %v3505 = vunpack.c.l.s4 1934713408
        %v3506 = vunpack.c.0.s8 %v3505
        %v3507 = vlaneseq
        %v3508 = vshrl.u32 %v3507, 7
        %v3509 = vsub.s32 %v3506, %v3508
        %v3510 = vrot.slane %v3502, %v3509
        %v3512 = vunpack.c.l.s4 1934713408
        %v3513 = vunpack.c.0.s8 %v3512
        %v3514 = vlaneseq
        %v3515 = vshrl.u32 %v3514, 7
        %v3516 = vsub.s32 %v3513, %v3515
        %v3517 = vrot.slane %v3503, %v3516
        %v3518 = vcombine.low %v3485, %v3501
        %v3519 = vcombine.high %v3485, %v3501
        %v3521 = vunpack.c.l.s4 1934713408
        %v3522 = vunpack.c.0.s8 %v3521
        %v3523 = vlaneseq
        %v3524 = vshrl.u32 %v3523, 7
        %v3525 = vsub.s32 %v3522, %v3524
        %v3526 = vrot.slane %v3518, %v3525
        %v3528 = vunpack.c.l.s4 1934713408
        %v3529 = vunpack.c.0.s8 %v3528
        %v3530 = vlaneseq
        %v3531 = vshrl.u32 %v3530, 7
        %v3532 = vsub.s32 %v3529, %v3531
        %v3533 = vrot.slane %v3519, %v3532
        %v3534 = vcombine.high %v3510, 0.0
        %v3535 = vcombine.high %v3517, 0.0
        %v3536 = vcombine.high %v3526, 0.0
        %v3537 = vcombine.high %v3533, 0.0
        %v3538 = vcombine.low %v584, %v3113
        %v3539 = vcombine.high %v584, %v3113
        %v3541 = vunpack.c.l.s4 1983009808
        %v3542 = vunpack.c.0.s8 %v3541
        %v3543 = vlaneseq
        %v3544 = vshrl.u32 %v3543, 7
        %v3545 = vsub.s32 %v3542, %v3544
        %v3546 = vrot.slane %v3538, %v3545
        %v3548 = vunpack.c.l.s4 1983009808
        %v3549 = vunpack.c.0.s8 %v3548
        %v3550 = vlaneseq
        %v3551 = vshrl.u32 %v3550, 7
        %v3552 = vsub.s32 %v3549, %v3551
        %v3553 = vrot.slane %v3539, %v3552
        %v3554 = vcombine.low %v3065, %v3161
        %v3555 = vcombine.high %v3065, %v3161
        %v3557 = vunpack.c.l.s4 1983009808
        %v3558 = vunpack.c.0.s8 %v3557
        %v3559 = vlaneseq
        %v3560 = vshrl.u32 %v3559, 7
        %v3561 = vsub.s32 %v3558, %v3560
        %v3562 = vrot.slane %v3554, %v3561
        %v3564 = vunpack.c.l.s4 1983009808
        %v3565 = vunpack.c.0.s8 %v3564
        %v3566 = vlaneseq
        %v3567 = vshrl.u32 %v3566, 7
        %v3568 = vsub.s32 %v3565, %v3567
        %v3569 = vrot.slane %v3555, %v3568
        %v3570 = vcombine.low %v3546, %v3562
        %v3571 = vcombine.high %v3546, %v3562
        %v3573 = vunpack.c.l.s4 1934713408
        %v3574 = vunpack.c.0.s8 %v3573
        %v3575 = vlaneseq
        %v3576 = vshrl.u32 %v3575, 7
        %v3577 = vsub.s32 %v3574, %v3576
        %v3578 = vrot.slane %v3570, %v3577
        %v3580 = vunpack.c.l.s4 1934713408
        %v3581 = vunpack.c.0.s8 %v3580
        %v3582 = vlaneseq
        %v3583 = vshrl.u32 %v3582, 7
        %v3584 = vsub.s32 %v3581, %v3583
        %v3585 = vrot.slane %v3571, %v3584
        %v3586 = vcombine.low %v3553, %v3569
        %v3587 = vcombine.high %v3553, %v3569
        %v3589 = vunpack.c.l.s4 1934713408
        %v3590 = vunpack.c.0.s8 %v3589
        %v3591 = vlaneseq
        %v3592 = vshrl.u32 %v3591, 7
        %v3593 = vsub.s32 %v3590, %v3592
        %v3594 = vrot.slane %v3586, %v3593
        %v3596 = vunpack.c.l.s4 1934713408
        %v3597 = vunpack.c.0.s8 %v3596
        %v3598 = vlaneseq
        %v3599 = vshrl.u32 %v3598, 7
        %v3600 = vsub.s32 %v3597, %v3599
        %v3601 = vrot.slane %v3587, %v3600
        %v3602 = vcombine.high %v3578, 0.0
        %v3603 = vcombine.high %v3585, 0.0
        %v3604 = vcombine.high %v3594, 0.0
        %v3605 = vcombine.high %v3601, 0.0
        %v3606 = vcombine.low %v589, %v3115
        %v3607 = vcombine.high %v589, %v3115
        %v3609 = vunpack.c.l.s4 1983009808
        %v3610 = vunpack.c.0.s8 %v3609
        %v3611 = vlaneseq
        %v3612 = vshrl.u32 %v3611, 7
        %v3613 = vsub.s32 %v3610, %v3612
        %v3614 = vrot.slane %v3606, %v3613
        %v3616 = vunpack.c.l.s4 1983009808
        %v3617 = vunpack.c.0.s8 %v3616
        %v3618 = vlaneseq
        %v3619 = vshrl.u32 %v3618, 7
        %v3620 = vsub.s32 %v3617, %v3619
        %v3621 = vrot.slane %v3607, %v3620
        %v3622 = vcombine.low %v3067, %v3163
        %v3623 = vcombine.high %v3067, %v3163
        %v3625 = vunpack.c.l.s4 1983009808
        %v3626 = vunpack.c.0.s8 %v3625
        %v3627 = vlaneseq
        %v3628 = vshrl.u32 %v3627, 7
        %v3629 = vsub.s32 %v3626, %v3628
        %v3630 = vrot.slane %v3622, %v3629
        %v3632 = vunpack.c.l.s4 1983009808
        %v3633 = vunpack.c.0.s8 %v3632
        %v3634 = vlaneseq
        %v3635 = vshrl.u32 %v3634, 7
        %v3636 = vsub.s32 %v3633, %v3635
        %v3637 = vrot.slane %v3623, %v3636
        %v3638 = vcombine.low %v3614, %v3630
        %v3639 = vcombine.high %v3614, %v3630
        %v3641 = vunpack.c.l.s4 1934713408
        %v3642 = vunpack.c.0.s8 %v3641
        %v3643 = vlaneseq
        %v3644 = vshrl.u32 %v3643, 7
        %v3645 = vsub.s32 %v3642, %v3644
        %v3646 = vrot.slane %v3638, %v3645
        %v3648 = vunpack.c.l.s4 1934713408
        %v3649 = vunpack.c.0.s8 %v3648
        %v3650 = vlaneseq
        %v3651 = vshrl.u32 %v3650, 7
        %v3652 = vsub.s32 %v3649, %v3651
        %v3653 = vrot.slane %v3639, %v3652
        %v3654 = vcombine.low %v3621, %v3637
        %v3655 = vcombine.high %v3621, %v3637
        %v3657 = vunpack.c.l.s4 1934713408
        %v3658 = vunpack.c.0.s8 %v3657
        %v3659 = vlaneseq
        %v3660 = vshrl.u32 %v3659, 7
        %v3661 = vsub.s32 %v3658, %v3660
        %v3662 = vrot.slane %v3654, %v3661
        %v3664 = vunpack.c.l.s4 1934713408
        %v3665 = vunpack.c.0.s8 %v3664
        %v3666 = vlaneseq
        %v3667 = vshrl.u32 %v3666, 7
        %v3668 = vsub.s32 %v3665, %v3667
        %v3669 = vrot.slane %v3655, %v3668
        %v3670 = vcombine.high %v3646, 0.0
        %v3671 = vcombine.high %v3653, 0.0
        %v3672 = vcombine.high %v3662, 0.0
        %v3673 = vcombine.high %v3669, 0.0
        %v3674 = vcombine.low %v594, %v3117
        %v3675 = vcombine.high %v594, %v3117
        %v3677 = vunpack.c.l.s4 1983009808
        %v3678 = vunpack.c.0.s8 %v3677
        %v3679 = vlaneseq
        %v3680 = vshrl.u32 %v3679, 7
        %v3681 = vsub.s32 %v3678, %v3680
        %v3682 = vrot.slane %v3674, %v3681
        %v3684 = vunpack.c.l.s4 1983009808
        %v3685 = vunpack.c.0.s8 %v3684
        %v3686 = vlaneseq
        %v3687 = vshrl.u32 %v3686, 7
        %v3688 = vsub.s32 %v3685, %v3687
        %v3689 = vrot.slane %v3675, %v3688
        %v3690 = vcombine.low %v3069, %v3165
        %v3691 = vcombine.high %v3069, %v3165
        %v3693 = vunpack.c.l.s4 1983009808
        %v3694 = vunpack.c.0.s8 %v3693
        %v3695 = vlaneseq
        %v3696 = vshrl.u32 %v3695, 7
        %v3697 = vsub.s32 %v3694, %v3696
        %v3698 = vrot.slane %v3690, %v3697
        %v3700 = vunpack.c.l.s4 1983009808
        %v3701 = vunpack.c.0.s8 %v3700
        %v3702 = vlaneseq
        %v3703 = vshrl.u32 %v3702, 7
        %v3704 = vsub.s32 %v3701, %v3703
        %v3705 = vrot.slane %v3691, %v3704
        %v3706 = vcombine.low %v3682, %v3698
        %v3707 = vcombine.high %v3682, %v3698
        %v3709 = vunpack.c.l.s4 1934713408
        %v3710 = vunpack.c.0.s8 %v3709
        %v3711 = vlaneseq
        %v3712 = vshrl.u32 %v3711, 7
        %v3713 = vsub.s32 %v3710, %v3712
        %v3714 = vrot.slane %v3706, %v3713
        %v3716 = vunpack.c.l.s4 1934713408
        %v3717 = vunpack.c.0.s8 %v3716
        %v3718 = vlaneseq
        %v3719 = vshrl.u32 %v3718, 7
        %v3720 = vsub.s32 %v3717, %v3719
        %v3721 = vrot.slane %v3707, %v3720
        %v3722 = vcombine.low %v3689, %v3705
        %v3723 = vcombine.high %v3689, %v3705
        %v3725 = vunpack.c.l.s4 1934713408
        %v3726 = vunpack.c.0.s8 %v3725
        %v3727 = vlaneseq
        %v3728 = vshrl.u32 %v3727, 7
        %v3729 = vsub.s32 %v3726, %v3728
        %v3730 = vrot.slane %v3722, %v3729
        %v3732 = vunpack.c.l.s4 1934713408
        %v3733 = vunpack.c.0.s8 %v3732
        %v3734 = vlaneseq
        %v3735 = vshrl.u32 %v3734, 7
        %v3736 = vsub.s32 %v3733, %v3735
        %v3737 = vrot.slane %v3723, %v3736
        %v3738 = vcombine.high %v3714, 0.0
        %v3739 = vcombine.high %v3721, 0.0
        %v3740 = vcombine.high %v3730, 0.0
        %v3741 = vcombine.high %v3737, 0.0
        %v3742 = vcombine.low %v599, %v3119
        %v3743 = vcombine.high %v599, %v3119
        %v3745 = vunpack.c.l.s4 1983009808
        %v3746 = vunpack.c.0.s8 %v3745
        %v3747 = vlaneseq
        %v3748 = vshrl.u32 %v3747, 7
        %v3749 = vsub.s32 %v3746, %v3748
        %v3750 = vrot.slane %v3742, %v3749
        %v3752 = vunpack.c.l.s4 1983009808
        %v3753 = vunpack.c.0.s8 %v3752
        %v3754 = vlaneseq
        %v3755 = vshrl.u32 %v3754, 7
        %v3756 = vsub.s32 %v3753, %v3755
        %v3757 = vrot.slane %v3743, %v3756
        %v3758 = vcombine.low %v3071, %v3167
        %v3759 = vcombine.high %v3071, %v3167
        %v3761 = vunpack.c.l.s4 1983009808
        %v3762 = vunpack.c.0.s8 %v3761
        %v3763 = vlaneseq
        %v3764 = vshrl.u32 %v3763, 7
        %v3765 = vsub.s32 %v3762, %v3764
        %v3766 = vrot.slane %v3758, %v3765
        %v3768 = vunpack.c.l.s4 1983009808
        %v3769 = vunpack.c.0.s8 %v3768
        %v3770 = vlaneseq
        %v3771 = vshrl.u32 %v3770, 7
        %v3772 = vsub.s32 %v3769, %v3771
        %v3773 = vrot.slane %v3759, %v3772
        %v3774 = vcombine.low %v3750, %v3766
        %v3775 = vcombine.high %v3750, %v3766
        %v3777 = vunpack.c.l.s4 1934713408
        %v3778 = vunpack.c.0.s8 %v3777
        %v3779 = vlaneseq
        %v3780 = vshrl.u32 %v3779, 7
        %v3781 = vsub.s32 %v3778, %v3780
        %v3782 = vrot.slane %v3774, %v3781
        %v3784 = vunpack.c.l.s4 1934713408
        %v3785 = vunpack.c.0.s8 %v3784
        %v3786 = vlaneseq
        %v3787 = vshrl.u32 %v3786, 7
        %v3788 = vsub.s32 %v3785, %v3787
        %v3789 = vrot.slane %v3775, %v3788
        %v3790 = vcombine.low %v3757, %v3773
        %v3791 = vcombine.high %v3757, %v3773
        %v3793 = vunpack.c.l.s4 1934713408
        %v3794 = vunpack.c.0.s8 %v3793
        %v3795 = vlaneseq
        %v3796 = vshrl.u32 %v3795, 7
        %v3797 = vsub.s32 %v3794, %v3796
        %v3798 = vrot.slane %v3790, %v3797
        %v3800 = vunpack.c.l.s4 1934713408
        %v3801 = vunpack.c.0.s8 %v3800
        %v3802 = vlaneseq
        %v3803 = vshrl.u32 %v3802, 7
        %v3804 = vsub.s32 %v3801, %v3803
        %v3805 = vrot.slane %v3791, %v3804
        %v3806 = vcombine.high %v3782, 0.0
        %v3807 = vcombine.high %v3789, 0.0
        %v3808 = vcombine.high %v3798, 0.0
        %v3809 = vcombine.high %v3805, 0.0
        %v3810 = vcombine.low %v604, %v3121
        %v3811 = vcombine.high %v604, %v3121
        %v3813 = vunpack.c.l.s4 1983009808
        %v3814 = vunpack.c.0.s8 %v3813
        %v3815 = vlaneseq
        %v3816 = vshrl.u32 %v3815, 7
        %v3817 = vsub.s32 %v3814, %v3816
        %v3818 = vrot.slane %v3810, %v3817
        %v3820 = vunpack.c.l.s4 1983009808
        %v3821 = vunpack.c.0.s8 %v3820
        %v3822 = vlaneseq
        %v3823 = vshrl.u32 %v3822, 7
        %v3824 = vsub.s32 %v3821, %v3823
        %v3825 = vrot.slane %v3811, %v3824
        %v3826 = vcombine.low %v3073, %v3169
        %v3827 = vcombine.high %v3073, %v3169
        %v3829 = vunpack.c.l.s4 1983009808
        %v3830 = vunpack.c.0.s8 %v3829
        %v3831 = vlaneseq
        %v3832 = vshrl.u32 %v3831, 7
        %v3833 = vsub.s32 %v3830, %v3832
        %v3834 = vrot.slane %v3826, %v3833
        %v3836 = vunpack.c.l.s4 1983009808
        %v3837 = vunpack.c.0.s8 %v3836
        %v3838 = vlaneseq
        %v3839 = vshrl.u32 %v3838, 7
        %v3840 = vsub.s32 %v3837, %v3839
        %v3841 = vrot.slane %v3827, %v3840
        %v3842 = vcombine.low %v3818, %v3834
        %v3843 = vcombine.high %v3818, %v3834
        %v3845 = vunpack.c.l.s4 1934713408
        %v3846 = vunpack.c.0.s8 %v3845
        %v3847 = vlaneseq
        %v3848 = vshrl.u32 %v3847, 7
        %v3849 = vsub.s32 %v3846, %v3848
        %v3850 = vrot.slane %v3842, %v3849
        %v3852 = vunpack.c.l.s4 1934713408
        %v3853 = vunpack.c.0.s8 %v3852
        %v3854 = vlaneseq
        %v3855 = vshrl.u32 %v3854, 7
        %v3856 = vsub.s32 %v3853, %v3855
        %v3857 = vrot.slane %v3843, %v3856
        %v3858 = vcombine.low %v3825, %v3841
        %v3859 = vcombine.high %v3825, %v3841
        %v3861 = vunpack.c.l.s4 1934713408
        %v3862 = vunpack.c.0.s8 %v3861
        %v3863 = vlaneseq
        %v3864 = vshrl.u32 %v3863, 7
        %v3865 = vsub.s32 %v3862, %v3864
        %v3866 = vrot.slane %v3858, %v3865
        %v3868 = vunpack.c.l.s4 1934713408
        %v3869 = vunpack.c.0.s8 %v3868
        %v3870 = vlaneseq
        %v3871 = vshrl.u32 %v3870, 7
        %v3872 = vsub.s32 %v3869, %v3871
        %v3873 = vrot.slane %v3859, %v3872
        %v3874 = vcombine.high %v3850, 0.0
        %v3875 = vcombine.high %v3857, 0.0
        %v3876 = vcombine.high %v3866, 0.0
        %v3877 = vcombine.high %v3873, 0.0
        %v3878 = vcombine.low %v609, %v3123
        %v3879 = vcombine.high %v609, %v3123
        %v3881 = vunpack.c.l.s4 1983009808
        %v3882 = vunpack.c.0.s8 %v3881
        %v3883 = vlaneseq
        %v3884 = vshrl.u32 %v3883, 7
        %v3885 = vsub.s32 %v3882, %v3884
        %v3886 = vrot.slane %v3878, %v3885
        %v3888 = vunpack.c.l.s4 1983009808
        %v3889 = vunpack.c.0.s8 %v3888
        %v3890 = vlaneseq
        %v3891 = vshrl.u32 %v3890, 7
        %v3892 = vsub.s32 %v3889, %v3891
        %v3893 = vrot.slane %v3879, %v3892
        %v3894 = vcombine.low %v3075, %v3171
        %v3895 = vcombine.high %v3075, %v3171
        %v3897 = vunpack.c.l.s4 1983009808
        %v3898 = vunpack.c.0.s8 %v3897
        %v3899 = vlaneseq
        %v3900 = vshrl.u32 %v3899, 7
        %v3901 = vsub.s32 %v3898, %v3900
        %v3902 = vrot.slane %v3894, %v3901
        %v3904 = vunpack.c.l.s4 1983009808
        %v3905 = vunpack.c.0.s8 %v3904
        %v3906 = vlaneseq
        %v3907 = vshrl.u32 %v3906, 7
        %v3908 = vsub.s32 %v3905, %v3907
        %v3909 = vrot.slane %v3895, %v3908
        %v3910 = vcombine.low %v3886, %v3902
        %v3911 = vcombine.high %v3886, %v3902
        %v3913 = vunpack.c.l.s4 1934713408
        %v3914 = vunpack.c.0.s8 %v3913
        %v3915 = vlaneseq
        %v3916 = vshrl.u32 %v3915, 7
        %v3917 = vsub.s32 %v3914, %v3916
        %v3918 = vrot.slane %v3910, %v3917
        %v3920 = vunpack.c.l.s4 1934713408
        %v3921 = vunpack.c.0.s8 %v3920
        %v3922 = vlaneseq
        %v3923 = vshrl.u32 %v3922, 7
        %v3924 = vsub.s32 %v3921, %v3923
        %v3925 = vrot.slane %v3911, %v3924
        %v3926 = vcombine.low %v3893, %v3909
        %v3927 = vcombine.high %v3893, %v3909
        %v3929 = vunpack.c.l.s4 1934713408
        %v3930 = vunpack.c.0.s8 %v3929
        %v3931 = vlaneseq
        %v3932 = vshrl.u32 %v3931, 7
        %v3933 = vsub.s32 %v3930, %v3932
        %v3934 = vrot.slane %v3926, %v3933
        %v3936 = vunpack.c.l.s4 1934713408
        %v3937 = vunpack.c.0.s8 %v3936
        %v3938 = vlaneseq
        %v3939 = vshrl.u32 %v3938, 7
        %v3940 = vsub.s32 %v3937, %v3939
        %v3941 = vrot.slane %v3927, %v3940
        %v3942 = vcombine.high %v3918, 0.0
        %v3943 = vcombine.high %v3925, 0.0
        %v3944 = vcombine.high %v3934, 0.0
        %v3945 = vcombine.high %v3941, 0.0
        %v3946 = vcombine.low %v614, %v3125
        %v3947 = vcombine.high %v614, %v3125
        %v3949 = vunpack.c.l.s4 1983009808
        %v3950 = vunpack.c.0.s8 %v3949
        %v3951 = vlaneseq
        %v3952 = vshrl.u32 %v3951, 7
        %v3953 = vsub.s32 %v3950, %v3952
        %v3954 = vrot.slane %v3946, %v3953
        %v3956 = vunpack.c.l.s4 1983009808
        %v3957 = vunpack.c.0.s8 %v3956
        %v3958 = vlaneseq
        %v3959 = vshrl.u32 %v3958, 7
        %v3960 = vsub.s32 %v3957, %v3959
        %v3961 = vrot.slane %v3947, %v3960
        %v3962 = vcombine.low %v3077, %v3173
        %v3963 = vcombine.high %v3077, %v3173
        %v3965 = vunpack.c.l.s4 1983009808
        %v3966 = vunpack.c.0.s8 %v3965
        %v3967 = vlaneseq
        %v3968 = vshrl.u32 %v3967, 7
        %v3969 = vsub.s32 %v3966, %v3968
        %v3970 = vrot.slane %v3962, %v3969
        %v3972 = vunpack.c.l.s4 1983009808
        %v3973 = vunpack.c.0.s8 %v3972
        %v3974 = vlaneseq
        %v3975 = vshrl.u32 %v3974, 7
        %v3976 = vsub.s32 %v3973, %v3975
        %v3977 = vrot.slane %v3963, %v3976
        %v3978 = vcombine.low %v3954, %v3970
        %v3979 = vcombine.high %v3954, %v3970
        %v3981 = vunpack.c.l.s4 1934713408
        %v3982 = vunpack.c.0.s8 %v3981
        %v3983 = vlaneseq
        %v3984 = vshrl.u32 %v3983, 7
        %v3985 = vsub.s32 %v3982, %v3984
        %v3986 = vrot.slane %v3978, %v3985
        %v3988 = vunpack.c.l.s4 1934713408
        %v3989 = vunpack.c.0.s8 %v3988
        %v3990 = vlaneseq
        %v3991 = vshrl.u32 %v3990, 7
        %v3992 = vsub.s32 %v3989, %v3991
        %v3993 = vrot.slane %v3979, %v3992
        %v3994 = vcombine.low %v3961, %v3977
        %v3995 = vcombine.high %v3961, %v3977
        %v3997 = vunpack.c.l.s4 1934713408
        %v3998 = vunpack.c.0.s8 %v3997
        %v3999 = vlaneseq
        %v4000 = vshrl.u32 %v3999, 7
        %v4001 = vsub.s32 %v3998, %v4000
        %v4002 = vrot.slane %v3994, %v4001
        %v4004 = vunpack.c.l.s4 1934713408
        %v4005 = vunpack.c.0.s8 %v4004
        %v4006 = vlaneseq
        %v4007 = vshrl.u32 %v4006, 7
        %v4008 = vsub.s32 %v4005, %v4007
        %v4009 = vrot.slane %v3995, %v4008
        %v4010 = vcombine.high %v3986, 0.0
        %v4011 = vcombine.high %v3993, 0.0
        %v4012 = vcombine.high %v4002, 0.0
        %v4013 = vcombine.high %v4009, 0.0
        %v4014 = vcombine.low %v619, %v3127
        %v4015 = vcombine.high %v619, %v3127
        %v4017 = vunpack.c.l.s4 1983009808
        %v4018 = vunpack.c.0.s8 %v4017
        %v4019 = vlaneseq
        %v4020 = vshrl.u32 %v4019, 7
        %v4021 = vsub.s32 %v4018, %v4020
        %v4022 = vrot.slane %v4014, %v4021
        %v4024 = vunpack.c.l.s4 1983009808
        %v4025 = vunpack.c.0.s8 %v4024
        %v4026 = vlaneseq
        %v4027 = vshrl.u32 %v4026, 7
        %v4028 = vsub.s32 %v4025, %v4027
        %v4029 = vrot.slane %v4015, %v4028
        %v4030 = vcombine.low %v3079, %v3175
        %v4031 = vcombine.high %v3079, %v3175
        %v4033 = vunpack.c.l.s4 1983009808
        %v4034 = vunpack.c.0.s8 %v4033
        %v4035 = vlaneseq
        %v4036 = vshrl.u32 %v4035, 7
        %v4037 = vsub.s32 %v4034, %v4036
        %v4038 = vrot.slane %v4030, %v4037
        %v4040 = vunpack.c.l.s4 1983009808
        %v4041 = vunpack.c.0.s8 %v4040
        %v4042 = vlaneseq
        %v4043 = vshrl.u32 %v4042, 7
        %v4044 = vsub.s32 %v4041, %v4043
        %v4045 = vrot.slane %v4031, %v4044
        %v4046 = vcombine.low %v4022, %v4038
        %v4047 = vcombine.high %v4022, %v4038
        %v4049 = vunpack.c.l.s4 1934713408
        %v4050 = vunpack.c.0.s8 %v4049
        %v4051 = vlaneseq
        %v4052 = vshrl.u32 %v4051, 7
        %v4053 = vsub.s32 %v4050, %v4052
        %v4054 = vrot.slane %v4046, %v4053
        %v4056 = vunpack.c.l.s4 1934713408
        %v4057 = vunpack.c.0.s8 %v4056
        %v4058 = vlaneseq
        %v4059 = vshrl.u32 %v4058, 7
        %v4060 = vsub.s32 %v4057, %v4059
        %v4061 = vrot.slane %v4047, %v4060
        %v4062 = vcombine.low %v4029, %v4045
        %v4063 = vcombine.high %v4029, %v4045
        %v4065 = vunpack.c.l.s4 1934713408
        %v4066 = vunpack.c.0.s8 %v4065
        %v4067 = vlaneseq
        %v4068 = vshrl.u32 %v4067, 7
        %v4069 = vsub.s32 %v4066, %v4068
        %v4070 = vrot.slane %v4062, %v4069
        %v4072 = vunpack.c.l.s4 1934713408
        %v4073 = vunpack.c.0.s8 %v4072
        %v4074 = vlaneseq
        %v4075 = vshrl.u32 %v4074, 7
        %v4076 = vsub.s32 %v4073, %v4075
        %v4077 = vrot.slane %v4063, %v4076
        %v4078 = vcombine.high %v4054, 0.0
        %v4079 = vcombine.high %v4061, 0.0
        %v4080 = vcombine.high %v4070, 0.0
        %v4081 = vcombine.high %v4077, 0.0
        %v4082 = vcombine.low %v624, %v3129
        %v4083 = vcombine.high %v624, %v3129
        %v4085 = vunpack.c.l.s4 1983009808
        %v4086 = vunpack.c.0.s8 %v4085
        %v4087 = vlaneseq
        %v4088 = vshrl.u32 %v4087, 7
        %v4089 = vsub.s32 %v4086, %v4088
        %v4090 = vrot.slane %v4082, %v4089
        %v4092 = vunpack.c.l.s4 1983009808
        %v4093 = vunpack.c.0.s8 %v4092
        %v4094 = vlaneseq
        %v4095 = vshrl.u32 %v4094, 7
        %v4096 = vsub.s32 %v4093, %v4095
        %v4097 = vrot.slane %v4083, %v4096
        %v4098 = vcombine.low %v3081, %v3177
        %v4099 = vcombine.high %v3081, %v3177
        %v4101 = vunpack.c.l.s4 1983009808
        %v4102 = vunpack.c.0.s8 %v4101
        %v4103 = vlaneseq
        %v4104 = vshrl.u32 %v4103, 7
        %v4105 = vsub.s32 %v4102, %v4104
        %v4106 = vrot.slane %v4098, %v4105
        %v4108 = vunpack.c.l.s4 1983009808
        %v4109 = vunpack.c.0.s8 %v4108
        %v4110 = vlaneseq
        %v4111 = vshrl.u32 %v4110, 7
        %v4112 = vsub.s32 %v4109, %v4111
        %v4113 = vrot.slane %v4099, %v4112
        %v4114 = vcombine.low %v4090, %v4106
        %v4115 = vcombine.high %v4090, %v4106
        %v4117 = vunpack.c.l.s4 1934713408
        %v4118 = vunpack.c.0.s8 %v4117
        %v4119 = vlaneseq
        %v4120 = vshrl.u32 %v4119, 7
        %v4121 = vsub.s32 %v4118, %v4120
        %v4122 = vrot.slane %v4114, %v4121
        %v4124 = vunpack.c.l.s4 1934713408
        %v4125 = vunpack.c.0.s8 %v4124
        %v4126 = vlaneseq
        %v4127 = vshrl.u32 %v4126, 7
        %v4128 = vsub.s32 %v4125, %v4127
        %v4129 = vrot.slane %v4115, %v4128
        %v4130 = vcombine.low %v4097, %v4113
        %v4131 = vcombine.high %v4097, %v4113
        %v4133 = vunpack.c.l.s4 1934713408
        %v4134 = vunpack.c.0.s8 %v4133
        %v4135 = vlaneseq
        %v4136 = vshrl.u32 %v4135, 7
        %v4137 = vsub.s32 %v4134, %v4136
        %v4138 = vrot.slane %v4130, %v4137
        %v4140 = vunpack.c.l.s4 1934713408
        %v4141 = vunpack.c.0.s8 %v4140
        %v4142 = vlaneseq
        %v4143 = vshrl.u32 %v4142, 7
        %v4144 = vsub.s32 %v4141, %v4143
        %v4145 = vrot.slane %v4131, %v4144
        %v4146 = vcombine.high %v4122, 0.0
        %v4147 = vcombine.high %v4129, 0.0
        %v4148 = vcombine.high %v4138, 0.0
        %v4149 = vcombine.high %v4145, 0.0
        %v4150 = vcombine.low %v629, %v3131
        %v4151 = vcombine.high %v629, %v3131
        %v4153 = vunpack.c.l.s4 1983009808
        %v4154 = vunpack.c.0.s8 %v4153
        %v4155 = vlaneseq
        %v4156 = vshrl.u32 %v4155, 7
        %v4157 = vsub.s32 %v4154, %v4156
        %v4158 = vrot.slane %v4150, %v4157
        %v4160 = vunpack.c.l.s4 1983009808
        %v4161 = vunpack.c.0.s8 %v4160
        %v4162 = vlaneseq
        %v4163 = vshrl.u32 %v4162, 7
        %v4164 = vsub.s32 %v4161, %v4163
        %v4165 = vrot.slane %v4151, %v4164
        %v4166 = vcombine.low %v3083, %v3179
        %v4167 = vcombine.high %v3083, %v3179
        %v4169 = vunpack.c.l.s4 1983009808
        %v4170 = vunpack.c.0.s8 %v4169
        %v4171 = vlaneseq
        %v4172 = vshrl.u32 %v4171, 7
        %v4173 = vsub.s32 %v4170, %v4172
        %v4174 = vrot.slane %v4166, %v4173
        %v4176 = vunpack.c.l.s4 1983009808
        %v4177 = vunpack.c.0.s8 %v4176
        %v4178 = vlaneseq
        %v4179 = vshrl.u32 %v4178, 7
        %v4180 = vsub.s32 %v4177, %v4179
        %v4181 = vrot.slane %v4167, %v4180
        %v4182 = vcombine.low %v4158, %v4174
        %v4183 = vcombine.high %v4158, %v4174
        %v4185 = vunpack.c.l.s4 1934713408
        %v4186 = vunpack.c.0.s8 %v4185
        %v4187 = vlaneseq
        %v4188 = vshrl.u32 %v4187, 7
        %v4189 = vsub.s32 %v4186, %v4188
        %v4190 = vrot.slane %v4182, %v4189
        %v4192 = vunpack.c.l.s4 1934713408
        %v4193 = vunpack.c.0.s8 %v4192
        %v4194 = vlaneseq
        %v4195 = vshrl.u32 %v4194, 7
        %v4196 = vsub.s32 %v4193, %v4195
        %v4197 = vrot.slane %v4183, %v4196
        %v4198 = vcombine.low %v4165, %v4181
        %v4199 = vcombine.high %v4165, %v4181
        %v4201 = vunpack.c.l.s4 1934713408
        %v4202 = vunpack.c.0.s8 %v4201
        %v4203 = vlaneseq
        %v4204 = vshrl.u32 %v4203, 7
        %v4205 = vsub.s32 %v4202, %v4204
        %v4206 = vrot.slane %v4198, %v4205
        %v4208 = vunpack.c.l.s4 1934713408
        %v4209 = vunpack.c.0.s8 %v4208
        %v4210 = vlaneseq
        %v4211 = vshrl.u32 %v4210, 7
        %v4212 = vsub.s32 %v4209, %v4211
        %v4213 = vrot.slane %v4199, %v4212
        %v4214 = vcombine.high %v4190, 0.0
        %v4215 = vcombine.high %v4197, 0.0
        %v4216 = vcombine.high %v4206, 0.0
        %v4217 = vcombine.high %v4213, 0.0
        %v4218 = vcombine.low %v634, %v3133
        %v4219 = vcombine.high %v634, %v3133
        %v4221 = vunpack.c.l.s4 1983009808
        %v4222 = vunpack.c.0.s8 %v4221
        %v4223 = vlaneseq
        %v4224 = vshrl.u32 %v4223, 7
        %v4225 = vsub.s32 %v4222, %v4224
        %v4226 = vrot.slane %v4218, %v4225
        %v4228 = vunpack.c.l.s4 1983009808
        %v4229 = vunpack.c.0.s8 %v4228
        %v4230 = vlaneseq
        %v4231 = vshrl.u32 %v4230, 7
        %v4232 = vsub.s32 %v4229, %v4231
        %v4233 = vrot.slane %v4219, %v4232
        %v4234 = vcombine.low %v3085, %v3181
        %v4235 = vcombine.high %v3085, %v3181
        %v4237 = vunpack.c.l.s4 1983009808
        %v4238 = vunpack.c.0.s8 %v4237
        %v4239 = vlaneseq
        %v4240 = vshrl.u32 %v4239, 7
        %v4241 = vsub.s32 %v4238, %v4240
        %v4242 = vrot.slane %v4234, %v4241
        %v4244 = vunpack.c.l.s4 1983009808
        %v4245 = vunpack.c.0.s8 %v4244
        %v4246 = vlaneseq
        %v4247 = vshrl.u32 %v4246, 7
        %v4248 = vsub.s32 %v4245, %v4247
        %v4249 = vrot.slane %v4235, %v4248
        %v4250 = vcombine.low %v4226, %v4242
        %v4251 = vcombine.high %v4226, %v4242
        %v4253 = vunpack.c.l.s4 1934713408
        %v4254 = vunpack.c.0.s8 %v4253
        %v4255 = vlaneseq
        %v4256 = vshrl.u32 %v4255, 7
        %v4257 = vsub.s32 %v4254, %v4256
        %v4258 = vrot.slane %v4250, %v4257
        %v4260 = vunpack.c.l.s4 1934713408
        %v4261 = vunpack.c.0.s8 %v4260
        %v4262 = vlaneseq
        %v4263 = vshrl.u32 %v4262, 7
        %v4264 = vsub.s32 %v4261, %v4263
        %v4265 = vrot.slane %v4251, %v4264
        %v4266 = vcombine.low %v4233, %v4249
        %v4267 = vcombine.high %v4233, %v4249
        %v4269 = vunpack.c.l.s4 1934713408
        %v4270 = vunpack.c.0.s8 %v4269
        %v4271 = vlaneseq
        %v4272 = vshrl.u32 %v4271, 7
        %v4273 = vsub.s32 %v4270, %v4272
        %v4274 = vrot.slane %v4266, %v4273
        %v4276 = vunpack.c.l.s4 1934713408
        %v4277 = vunpack.c.0.s8 %v4276
        %v4278 = vlaneseq
        %v4279 = vshrl.u32 %v4278, 7
        %v4280 = vsub.s32 %v4277, %v4279
        %v4281 = vrot.slane %v4267, %v4280
        %v4282 = vcombine.high %v4258, 0.0
        %v4283 = vcombine.high %v4265, 0.0
        %v4284 = vcombine.high %v4274, 0.0
        %v4285 = vcombine.high %v4281, 0.0
        %v4286 = vcombine.low %v3238, %v3245
        %v4288 = vunpack.c.l.s4 1983009808
        %v4289 = vunpack.c.0.s8 %v4288
        %v4290 = vlaneseq
        %v4291 = vshrl.u32 %v4290, 7
        %v4292 = vsub.s32 %v4289, %v4291
        %v4293 = vrot.slane %v4286, %v4292
        %v4294 = vcombine.low %v3262, %v3263
        %v4296 = vunpack.c.l.s4 1983009808
        %v4297 = vunpack.c.0.s8 %v4296
        %v4298 = vlaneseq
        %v4299 = vshrl.u32 %v4298, 7
        %v4300 = vsub.s32 %v4297, %v4299
        %v4301 = vrot.slane %v4294, %v4300
        %v4302 = vcombine.low %v3254, %v3261
        %v4304 = vunpack.c.l.s4 1983009808
        %v4305 = vunpack.c.0.s8 %v4304
        %v4306 = vlaneseq
        %v4307 = vshrl.u32 %v4306, 7
        %v4308 = vsub.s32 %v4305, %v4307
        %v4309 = vrot.slane %v4302, %v4308
        %v4310 = vcombine.low %v3264, %v3265
        %v4312 = vunpack.c.l.s4 1983009808
        %v4313 = vunpack.c.0.s8 %v4312
        %v4314 = vlaneseq
        %v4315 = vshrl.u32 %v4314, 7
        %v4316 = vsub.s32 %v4313, %v4315
        %v4317 = vrot.slane %v4310, %v4316
        %v4318 = vcombine.low %v4293, %v4301
        %v4319 = vcombine.high %v4293, %v4301
        %v4321 = vunpack.c.l.s4 1934713408
        %v4322 = vunpack.c.0.s8 %v4321
        %v4323 = vlaneseq
        %v4324 = vshrl.u32 %v4323, 7
        %v4325 = vsub.s32 %v4322, %v4324
        %v4326 = vrot.slane %v4318, %v4325
        %v4328 = vunpack.c.l.s4 1934713408
        %v4329 = vunpack.c.0.s8 %v4328
        %v4330 = vlaneseq
        %v4331 = vshrl.u32 %v4330, 7
        %v4332 = vsub.s32 %v4329, %v4331
        %v4333 = vrot.slane %v4319, %v4332
        %v4334 = vcombine.low %v4309, %v4317
        %v4335 = vcombine.high %v4309, %v4317
        %v4337 = vunpack.c.l.s4 1934713408
        %v4338 = vunpack.c.0.s8 %v4337
        %v4339 = vlaneseq
        %v4340 = vshrl.u32 %v4339, 7
        %v4341 = vsub.s32 %v4338, %v4340
        %v4342 = vrot.slane %v4334, %v4341
        %v4344 = vunpack.c.l.s4 1934713408
        %v4345 = vunpack.c.0.s8 %v4344
        %v4346 = vlaneseq
        %v4347 = vshrl.u32 %v4346, 7
        %v4348 = vsub.s32 %v4345, %v4347
        %v4349 = vrot.slane %v4335, %v4348
        %v4350 = vcombine.low %v4326, %v4342
        %v4351 = vcombine.high %v4326, %v4342
        %v4352 = vcombine.low %v4333, %v4349
        %v4353 = vcombine.high %v4333, %v4349
        %v4354 = vcombine.low %v3306, %v3313
        %v4356 = vunpack.c.l.s4 1983009808
        %v4357 = vunpack.c.0.s8 %v4356
        %v4358 = vlaneseq
        %v4359 = vshrl.u32 %v4358, 7
        %v4360 = vsub.s32 %v4357, %v4359
        %v4361 = vrot.slane %v4354, %v4360
        %v4362 = vcombine.low %v3330, %v3331
        %v4364 = vunpack.c.l.s4 1983009808
        %v4365 = vunpack.c.0.s8 %v4364
        %v4366 = vlaneseq
        %v4367 = vshrl.u32 %v4366, 7
        %v4368 = vsub.s32 %v4365, %v4367
        %v4369 = vrot.slane %v4362, %v4368
        %v4370 = vcombine.low %v3322, %v3329
        %v4372 = vunpack.c.l.s4 1983009808
        %v4373 = vunpack.c.0.s8 %v4372
        %v4374 = vlaneseq
        %v4375 = vshrl.u32 %v4374, 7
        %v4376 = vsub.s32 %v4373, %v4375
        %v4377 = vrot.slane %v4370, %v4376
        %v4378 = vcombine.low %v3332, %v3333
        %v4380 = vunpack.c.l.s4 1983009808
        %v4381 = vunpack.c.0.s8 %v4380
        %v4382 = vlaneseq
        %v4383 = vshrl.u32 %v4382, 7
        %v4384 = vsub.s32 %v4381, %v4383
        %v4385 = vrot.slane %v4378, %v4384
        %v4386 = vcombine.low %v4361, %v4369
        %v4387 = vcombine.high %v4361, %v4369
        %v4389 = vunpack.c.l.s4 1934713408
        %v4390 = vunpack.c.0.s8 %v4389
        %v4391 = vlaneseq
        %v4392 = vshrl.u32 %v4391, 7
        %v4393 = vsub.s32 %v4390, %v4392
        %v4394 = vrot.slane %v4386, %v4393
        %v4396 = vunpack.c.l.s4 1934713408
        %v4397 = vunpack.c.0.s8 %v4396
        %v4398 = vlaneseq
        %v4399 = vshrl.u32 %v4398, 7
        %v4400 = vsub.s32 %v4397, %v4399
        %v4401 = vrot.slane %v4387, %v4400
        %v4402 = vcombine.low %v4377, %v4385
        %v4403 = vcombine.high %v4377, %v4385
        %v4405 = vunpack.c.l.s4 1934713408
        %v4406 = vunpack.c.0.s8 %v4405
        %v4407 = vlaneseq
        %v4408 = vshrl.u32 %v4407, 7
        %v4409 = vsub.s32 %v4406, %v4408
        %v4410 = vrot.slane %v4402, %v4409
        %v4412 = vunpack.c.l.s4 1934713408
        %v4413 = vunpack.c.0.s8 %v4412
        %v4414 = vlaneseq
        %v4415 = vshrl.u32 %v4414, 7
        %v4416 = vsub.s32 %v4413, %v4415
        %v4417 = vrot.slane %v4403, %v4416
        %v4418 = vcombine.low %v4394, %v4410
        %v4419 = vcombine.high %v4394, %v4410
        %v4420 = vcombine.low %v4401, %v4417
        %v4421 = vcombine.high %v4401, %v4417
        %v4422 = vcombine.low %v3374, %v3381
        %v4424 = vunpack.c.l.s4 1983009808
        %v4425 = vunpack.c.0.s8 %v4424
        %v4426 = vlaneseq
        %v4427 = vshrl.u32 %v4426, 7
        %v4428 = vsub.s32 %v4425, %v4427
        %v4429 = vrot.slane %v4422, %v4428
        %v4430 = vcombine.low %v3398, %v3399
        %v4432 = vunpack.c.l.s4 1983009808
        %v4433 = vunpack.c.0.s8 %v4432
        %v4434 = vlaneseq
        %v4435 = vshrl.u32 %v4434, 7
        %v4436 = vsub.s32 %v4433, %v4435
        %v4437 = vrot.slane %v4430, %v4436
        %v4438 = vcombine.low %v3390, %v3397
        %v4440 = vunpack.c.l.s4 1983009808
        %v4441 = vunpack.c.0.s8 %v4440
        %v4442 = vlaneseq
        %v4443 = vshrl.u32 %v4442, 7
        %v4444 = vsub.s32 %v4441, %v4443
        %v4445 = vrot.slane %v4438, %v4444
        %v4446 = vcombine.low %v3400, %v3401
        %v4448 = vunpack.c.l.s4 1983009808
        %v4449 = vunpack.c.0.s8 %v4448
        %v4450 = vlaneseq
        %v4451 = vshrl.u32 %v4450, 7
        %v4452 = vsub.s32 %v4449, %v4451
        %v4453 = vrot.slane %v4446, %v4452
        %v4454 = vcombine.low %v4429, %v4437
        %v4455 = vcombine.high %v4429, %v4437
        %v4457 = vunpack.c.l.s4 1934713408
        %v4458 = vunpack.c.0.s8 %v4457
        %v4459 = vlaneseq
        %v4460 = vshrl.u32 %v4459, 7
        %v4461 = vsub.s32 %v4458, %v4460
        %v4462 = vrot.slane %v4454, %v4461
        %v4464 = vunpack.c.l.s4 1934713408
        %v4465 = vunpack.c.0.s8 %v4464
        %v4466 = vlaneseq
        %v4467 = vshrl.u32 %v4466, 7
        %v4468 = vsub.s32 %v4465, %v4467
        %v4469 = vrot.slane %v4455, %v4468
        %v4470 = vcombine.low %v4445, %v4453
        %v4471 = vcombine.high %v4445, %v4453
        %v4473 = vunpack.c.l.s4 1934713408
        %v4474 = vunpack.c.0.s8 %v4473
        %v4475 = vlaneseq
        %v4476 = vshrl.u32 %v4475, 7
        %v4477 = vsub.s32 %v4474, %v4476
        %v4478 = vrot.slane %v4470, %v4477
        %v4480 = vunpack.c.l.s4 1934713408
        %v4481 = vunpack.c.0.s8 %v4480
        %v4482 = vlaneseq
        %v4483 = vshrl.u32 %v4482, 7
        %v4484 = vsub.s32 %v4481, %v4483
        %v4485 = vrot.slane %v4471, %v4484
        %v4486 = vcombine.low %v4462, %v4478
        %v4487 = vcombine.high %v4462, %v4478
        %v4488 = vcombine.low %v4469, %v4485
        %v4489 = vcombine.high %v4469, %v4485
        %v4490 = vcombine.low %v3442, %v3449
        %v4492 = vunpack.c.l.s4 1983009808
        %v4493 = vunpack.c.0.s8 %v4492
        %v4494 = vlaneseq
        %v4495 = vshrl.u32 %v4494, 7
        %v4496 = vsub.s32 %v4493, %v4495
        %v4497 = vrot.slane %v4490, %v4496
        %v4498 = vcombine.low %v3466, %v3467
        %v4500 = vunpack.c.l.s4 1983009808
        %v4501 = vunpack.c.0.s8 %v4500
        %v4502 = vlaneseq
        %v4503 = vshrl.u32 %v4502, 7
        %v4504 = vsub.s32 %v4501, %v4503
        %v4505 = vrot.slane %v4498, %v4504
        %v4506 = vcombine.low %v3458, %v3465
        %v4508 = vunpack.c.l.s4 1983009808
        %v4509 = vunpack.c.0.s8 %v4508
        %v4510 = vlaneseq
        %v4511 = vshrl.u32 %v4510, 7
        %v4512 = vsub.s32 %v4509, %v4511
        %v4513 = vrot.slane %v4506, %v4512
        %v4514 = vcombine.low %v3468, %v3469
        %v4516 = vunpack.c.l.s4 1983009808
        %v4517 = vunpack.c.0.s8 %v4516
        %v4518 = vlaneseq
        %v4519 = vshrl.u32 %v4518, 7
        %v4520 = vsub.s32 %v4517, %v4519
        %v4521 = vrot.slane %v4514, %v4520
        %v4522 = vcombine.low %v4497, %v4505
        %v4523 = vcombine.high %v4497, %v4505
        %v4525 = vunpack.c.l.s4 1934713408
        %v4526 = vunpack.c.0.s8 %v4525
        %v4527 = vlaneseq
        %v4528 = vshrl.u32 %v4527, 7
        %v4529 = vsub.s32 %v4526, %v4528
        %v4530 = vrot.slane %v4522, %v4529
        %v4532 = vunpack.c.l.s4 1934713408
        %v4533 = vunpack.c.0.s8 %v4532
        %v4534 = vlaneseq
        %v4535 = vshrl.u32 %v4534, 7
        %v4536 = vsub.s32 %v4533, %v4535
        %v4537 = vrot.slane %v4523, %v4536
        %v4538 = vcombine.low %v4513, %v4521
        %v4539 = vcombine.high %v4513, %v4521
        %v4541 = vunpack.c.l.s4 1934713408
        %v4542 = vunpack.c.0.s8 %v4541
        %v4543 = vlaneseq
        %v4544 = vshrl.u32 %v4543, 7
        %v4545 = vsub.s32 %v4542, %v4544
        %v4546 = vrot.slane %v4538, %v4545
        %v4548 = vunpack.c.l.s4 1934713408
        %v4549 = vunpack.c.0.s8 %v4548
        %v4550 = vlaneseq
        %v4551 = vshrl.u32 %v4550, 7
        %v4552 = vsub.s32 %v4549, %v4551
        %v4553 = vrot.slane %v4539, %v4552
        %v4554 = vcombine.low %v4530, %v4546
        %v4555 = vcombine.high %v4530, %v4546
        %v4556 = vcombine.low %v4537, %v4553
        %v4557 = vcombine.high %v4537, %v4553
        %v4558 = vcombine.low %v3510, %v3517
        %v4560 = vunpack.c.l.s4 1983009808
        %v4561 = vunpack.c.0.s8 %v4560
        %v4562 = vlaneseq
        %v4563 = vshrl.u32 %v4562, 7
        %v4564 = vsub.s32 %v4561, %v4563
        %v4565 = vrot.slane %v4558, %v4564
        %v4566 = vcombine.low %v3534, %v3535
        %v4568 = vunpack.c.l.s4 1983009808
        %v4569 = vunpack.c.0.s8 %v4568
        %v4570 = vlaneseq
        %v4571 = vshrl.u32 %v4570, 7
        %v4572 = vsub.s32 %v4569, %v4571
        %v4573 = vrot.slane %v4566, %v4572
        %v4574 = vcombine.low %v3526, %v3533
        %v4576 = vunpack.c.l.s4 1983009808
        %v4577 = vunpack.c.0.s8 %v4576
        %v4578 = vlaneseq
        %v4579 = vshrl.u32 %v4578, 7
        %v4580 = vsub.s32 %v4577, %v4579
        %v4581 = vrot.slane %v4574, %v4580
        %v4582 = vcombine.low %v3536, %v3537
        %v4584 = vunpack.c.l.s4 1983009808
        %v4585 = vunpack.c.0.s8 %v4584
        %v4586 = vlaneseq
        %v4587 = vshrl.u32 %v4586, 7
        %v4588 = vsub.s32 %v4585, %v4587
        %v4589 = vrot.slane %v4582, %v4588
        %v4590 = vcombine.low %v4565, %v4573
        %v4591 = vcombine.high %v4565, %v4573
        %v4593 = vunpack.c.l.s4 1934713408
        %v4594 = vunpack.c.0.s8 %v4593
        %v4595 = vlaneseq
        %v4596 = vshrl.u32 %v4595, 7
        %v4597 = vsub.s32 %v4594, %v4596
        %v4598 = vrot.slane %v4590, %v4597
        %v4600 = vunpack.c.l.s4 1934713408
        %v4601 = vunpack.c.0.s8 %v4600
        %v4602 = vlaneseq
        %v4603 = vshrl.u32 %v4602, 7
        %v4604 = vsub.s32 %v4601, %v4603
        %v4605 = vrot.slane %v4591, %v4604
        %v4606 = vcombine.low %v4581, %v4589
        %v4607 = vcombine.high %v4581, %v4589
        %v4609 = vunpack.c.l.s4 1934713408
        %v4610 = vunpack.c.0.s8 %v4609
        %v4611 = vlaneseq
        %v4612 = vshrl.u32 %v4611, 7
        %v4613 = vsub.s32 %v4610, %v4612
        %v4614 = vrot.slane %v4606, %v4613
        %v4616 = vunpack.c.l.s4 1934713408
        %v4617 = vunpack.c.0.s8 %v4616
        %v4618 = vlaneseq
        %v4619 = vshrl.u32 %v4618, 7
        %v4620 = vsub.s32 %v4617, %v4619
        %v4621 = vrot.slane %v4607, %v4620
        %v4622 = vcombine.low %v4598, %v4614
        %v4623 = vcombine.high %v4598, %v4614
        %v4624 = vcombine.low %v4605, %v4621
        %v4625 = vcombine.high %v4605, %v4621
        %v4626 = vcombine.low %v3578, %v3585
        %v4628 = vunpack.c.l.s4 1983009808
        %v4629 = vunpack.c.0.s8 %v4628
        %v4630 = vlaneseq
        %v4631 = vshrl.u32 %v4630, 7
        %v4632 = vsub.s32 %v4629, %v4631
        %v4633 = vrot.slane %v4626, %v4632
        %v4634 = vcombine.low %v3602, %v3603
        %v4636 = vunpack.c.l.s4 1983009808
        %v4637 = vunpack.c.0.s8 %v4636
        %v4638 = vlaneseq
        %v4639 = vshrl.u32 %v4638, 7
        %v4640 = vsub.s32 %v4637, %v4639
        %v4641 = vrot.slane %v4634, %v4640
        %v4642 = vcombine.low %v3594, %v3601
        %v4644 = vunpack.c.l.s4 1983009808
        %v4645 = vunpack.c.0.s8 %v4644
        %v4646 = vlaneseq
        %v4647 = vshrl.u32 %v4646, 7
        %v4648 = vsub.s32 %v4645, %v4647
        %v4649 = vrot.slane %v4642, %v4648
        %v4650 = vcombine.low %v3604, %v3605
        %v4652 = vunpack.c.l.s4 1983009808
        %v4653 = vunpack.c.0.s8 %v4652
        %v4654 = vlaneseq
        %v4655 = vshrl.u32 %v4654, 7
        %v4656 = vsub.s32 %v4653, %v4655
        %v4657 = vrot.slane %v4650, %v4656
        %v4658 = vcombine.low %v4633, %v4641
        %v4659 = vcombine.high %v4633, %v4641
        %v4661 = vunpack.c.l.s4 1934713408
        %v4662 = vunpack.c.0.s8 %v4661
        %v4663 = vlaneseq
        %v4664 = vshrl.u32 %v4663, 7
        %v4665 = vsub.s32 %v4662, %v4664
        %v4666 = vrot.slane %v4658, %v4665
        %v4668 = vunpack.c.l.s4 1934713408
        %v4669 = vunpack.c.0.s8 %v4668
        %v4670 = vlaneseq
        %v4671 = vshrl.u32 %v4670, 7
        %v4672 = vsub.s32 %v4669, %v4671
        %v4673 = vrot.slane %v4659, %v4672
        %v4674 = vcombine.low %v4649, %v4657
        %v4675 = vcombine.high %v4649, %v4657
        %v4677 = vunpack.c.l.s4 1934713408
        %v4678 = vunpack.c.0.s8 %v4677
        %v4679 = vlaneseq
        %v4680 = vshrl.u32 %v4679, 7
        %v4681 = vsub.s32 %v4678, %v4680
        %v4682 = vrot.slane %v4674, %v4681
        %v4684 = vunpack.c.l.s4 1934713408
        %v4685 = vunpack.c.0.s8 %v4684
        %v4686 = vlaneseq
        %v4687 = vshrl.u32 %v4686, 7
        %v4688 = vsub.s32 %v4685, %v4687
        %v4689 = vrot.slane %v4675, %v4688
        %v4690 = vcombine.low %v4666, %v4682
        %v4691 = vcombine.high %v4666, %v4682
        %v4692 = vcombine.low %v4673, %v4689
        %v4693 = vcombine.high %v4673, %v4689
        %v4694 = vcombine.low %v3646, %v3653
        %v4696 = vunpack.c.l.s4 1983009808
        %v4697 = vunpack.c.0.s8 %v4696
        %v4698 = vlaneseq
        %v4699 = vshrl.u32 %v4698, 7
        %v4700 = vsub.s32 %v4697, %v4699
        %v4701 = vrot.slane %v4694, %v4700
        %v4702 = vcombine.low %v3670, %v3671
        %v4704 = vunpack.c.l.s4 1983009808
        %v4705 = vunpack.c.0.s8 %v4704
        %v4706 = vlaneseq
        %v4707 = vshrl.u32 %v4706, 7
        %v4708 = vsub.s32 %v4705, %v4707
        %v4709 = vrot.slane %v4702, %v4708
        %v4710 = vcombine.low %v3662, %v3669
        %v4712 = vunpack.c.l.s4 1983009808
        %v4713 = vunpack.c.0.s8 %v4712
        %v4714 = vlaneseq
        %v4715 = vshrl.u32 %v4714, 7
        %v4716 = vsub.s32 %v4713, %v4715
        %v4717 = vrot.slane %v4710, %v4716
        %v4718 = vcombine.low %v3672, %v3673
        %v4720 = vunpack.c.l.s4 1983009808
        %v4721 = vunpack.c.0.s8 %v4720
        %v4722 = vlaneseq
        %v4723 = vshrl.u32 %v4722, 7
        %v4724 = vsub.s32 %v4721, %v4723
        %v4725 = vrot.slane %v4718, %v4724
        %v4726 = vcombine.low %v4701, %v4709
        %v4727 = vcombine.high %v4701, %v4709
        %v4729 = vunpack.c.l.s4 1934713408
        %v4730 = vunpack.c.0.s8 %v4729
        %v4731 = vlaneseq
        %v4732 = vshrl.u32 %v4731, 7
        %v4733 = vsub.s32 %v4730, %v4732
        %v4734 = vrot.slane %v4726, %v4733
        %v4736 = vunpack.c.l.s4 1934713408
        %v4737 = vunpack.c.0.s8 %v4736
        %v4738 = vlaneseq
        %v4739 = vshrl.u32 %v4738, 7
        %v4740 = vsub.s32 %v4737, %v4739
        %v4741 = vrot.slane %v4727, %v4740
        %v4742 = vcombine.low %v4717, %v4725
        %v4743 = vcombine.high %v4717, %v4725
        %v4745 = vunpack.c.l.s4 1934713408
        %v4746 = vunpack.c.0.s8 %v4745
        %v4747 = vlaneseq
        %v4748 = vshrl.u32 %v4747, 7
        %v4749 = vsub.s32 %v4746, %v4748
        %v4750 = vrot.slane %v4742, %v4749
        %v4752 = vunpack.c.l.s4 1934713408
        %v4753 = vunpack.c.0.s8 %v4752
        %v4754 = vlaneseq
        %v4755 = vshrl.u32 %v4754, 7
        %v4756 = vsub.s32 %v4753, %v4755
        %v4757 = vrot.slane %v4743, %v4756
        %v4758 = vcombine.low %v4734, %v4750
        %v4759 = vcombine.high %v4734, %v4750
        %v4760 = vcombine.low %v4741, %v4757
        %v4761 = vcombine.high %v4741, %v4757
        %v4762 = vcombine.low %v3714, %v3721
        %v4764 = vunpack.c.l.s4 1983009808
        %v4765 = vunpack.c.0.s8 %v4764
        %v4766 = vlaneseq
        %v4767 = vshrl.u32 %v4766, 7
        %v4768 = vsub.s32 %v4765, %v4767
        %v4769 = vrot.slane %v4762, %v4768
        %v4770 = vcombine.low %v3738, %v3739
        %v4772 = vunpack.c.l.s4 1983009808
        %v4773 = vunpack.c.0.s8 %v4772
        %v4774 = vlaneseq
        %v4775 = vshrl.u32 %v4774, 7
        %v4776 = vsub.s32 %v4773, %v4775
        %v4777 = vrot.slane %v4770, %v4776
        %v4778 = vcombine.low %v3730, %v3737
        %v4780 = vunpack.c.l.s4 1983009808
        %v4781 = vunpack.c.0.s8 %v4780
        %v4782 = vlaneseq
        %v4783 = vshrl.u32 %v4782, 7
        %v4784 = vsub.s32 %v4781, %v4783
        %v4785 = vrot.slane %v4778, %v4784
        %v4786 = vcombine.low %v3740, %v3741
        %v4788 = vunpack.c.l.s4 1983009808
        %v4789 = vunpack.c.0.s8 %v4788
        %v4790 = vlaneseq
        %v4791 = vshrl.u32 %v4790, 7
        %v4792 = vsub.s32 %v4789, %v4791
        %v4793 = vrot.slane %v4786, %v4792
        %v4794 = vcombine.low %v4769, %v4777
        %v4795 = vcombine.high %v4769, %v4777
        %v4797 = vunpack.c.l.s4 1934713408
        %v4798 = vunpack.c.0.s8 %v4797
        %v4799 = vlaneseq
        %v4800 = vshrl.u32 %v4799, 7
        %v4801 = vsub.s32 %v4798, %v4800
        %v4802 = vrot.slane %v4794, %v4801
        %v4804 = vunpack.c.l.s4 1934713408
        %v4805 = vunpack.c.0.s8 %v4804
        %v4806 = vlaneseq
        %v4807 = vshrl.u32 %v4806, 7
        %v4808 = vsub.s32 %v4805, %v4807
        %v4809 = vrot.slane %v4795, %v4808
        %v4810 = vcombine.low %v4785, %v4793
        %v4811 = vcombine.high %v4785, %v4793
        %v4813 = vunpack.c.l.s4 1934713408
        %v4814 = vunpack.c.0.s8 %v4813
        %v4815 = vlaneseq
        %v4816 = vshrl.u32 %v4815, 7
        %v4817 = vsub.s32 %v4814, %v4816
        %v4818 = vrot.slane %v4810, %v4817
        %v4820 = vunpack.c.l.s4 1934713408
        %v4821 = vunpack.c.0.s8 %v4820
        %v4822 = vlaneseq
        %v4823 = vshrl.u32 %v4822, 7
        %v4824 = vsub.s32 %v4821, %v4823
        %v4825 = vrot.slane %v4811, %v4824
        %v4826 = vcombine.low %v4802, %v4818
        %v4827 = vcombine.high %v4802, %v4818
        %v4828 = vcombine.low %v4809, %v4825
        %v4829 = vcombine.high %v4809, %v4825
        %v4830 = vcombine.low %v3782, %v3789
        %v4832 = vunpack.c.l.s4 1983009808
        %v4833 = vunpack.c.0.s8 %v4832
        %v4834 = vlaneseq
        %v4835 = vshrl.u32 %v4834, 7
        %v4836 = vsub.s32 %v4833, %v4835
        %v4837 = vrot.slane %v4830, %v4836
        %v4838 = vcombine.low %v3806, %v3807
        %v4840 = vunpack.c.l.s4 1983009808
        %v4841 = vunpack.c.0.s8 %v4840
        %v4842 = vlaneseq
        %v4843 = vshrl.u32 %v4842, 7
        %v4844 = vsub.s32 %v4841, %v4843
        %v4845 = vrot.slane %v4838, %v4844
        %v4846 = vcombine.low %v3798, %v3805
        %v4848 = vunpack.c.l.s4 1983009808
        %v4849 = vunpack.c.0.s8 %v4848
        %v4850 = vlaneseq
        %v4851 = vshrl.u32 %v4850, 7
        %v4852 = vsub.s32 %v4849, %v4851
        %v4853 = vrot.slane %v4846, %v4852
        %v4854 = vcombine.low %v3808, %v3809
        %v4856 = vunpack.c.l.s4 1983009808
        %v4857 = vunpack.c.0.s8 %v4856
        %v4858 = vlaneseq
        %v4859 = vshrl.u32 %v4858, 7
        %v4860 = vsub.s32 %v4857, %v4859
        %v4861 = vrot.slane %v4854, %v4860
        %v4862 = vcombine.low %v4837, %v4845
        %v4863 = vcombine.high %v4837, %v4845
        %v4865 = vunpack.c.l.s4 1934713408
        %v4866 = vunpack.c.0.s8 %v4865
        %v4867 = vlaneseq
        %v4868 = vshrl.u32 %v4867, 7
        %v4869 = vsub.s32 %v4866, %v4868
        %v4870 = vrot.slane %v4862, %v4869
        %v4872 = vunpack.c.l.s4 1934713408
        %v4873 = vunpack.c.0.s8 %v4872
        %v4874 = vlaneseq
        %v4875 = vshrl.u32 %v4874, 7
        %v4876 = vsub.s32 %v4873, %v4875
        %v4877 = vrot.slane %v4863, %v4876
        %v4878 = vcombine.low %v4853, %v4861
        %v4879 = vcombine.high %v4853, %v4861
        %v4881 = vunpack.c.l.s4 1934713408
        %v4882 = vunpack.c.0.s8 %v4881
        %v4883 = vlaneseq
        %v4884 = vshrl.u32 %v4883, 7
        %v4885 = vsub.s32 %v4882, %v4884
        %v4886 = vrot.slane %v4878, %v4885
        %v4888 = vunpack.c.l.s4 1934713408
        %v4889 = vunpack.c.0.s8 %v4888
        %v4890 = vlaneseq
        %v4891 = vshrl.u32 %v4890, 7
        %v4892 = vsub.s32 %v4889, %v4891
        %v4893 = vrot.slane %v4879, %v4892
        %v4894 = vcombine.low %v4870, %v4886
        %v4895 = vcombine.high %v4870, %v4886
        %v4896 = vcombine.low %v4877, %v4893
        %v4897 = vcombine.high %v4877, %v4893
        %v4898 = vcombine.low %v3850, %v3857
        %v4900 = vunpack.c.l.s4 1983009808
        %v4901 = vunpack.c.0.s8 %v4900
        %v4902 = vlaneseq
        %v4903 = vshrl.u32 %v4902, 7
        %v4904 = vsub.s32 %v4901, %v4903
        %v4905 = vrot.slane %v4898, %v4904
        %v4906 = vcombine.low %v3874, %v3875
        %v4908 = vunpack.c.l.s4 1983009808
        %v4909 = vunpack.c.0.s8 %v4908
        %v4910 = vlaneseq
        %v4911 = vshrl.u32 %v4910, 7
        %v4912 = vsub.s32 %v4909, %v4911
        %v4913 = vrot.slane %v4906, %v4912
        %v4914 = vcombine.low %v3866, %v3873
        %v4916 = vunpack.c.l.s4 1983009808
        %v4917 = vunpack.c.0.s8 %v4916
        %v4918 = vlaneseq
        %v4919 = vshrl.u32 %v4918, 7
        %v4920 = vsub.s32 %v4917, %v4919
        %v4921 = vrot.slane %v4914, %v4920
        %v4922 = vcombine.low %v3876, %v3877
        %v4924 = vunpack.c.l.s4 1983009808
        %v4925 = vunpack.c.0.s8 %v4924
        %v4926 = vlaneseq
        %v4927 = vshrl.u32 %v4926, 7
        %v4928 = vsub.s32 %v4925, %v4927
        %v4929 = vrot.slane %v4922, %v4928
        %v4930 = vcombine.low %v4905, %v4913
        %v4931 = vcombine.high %v4905, %v4913
        %v4933 = vunpack.c.l.s4 1934713408
        %v4934 = vunpack.c.0.s8 %v4933
        %v4935 = vlaneseq
        %v4936 = vshrl.u32 %v4935, 7
        %v4937 = vsub.s32 %v4934, %v4936
        %v4938 = vrot.slane %v4930, %v4937
        %v4940 = vunpack.c.l.s4 1934713408
        %v4941 = vunpack.c.0.s8 %v4940
        %v4942 = vlaneseq
        %v4943 = vshrl.u32 %v4942, 7
        %v4944 = vsub.s32 %v4941, %v4943
        %v4945 = vrot.slane %v4931, %v4944
        %v4946 = vcombine.low %v4921, %v4929
        %v4947 = vcombine.high %v4921, %v4929
        %v4949 = vunpack.c.l.s4 1934713408
        %v4950 = vunpack.c.0.s8 %v4949
        %v4951 = vlaneseq
        %v4952 = vshrl.u32 %v4951, 7
        %v4953 = vsub.s32 %v4950, %v4952
        %v4954 = vrot.slane %v4946, %v4953
        %v4956 = vunpack.c.l.s4 1934713408
        %v4957 = vunpack.c.0.s8 %v4956
        %v4958 = vlaneseq
        %v4959 = vshrl.u32 %v4958, 7
        %v4960 = vsub.s32 %v4957, %v4959
        %v4961 = vrot.slane %v4947, %v4960
        %v4962 = vcombine.low %v4938, %v4954
        %v4963 = vcombine.high %v4938, %v4954
        %v4964 = vcombine.low %v4945, %v4961
        %v4965 = vcombine.high %v4945, %v4961
        %v4966 = vcombine.low %v3918, %v3925
        %v4968 = vunpack.c.l.s4 1983009808
        %v4969 = vunpack.c.0.s8 %v4968
        %v4970 = vlaneseq
        %v4971 = vshrl.u32 %v4970, 7
        %v4972 = vsub.s32 %v4969, %v4971
        %v4973 = vrot.slane %v4966, %v4972
        %v4974 = vcombine.low %v3942, %v3943
        %v4976 = vunpack.c.l.s4 1983009808
        %v4977 = vunpack.c.0.s8 %v4976
        %v4978 = vlaneseq
        %v4979 = vshrl.u32 %v4978, 7
        %v4980 = vsub.s32 %v4977, %v4979
        %v4981 = vrot.slane %v4974, %v4980
        %v4982 = vcombine.low %v3934, %v3941
        %v4984 = vunpack.c.l.s4 1983009808
        %v4985 = vunpack.c.0.s8 %v4984
        %v4986 = vlaneseq
        %v4987 = vshrl.u32 %v4986, 7
        %v4988 = vsub.s32 %v4985, %v4987
        %v4989 = vrot.slane %v4982, %v4988
        %v4990 = vcombine.low %v3944, %v3945
        %v4992 = vunpack.c.l.s4 1983009808
        %v4993 = vunpack.c.0.s8 %v4992
        %v4994 = vlaneseq
        %v4995 = vshrl.u32 %v4994, 7
        %v4996 = vsub.s32 %v4993, %v4995
        %v4997 = vrot.slane %v4990, %v4996
        %v4998 = vcombine.low %v4973, %v4981
        %v4999 = vcombine.high %v4973, %v4981
        %v5001 = vunpack.c.l.s4 1934713408
        %v5002 = vunpack.c.0.s8 %v5001
        %v5003 = vlaneseq
        %v5004 = vshrl.u32 %v5003, 7
        %v5005 = vsub.s32 %v5002, %v5004
        %v5006 = vrot.slane %v4998, %v5005
        %v5008 = vunpack.c.l.s4 1934713408
        %v5009 = vunpack.c.0.s8 %v5008
        %v5010 = vlaneseq
        %v5011 = vshrl.u32 %v5010, 7
        %v5012 = vsub.s32 %v5009, %v5011
        %v5013 = vrot.slane %v4999, %v5012
        %v5014 = vcombine.low %v4989, %v4997
        %v5015 = vcombine.high %v4989, %v4997
        %v5017 = vunpack.c.l.s4 1934713408
        %v5018 = vunpack.c.0.s8 %v5017
        %v5019 = vlaneseq
        %v5020 = vshrl.u32 %v5019, 7
        %v5021 = vsub.s32 %v5018, %v5020
        %v5022 = vrot.slane %v5014, %v5021
        %v5024 = vunpack.c.l.s4 1934713408
        %v5025 = vunpack.c.0.s8 %v5024
        %v5026 = vlaneseq
        %v5027 = vshrl.u32 %v5026, 7
        %v5028 = vsub.s32 %v5025, %v5027
        %v5029 = vrot.slane %v5015, %v5028
        %v5030 = vcombine.low %v5006, %v5022
        %v5031 = vcombine.high %v5006, %v5022
        %v5032 = vcombine.low %v5013, %v5029
        %v5033 = vcombine.high %v5013, %v5029
        %v5034 = vcombine.low %v3986, %v3993
        %v5036 = vunpack.c.l.s4 1983009808
        %v5037 = vunpack.c.0.s8 %v5036
        %v5038 = vlaneseq
        %v5039 = vshrl.u32 %v5038, 7
        %v5040 = vsub.s32 %v5037, %v5039
        %v5041 = vrot.slane %v5034, %v5040
        %v5042 = vcombine.low %v4010, %v4011
        %v5044 = vunpack.c.l.s4 1983009808
        %v5045 = vunpack.c.0.s8 %v5044
        %v5046 = vlaneseq
        %v5047 = vshrl.u32 %v5046, 7
        %v5048 = vsub.s32 %v5045, %v5047
        %v5049 = vrot.slane %v5042, %v5048
        %v5050 = vcombine.low %v4002, %v4009
        %v5052 = vunpack.c.l.s4 1983009808
        %v5053 = vunpack.c.0.s8 %v5052
        %v5054 = vlaneseq
        %v5055 = vshrl.u32 %v5054, 7
        %v5056 = vsub.s32 %v5053, %v5055
        %v5057 = vrot.slane %v5050, %v5056
        %v5058 = vcombine.low %v4012, %v4013
        %v5060 = vunpack.c.l.s4 1983009808
        %v5061 = vunpack.c.0.s8 %v5060
        %v5062 = vlaneseq
        %v5063 = vshrl.u32 %v5062, 7
        %v5064 = vsub.s32 %v5061, %v5063
        %v5065 = vrot.slane %v5058, %v5064
        %v5066 = vcombine.low %v5041, %v5049
        %v5067 = vcombine.high %v5041, %v5049
        %v5069 = vunpack.c.l.s4 1934713408
        %v5070 = vunpack.c.0.s8 %v5069
        %v5071 = vlaneseq
        %v5072 = vshrl.u32 %v5071, 7
        %v5073 = vsub.s32 %v5070, %v5072
        %v5074 = vrot.slane %v5066, %v5073
        %v5076 = vunpack.c.l.s4 1934713408
        %v5077 = vunpack.c.0.s8 %v5076
        %v5078 = vlaneseq
        %v5079 = vshrl.u32 %v5078, 7
        %v5080 = vsub.s32 %v5077, %v5079
        %v5081 = vrot.slane %v5067, %v5080
        %v5082 = vcombine.low %v5057, %v5065
        %v5083 = vcombine.high %v5057, %v5065
        %v5085 = vunpack.c.l.s4 1934713408
        %v5086 = vunpack.c.0.s8 %v5085
        %v5087 = vlaneseq
        %v5088 = vshrl.u32 %v5087, 7
        %v5089 = vsub.s32 %v5086, %v5088
        %v5090 = vrot.slane %v5082, %v5089
        %v5092 = vunpack.c.l.s4 1934713408
        %v5093 = vunpack.c.0.s8 %v5092
        %v5094 = vlaneseq
        %v5095 = vshrl.u32 %v5094, 7
        %v5096 = vsub.s32 %v5093, %v5095
        %v5097 = vrot.slane %v5083, %v5096
        %v5098 = vcombine.low %v5074, %v5090
        %v5099 = vcombine.high %v5074, %v5090
        %v5100 = vcombine.low %v5081, %v5097
        %v5101 = vcombine.high %v5081, %v5097
        %v5102 = vcombine.low %v4054, %v4061
        %v5104 = vunpack.c.l.s4 1983009808
        %v5105 = vunpack.c.0.s8 %v5104
        %v5106 = vlaneseq
        %v5107 = vshrl.u32 %v5106, 7
        %v5108 = vsub.s32 %v5105, %v5107
        %v5109 = vrot.slane %v5102, %v5108
        %v5110 = vcombine.low %v4078, %v4079
        %v5112 = vunpack.c.l.s4 1983009808
        %v5113 = vunpack.c.0.s8 %v5112
        %v5114 = vlaneseq
        %v5115 = vshrl.u32 %v5114, 7
        %v5116 = vsub.s32 %v5113, %v5115
        %v5117 = vrot.slane %v5110, %v5116
        %v5118 = vcombine.low %v4070, %v4077
        %v5120 = vunpack.c.l.s4 1983009808
        %v5121 = vunpack.c.0.s8 %v5120
        %v5122 = vlaneseq
        %v5123 = vshrl.u32 %v5122, 7
        %v5124 = vsub.s32 %v5121, %v5123
        %v5125 = vrot.slane %v5118, %v5124
        %v5126 = vcombine.low %v4080, %v4081
        %v5128 = vunpack.c.l.s4 1983009808
        %v5129 = vunpack.c.0.s8 %v5128
        %v5130 = vlaneseq
        %v5131 = vshrl.u32 %v5130, 7
        %v5132 = vsub.s32 %v5129, %v5131
        %v5133 = vrot.slane %v5126, %v5132
        %v5134 = vcombine.low %v5109, %v5117
        %v5135 = vcombine.high %v5109, %v5117
        %v5137 = vunpack.c.l.s4 1934713408
        %v5138 = vunpack.c.0.s8 %v5137
        %v5139 = vlaneseq
        %v5140 = vshrl.u32 %v5139, 7
        %v5141 = vsub.s32 %v5138, %v5140
        %v5142 = vrot.slane %v5134, %v5141
        %v5144 = vunpack.c.l.s4 1934713408
        %v5145 = vunpack.c.0.s8 %v5144
        %v5146 = vlaneseq
        %v5147 = vshrl.u32 %v5146, 7
        %v5148 = vsub.s32 %v5145, %v5147
        %v5149 = vrot.slane %v5135, %v5148
        %v5150 = vcombine.low %v5125, %v5133
        %v5151 = vcombine.high %v5125, %v5133
        %v5153 = vunpack.c.l.s4 1934713408
        %v5154 = vunpack.c.0.s8 %v5153
        %v5155 = vlaneseq
        %v5156 = vshrl.u32 %v5155, 7
        %v5157 = vsub.s32 %v5154, %v5156
        %v5158 = vrot.slane %v5150, %v5157
        %v5160 = vunpack.c.l.s4 1934713408
        %v5161 = vunpack.c.0.s8 %v5160
        %v5162 = vlaneseq
        %v5163 = vshrl.u32 %v5162, 7
        %v5164 = vsub.s32 %v5161, %v5163
        %v5165 = vrot.slane %v5151, %v5164
        %v5166 = vcombine.low %v5142, %v5158
        %v5167 = vcombine.high %v5142, %v5158
        %v5168 = vcombine.low %v5149, %v5165
        %v5169 = vcombine.high %v5149, %v5165
        %v5170 = vcombine.low %v4122, %v4129
        %v5172 = vunpack.c.l.s4 1983009808
        %v5173 = vunpack.c.0.s8 %v5172
        %v5174 = vlaneseq
        %v5175 = vshrl.u32 %v5174, 7
        %v5176 = vsub.s32 %v5173, %v5175
        %v5177 = vrot.slane %v5170, %v5176
        %v5178 = vcombine.low %v4146, %v4147
        %v5180 = vunpack.c.l.s4 1983009808
        %v5181 = vunpack.c.0.s8 %v5180
        %v5182 = vlaneseq
        %v5183 = vshrl.u32 %v5182, 7
        %v5184 = vsub.s32 %v5181, %v5183
        %v5185 = vrot.slane %v5178, %v5184
        %v5186 = vcombine.low %v4138, %v4145
        %v5188 = vunpack.c.l.s4 1983009808
        %v5189 = vunpack.c.0.s8 %v5188
        %v5190 = vlaneseq
        %v5191 = vshrl.u32 %v5190, 7
        %v5192 = vsub.s32 %v5189, %v5191
        %v5193 = vrot.slane %v5186, %v5192
        %v5194 = vcombine.low %v4148, %v4149
        %v5196 = vunpack.c.l.s4 1983009808
        %v5197 = vunpack.c.0.s8 %v5196
        %v5198 = vlaneseq
        %v5199 = vshrl.u32 %v5198, 7
        %v5200 = vsub.s32 %v5197, %v5199
        %v5201 = vrot.slane %v5194, %v5200
        %v5202 = vcombine.low %v5177, %v5185
        %v5203 = vcombine.high %v5177, %v5185
        %v5205 = vunpack.c.l.s4 1934713408
        %v5206 = vunpack.c.0.s8 %v5205
        %v5207 = vlaneseq
        %v5208 = vshrl.u32 %v5207, 7
        %v5209 = vsub.s32 %v5206, %v5208
        %v5210 = vrot.slane %v5202, %v5209
        %v5212 = vunpack.c.l.s4 1934713408
        %v5213 = vunpack.c.0.s8 %v5212
        %v5214 = vlaneseq
        %v5215 = vshrl.u32 %v5214, 7
        %v5216 = vsub.s32 %v5213, %v5215
        %v5217 = vrot.slane %v5203, %v5216
        %v5218 = vcombine.low %v5193, %v5201
        %v5219 = vcombine.high %v5193, %v5201
        %v5221 = vunpack.c.l.s4 1934713408
        %v5222 = vunpack.c.0.s8 %v5221
        %v5223 = vlaneseq
        %v5224 = vshrl.u32 %v5223, 7
        %v5225 = vsub.s32 %v5222, %v5224
        %v5226 = vrot.slane %v5218, %v5225
        %v5228 = vunpack.c.l.s4 1934713408
        %v5229 = vunpack.c.0.s8 %v5228
        %v5230 = vlaneseq
        %v5231 = vshrl.u32 %v5230, 7
        %v5232 = vsub.s32 %v5229, %v5231
        %v5233 = vrot.slane %v5219, %v5232
        %v5234 = vcombine.low %v5210, %v5226
        %v5235 = vcombine.high %v5210, %v5226
        %v5236 = vcombine.low %v5217, %v5233
        %v5237 = vcombine.high %v5217, %v5233
        %v5238 = vcombine.low %v4190, %v4197
        %v5240 = vunpack.c.l.s4 1983009808
        %v5241 = vunpack.c.0.s8 %v5240
        %v5242 = vlaneseq
        %v5243 = vshrl.u32 %v5242, 7
        %v5244 = vsub.s32 %v5241, %v5243
        %v5245 = vrot.slane %v5238, %v5244
        %v5246 = vcombine.low %v4214, %v4215
        %v5248 = vunpack.c.l.s4 1983009808
        %v5249 = vunpack.c.0.s8 %v5248
        %v5250 = vlaneseq
        %v5251 = vshrl.u32 %v5250, 7
        %v5252 = vsub.s32 %v5249, %v5251
        %v5253 = vrot.slane %v5246, %v5252
        %v5254 = vcombine.low %v4206, %v4213
        %v5256 = vunpack.c.l.s4 1983009808
        %v5257 = vunpack.c.0.s8 %v5256
        %v5258 = vlaneseq
        %v5259 = vshrl.u32 %v5258, 7
        %v5260 = vsub.s32 %v5257, %v5259
        %v5261 = vrot.slane %v5254, %v5260
        %v5262 = vcombine.low %v4216, %v4217
        %v5264 = vunpack.c.l.s4 1983009808
        %v5265 = vunpack.c.0.s8 %v5264
        %v5266 = vlaneseq
        %v5267 = vshrl.u32 %v5266, 7
        %v5268 = vsub.s32 %v5265, %v5267
        %v5269 = vrot.slane %v5262, %v5268
        %v5270 = vcombine.low %v5245, %v5253
        %v5271 = vcombine.high %v5245, %v5253
        %v5273 = vunpack.c.l.s4 1934713408
        %v5274 = vunpack.c.0.s8 %v5273
        %v5275 = vlaneseq
        %v5276 = vshrl.u32 %v5275, 7
        %v5277 = vsub.s32 %v5274, %v5276
        %v5278 = vrot.slane %v5270, %v5277
        %v5280 = vunpack.c.l.s4 1934713408
        %v5281 = vunpack.c.0.s8 %v5280
        %v5282 = vlaneseq
        %v5283 = vshrl.u32 %v5282, 7
        %v5284 = vsub.s32 %v5281, %v5283
        %v5285 = vrot.slane %v5271, %v5284
        %v5286 = vcombine.low %v5261, %v5269
        %v5287 = vcombine.high %v5261, %v5269
        %v5289 = vunpack.c.l.s4 1934713408
        %v5290 = vunpack.c.0.s8 %v5289
        %v5291 = vlaneseq
        %v5292 = vshrl.u32 %v5291, 7
        %v5293 = vsub.s32 %v5290, %v5292
        %v5294 = vrot.slane %v5286, %v5293
        %v5296 = vunpack.c.l.s4 1934713408
        %v5297 = vunpack.c.0.s8 %v5296
        %v5298 = vlaneseq
        %v5299 = vshrl.u32 %v5298, 7
        %v5300 = vsub.s32 %v5297, %v5299
        %v5301 = vrot.slane %v5287, %v5300
        %v5302 = vcombine.low %v5278, %v5294
        %v5303 = vcombine.high %v5278, %v5294
        %v5304 = vcombine.low %v5285, %v5301
        %v5305 = vcombine.high %v5285, %v5301
        %v5306 = vcombine.low %v4258, %v4265
        %v5308 = vunpack.c.l.s4 1983009808
        %v5309 = vunpack.c.0.s8 %v5308
        %v5310 = vlaneseq
        %v5311 = vshrl.u32 %v5310, 7
        %v5312 = vsub.s32 %v5309, %v5311
        %v5313 = vrot.slane %v5306, %v5312
        %v5314 = vcombine.low %v4282, %v4283
        %v5316 = vunpack.c.l.s4 1983009808
        %v5317 = vunpack.c.0.s8 %v5316
        %v5318 = vlaneseq
        %v5319 = vshrl.u32 %v5318, 7
        %v5320 = vsub.s32 %v5317, %v5319
        %v5321 = vrot.slane %v5314, %v5320
        %v5322 = vcombine.low %v4274, %v4281
        %v5324 = vunpack.c.l.s4 1983009808
        %v5325 = vunpack.c.0.s8 %v5324
        %v5326 = vlaneseq
        %v5327 = vshrl.u32 %v5326, 7
        %v5328 = vsub.s32 %v5325, %v5327
        %v5329 = vrot.slane %v5322, %v5328
        %v5330 = vcombine.low %v4284, %v4285
        %v5332 = vunpack.c.l.s4 1983009808
        %v5333 = vunpack.c.0.s8 %v5332
        %v5334 = vlaneseq
        %v5335 = vshrl.u32 %v5334, 7
        %v5336 = vsub.s32 %v5333, %v5335
        %v5337 = vrot.slane %v5330, %v5336
        %v5338 = vcombine.low %v5313, %v5321
        %v5339 = vcombine.high %v5313, %v5321
        %v5341 = vunpack.c.l.s4 1934713408
        %v5342 = vunpack.c.0.s8 %v5341
        %v5343 = vlaneseq
        %v5344 = vshrl.u32 %v5343, 7
        %v5345 = vsub.s32 %v5342, %v5344
        %v5346 = vrot.slane %v5338, %v5345
        %v5348 = vunpack.c.l.s4 1934713408
        %v5349 = vunpack.c.0.s8 %v5348
        %v5350 = vlaneseq
        %v5351 = vshrl.u32 %v5350, 7
        %v5352 = vsub.s32 %v5349, %v5351
        %v5353 = vrot.slane %v5339, %v5352
        %v5354 = vcombine.low %v5329, %v5337
        %v5355 = vcombine.high %v5329, %v5337
        %v5357 = vunpack.c.l.s4 1934713408
        %v5358 = vunpack.c.0.s8 %v5357
        %v5359 = vlaneseq
        %v5360 = vshrl.u32 %v5359, 7
        %v5361 = vsub.s32 %v5358, %v5360
        %v5362 = vrot.slane %v5354, %v5361
        %v5364 = vunpack.c.l.s4 1934713408
        %v5365 = vunpack.c.0.s8 %v5364
        %v5366 = vlaneseq
        %v5367 = vshrl.u32 %v5366, 7
        %v5368 = vsub.s32 %v5365, %v5367
        %v5369 = vrot.slane %v5355, %v5368
        %v5370 = vcombine.low %v5346, %v5362
        %v5371 = vcombine.high %v5346, %v5362
        %v5372 = vcombine.low %v5353, %v5369
        %v5373 = vcombine.high %v5353, %v5369
        %5374 = vst.msk [vmem:[%s297] sm:$0xff] %vm2973, %v4350
        %5375 = vst.msk [vmem:[%s297 + $0x8] sm:$0xff] %vm2973, %v4418
        %5376 = vst.msk [vmem:[%s297 + $0x10] sm:$0xff] %vm2973, %v4486
        %5377 = vst.msk [vmem:[%s297 + $0x18] sm:$0xff] %vm2973, %v4554
        %5378 = vst.msk [vmem:[%s297 + $0x20] sm:$0xff] %vm2973, %v4622
        %5379 = vst.msk [vmem:[%s297 + $0x28] sm:$0xff] %vm2973, %v4690
        %5380 = vst.msk [vmem:[%s297 + $0x30] sm:$0xff] %vm2973, %v4758
        %5381 = vst.msk [vmem:[%s297 + $0x38] sm:$0xff] %vm2973, %v4826
        %5382 = vst.msk [vmem:[%s297 + $0x40] sm:$0xff] %vm2973, %v4894
        %5383 = vst.msk [vmem:[%s297 + $0x48] sm:$0xff] %vm2973, %v4962
        %5384 = vst.msk [vmem:[%s297 + $0x50] sm:$0xff] %vm2973, %v5030
        %5385 = vst.msk [vmem:[%s297 + $0x58] sm:$0xff] %vm2973, %v5098
        %5386 = vst.msk [vmem:[%s297 + $0x60] sm:$0xff] %vm2973, %v5166
        %5387 = vst.msk [vmem:[%s297 + $0x68] sm:$0xff] %vm2973, %v5234
        %5388 = vst.msk [vmem:[%s297 + $0x70] sm:$0xff] %vm2973, %v5302
        %5389 = vst.msk [vmem:[%s297 + $0x78] sm:$0xff] %vm2973, %v5370
        %5390 = vst.msk [vmem:[%s297 + $0x80] sm:$0xff] %vm2973, %v4351
        %5391 = vst.msk [vmem:[%s297 + $0x88] sm:$0xff] %vm2973, %v4419
        %5392 = vst.msk [vmem:[%s297 + $0x90] sm:$0xff] %vm2973, %v4487
        %5393 = vst.msk [vmem:[%s297 + $0x98] sm:$0xff] %vm2973, %v4555
        %5394 = vst.msk [vmem:[%s297 + $0xa0] sm:$0xff] %vm2973, %v4623
        %5395 = vst.msk [vmem:[%s297 + $0xa8] sm:$0xff] %vm2973, %v4691
        %5396 = vst.msk [vmem:[%s297 + $0xb0] sm:$0xff] %vm2973, %v4759
        %5397 = vst.msk [vmem:[%s297 + $0xb8] sm:$0xff] %vm2973, %v4827
        %5398 = vst.msk [vmem:[%s297 + $0xc0] sm:$0xff] %vm2973, %v4895
        %5399 = vst.msk [vmem:[%s297 + $0xc8] sm:$0xff] %vm2973, %v4963
        %5400 = vst.msk [vmem:[%s297 + $0xd0] sm:$0xff] %vm2973, %v5031
        %5401 = vst.msk [vmem:[%s297 + $0xd8] sm:$0xff] %vm2973, %v5099
        %5402 = vst.msk [vmem:[%s297 + $0xe0] sm:$0xff] %vm2973, %v5167
        %5403 = vst.msk [vmem:[%s297 + $0xe8] sm:$0xff] %vm2973, %v5235
        %5404 = vst.msk [vmem:[%s297 + $0xf0] sm:$0xff] %vm2973, %v5303
        %5405 = vst.msk [vmem:[%s297 + $0xf8] sm:$0xff] %vm2973, %v5371
        %5406 = vst.msk [vmem:[%s297 + $0x100] sm:$0xff] %vm2973, %v4352
        %5407 = vst.msk [vmem:[%s297 + $0x108] sm:$0xff] %vm2973, %v4420
        %5408 = vst.msk [vmem:[%s297 + $0x110] sm:$0xff] %vm2973, %v4488
        %5409 = vst.msk [vmem:[%s297 + $0x118] sm:$0xff] %vm2973, %v4556
        %5410 = vst.msk [vmem:[%s297 + $0x120] sm:$0xff] %vm2973, %v4624
        %5411 = vst.msk [vmem:[%s297 + $0x128] sm:$0xff] %vm2973, %v4692
        %5412 = vst.msk [vmem:[%s297 + $0x130] sm:$0xff] %vm2973, %v4760
        %5413 = vst.msk [vmem:[%s297 + $0x138] sm:$0xff] %vm2973, %v4828
        %5414 = vst.msk [vmem:[%s297 + $0x140] sm:$0xff] %vm2973, %v4896
        %5415 = vst.msk [vmem:[%s297 + $0x148] sm:$0xff] %vm2973, %v4964
        %5416 = vst.msk [vmem:[%s297 + $0x150] sm:$0xff] %vm2973, %v5032
        %5417 = vst.msk [vmem:[%s297 + $0x158] sm:$0xff] %vm2973, %v5100
        %5418 = vst.msk [vmem:[%s297 + $0x160] sm:$0xff] %vm2973, %v5168
        %5419 = vst.msk [vmem:[%s297 + $0x168] sm:$0xff] %vm2973, %v5236
        %5420 = vst.msk [vmem:[%s297 + $0x170] sm:$0xff] %vm2973, %v5304
        %5421 = vst.msk [vmem:[%s297 + $0x178] sm:$0xff] %vm2973, %v5372
        %5422 = vst.msk [vmem:[%s297 + $0x180] sm:$0xff] %vm2973, %v4353
        %5423 = vst.msk [vmem:[%s297 + $0x188] sm:$0xff] %vm2973, %v4421
        %5424 = vst.msk [vmem:[%s297 + $0x190] sm:$0xff] %vm2973, %v4489
        %5425 = vst.msk [vmem:[%s297 + $0x198] sm:$0xff] %vm2973, %v4557
        %5426 = vst.msk [vmem:[%s297 + $0x1a0] sm:$0xff] %vm2973, %v4625
        %5427 = vst.msk [vmem:[%s297 + $0x1a8] sm:$0xff] %vm2973, %v4693
        %5428 = vst.msk [vmem:[%s297 + $0x1b0] sm:$0xff] %vm2973, %v4761
        %5429 = vst.msk [vmem:[%s297 + $0x1b8] sm:$0xff] %vm2973, %v4829
        %5430 = vst.msk [vmem:[%s297 + $0x1c0] sm:$0xff] %vm2973, %v4897
        %5431 = vst.msk [vmem:[%s297 + $0x1c8] sm:$0xff] %vm2973, %v4965
        %5432 = vst.msk [vmem:[%s297 + $0x1d0] sm:$0xff] %vm2973, %v5033
        %5433 = vst.msk [vmem:[%s297 + $0x1d8] sm:$0xff] %vm2973, %v5101
        %5434 = vst.msk [vmem:[%s297 + $0x1e0] sm:$0xff] %vm2973, %v5169
        %5435 = vst.msk [vmem:[%s297 + $0x1e8] sm:$0xff] %vm2973, %v5237
        %5436 = vst.msk [vmem:[%s297 + $0x1f0] sm:$0xff] %vm2973, %v5305
        %5437 = vst.msk [vmem:[%s297 + $0x1f8] sm:$0xff] %vm2973, %v5373
        %s5438 = smul.u32 16, %s25
        %p5439 = scmp.lt.s32.totalorder %s24, 1
        %s5440 = scalar_select %p5439, %s24, 1
        %p5441 = scmp.lt.s32.totalorder %s5438, 15
        %s5442 = scalar_select %p5441, %s5438, 15
        %s5443 = smul.addr %s5440, 64
        %s5444 = sadd.s32 %s5442, %s5443
        %s5445 = smul.addr %s5444, 8
        %s5446 = scalar_lea.vmem %s3, %s5445
        %s5447 = smul.u32 16, %s25
        %p5448 = scmp.lt.s32.totalorder %s24, 1
        %s5449 = scalar_select %p5448, %s24, 1
        %p5450 = scmp.lt.s32.totalorder %s5447, 15
        %s5451 = scalar_select %p5450, %s5447, 15
        %s5452 = smul.addr %s5449, 64
        %s5453 = sadd.s32 %s5451, %s5452
        %s5454 = smul.addr %s5453, 8
        %s5455 = scalar_lea.vmem %s4, %s5454
        // Predicated region
        $region45: #{tpu_custom_call.1} parent=31 // pred_check
          %p5456 = pneg %p122
        $region46: #{tpu_custom_call.1} parent=31 // pred_check_branch
          %5458 = sbr.rel (%p5456) target = $region48
        $region47: #{tpu_custom_call.1} parent=31 // pred_region
          %s5459 = smul.u32 16, %s25
        $region48: #{tpu_custom_call.1} parent=31 // pred_fallthru
          _
        // Predicated region
        $region49: #{tpu_custom_call.1} parent=31 // pred_check
          %p5460 = pneg %p150
        $region50: #{tpu_custom_call.1} parent=31 // pred_check_branch
          %5462 = sbr.rel (%p5460) target = $region52
        $region51: #{tpu_custom_call.1} parent=31 // pred_region
          %s5463 = smul.u32 16, %s25
        $region52: #{tpu_custom_call.1} parent=31 // pred_fallthru
          _
      $region32: #{tpu_custom_call.1} parent=5 // pred_fallthru
        _
      %p5464 = scmp.le.s32.totalorder 2, %s15
      // Predicated region
      $region53: #{tpu_custom_call.1} parent=5 // pred_check
        %p5465 = pneg %p5464
      $region54: #{tpu_custom_call.1} parent=5 // pred_check_branch
        %5467 = sbr.rel (%p5465) target = $region56
      $region55: #{tpu_custom_call.1} parent=5 // pred_region
        %s5468 = ssub.s32 %s15, 2
        // Predicated region
        $region57: #{tpu_custom_call.1} parent=55 // pred_check
          %p5469 = pneg %p128
        $region58: #{tpu_custom_call.1} parent=55 // pred_check_branch
          %5471 = sbr.rel (%p5469) target = $region60
        $region59: #{tpu_custom_call.1} parent=55 // pred_region
          %s5472 = smul.u32 16, %s27
          %p5473 = scmp.lt.s32.totalorder %s26, 1
          %s5474 = scalar_select %p5473, %s26, 1
          %p5475 = scmp.lt.s32.totalorder %s5472, 15
          %s5476 = scalar_select %p5475, %s5472, 15
          %s5477 = smul.addr %s5474, 64
          %s5478 = sadd.s32 %s5476, %s5477
          %s5479 = smul.addr %s5478, 8
          %s5480 = scalar_lea.vmem %s3, %s5479
        $region60: #{tpu_custom_call.1} parent=55 // pred_fallthru
          _
        // Predicated region
        $region61: #{tpu_custom_call.1} parent=55 // pred_check
          %p5481 = pneg %p156
        $region62: #{tpu_custom_call.1} parent=55 // pred_check_branch
          %5483 = sbr.rel (%p5481) target = $region64
        $region63: #{tpu_custom_call.1} parent=55 // pred_region
          %s5484 = smul.u32 16, %s27
          %p5485 = scmp.lt.s32.totalorder %s26, 1
          %s5486 = scalar_select %p5485, %s26, 1
          %p5487 = scmp.lt.s32.totalorder %s5484, 15
          %s5488 = scalar_select %p5487, %s5484, 15
          %s5489 = smul.addr %s5486, 64
          %s5490 = sadd.s32 %s5488, %s5489
          %s5491 = smul.addr %s5490, 8
          %s5492 = scalar_lea.vmem %s4, %s5491
        $region64: #{tpu_custom_call.1} parent=55 // pred_fallthru
          _
      $region56: #{tpu_custom_call.1} parent=5 // pred_fallthru
        _
    $region6: #{tpu_custom_call.1} parent=1 // loop_footer
      %s19 = sadd.s32 1, %s15
    $region7: #{tpu_custom_call.1} parent=1 // loop_footer_branch
      %14 = sbr.rel target = $region3
    $region8: #{tpu_custom_call.1} parent=1 // loop_exit
      _
    %5493 = vsyncpa [#allocation3], 1
    %s5494 = scalar_lea.sflag [#allocation3], 1
    %5495 = vsyncpa %s5494, 1
    %5496 = vsyncpa [#allocation5], 1

</llo_original>
